<compile_context>
chip_gen: v5e
topology: v5e:2x2
jax: 0.10.0
libtpu: 0.0.40
codegen_flags: <defaults>
</compile_context>

<pallas_src>
import functools

import jax
import jax.numpy as jnp
from jax.experimental import pallas as pl
from jax.experimental.pallas import tpu as pltpu


def _iconv3d_kernel(x_ref, ftap_ref, mask_ref, fw_ref, fb_ref, gw_ref, gb_ref,
                    o_ref, *, ch, dhw, offsets, pad_rows):
    """One batch element per grid step.
       x_ref    (1, 2*ch, dhw)  input, spatial dims flattened (lane-dense)
       ftap_ref (1, kpad, dhw)  precomputed masked/shifted taps of x2 (im2col)
       mask_ref (ntap, dhw)     0/1 boundary masks, resident (constant index_map)
       fw_ref   (mpad, kpad)    f-conv weights, zero-padded to the MXU tile
       fb_ref   (ch, 1)         f-conv bias column
       gw_ref, gb_ref           same for g-conv
       o_ref    (1, 2*ch, dhw)  [y1; y2]
    """
    f32 = jnp.float32
    x1 = x_ref[0, :ch, :].astype(f32)            # (ch, dhw) channel-packed block
    x2 = x_ref[0, ch:, :].astype(f32)

    # ---- f branch: y1 = x1 + b_f + W_f @ im2col(x2)  (single MXU matmul) ----
    f_out = jnp.dot(fw_ref[...], ftap_ref[0, :, :],
                    preferred_element_type=f32,
                    precision=jax.lax.Precision.HIGHEST)        # (mpad, dhw)
    y1 = x1 + fb_ref[...] + f_out[:ch, :]                       # (ch, dhw)

    # ---- g branch: build the tap matrix from y1 in-kernel -------------------
    # One pltpu.roll shifts every channel of y1 at once (XLU slot); masks are
    # precomputed and resident; the centre tap needs neither roll nor mask.
    rows = []
    for t, off in enumerate(offsets):
        if off == 0:
            rows.append(y1)
        else:
            r = pltpu.roll(y1, shift=(-off) % dhw, axis=1)
            rows.append(r * mask_ref[t:t + 1, :])
    if pad_rows:                                   # zero-pad K to the MXU tile
        rows.append(jnp.zeros((pad_rows, dhw), f32))
    g_taps = jnp.concatenate(rows, axis=0)         # (kpad, dhw)

    g_out = jnp.dot(gw_ref[...], g_taps,
                    preferred_element_type=f32,
                    precision=jax.lax.Precision.HIGHEST)        # (mpad, dhw)
    y2 = x2 + gb_ref[...] + g_out[:ch, :]

    # Single lane-dense store of both halves.
    o_ref[0, :, :] = jnp.concatenate([y1, y2], axis=0).astype(o_ref.dtype)


def iconv3d_forward(x, f_w, f_b, g_w, g_b, padding=1):
    """IConv3d.forward with invert=True (RevBlock of two Conv3d's), fused kernel."""
    n, c, d, h, w = x.shape
    ch = c // 2
    cout, cin, k, _, _ = f_w.shape
    assert cin == ch and cout == ch
    assert k == 2 * padding + 1, "RevBlock requires a spatially-preserving conv"
    hw = h * w
    dhw = d * hw
    assert dhw % 128 == 0, "flattened spatial axis must be lane-aligned"

    ntap = k ** 3
    nrow = ntap * cin                        # real tap-matrix rows (54 here)
    kpad = pl.cdiv(nrow, 128) * 128          # contraction dim padded to MXU tile
    mpad = pl.cdiv(ch, 8) * 8                # output-channel dim padded to sublanes

    x_flat = x.reshape(n, c, dhw)            # lane axis = flattened spatial

    # ---- boundary masks + tap offsets (XLA side, once per call) -------------
    flat = jnp.arange(dhw, dtype=jnp.int32)
    d_idx, h_idx, w_idx = flat // hw, (flat // w) % h, flat % w
    masks, offsets = [], []
    for kd in range(k):
        for kh in range(k):
            for kw in range(k):
                dd, dh, dw = kd - padding, kh - padding, kw - padding
                m = ((d_idx + dd >= 0) & (d_idx + dd < d) &
                     (h_idx + dh >= 0) & (h_idx + dh < h) &
                     (w_idx + dw >= 0) & (w_idx + dw < w))
                masks.append(m)
                offsets.append(dd * hw + dh * w + dw)
    mask_arr = jnp.stack(masks, axis=0).astype(jnp.float32)          # (ntap, dhw)

    # f-conv im2col offloaded to XLA: masked shifted taps of x2, rows ordered
    # (tap, ci) to match the reordered weight columns, zero-padded to kpad.
    x2_flat = x_flat[:, ch:, :].astype(jnp.float32)
    tap_list = [jnp.roll(x2_flat, shift=-off, axis=2) * mask_arr[t][None, None, :]
                for t, off in enumerate(offsets)]
    tap_list.append(jnp.zeros((n, kpad - nrow, dhw), jnp.float32))
    f_taps = jnp.concatenate(tap_list, axis=1)                       # (n, kpad, dhw)

    # Weights: OIDHW -> (O, kd, kh, kw, I) -> (O, ntap*I) so that column index
    # = tap*cin + ci, then zero-padded to the native (mpad, kpad) MXU tile.
    def _pack_weight(wt):
        w2 = jnp.transpose(wt, (0, 2, 3, 4, 1)).reshape(ch, nrow).astype(jnp.float32)
        return jnp.zeros((mpad, kpad), jnp.float32).at[:ch, :nrow].set(w2)

    fw2, gw2 = _pack_weight(f_w), _pack_weight(g_w)
    fb2 = f_b.reshape(ch, 1).astype(jnp.float32)
    gb2 = g_b.reshape(ch, 1).astype(jnp.float32)

    kern = functools.partial(_iconv3d_kernel, ch=ch, dhw=dhw,
                             offsets=tuple(offsets), pad_rows=kpad - nrow)

    flops = 2 * n * (2 * mpad * kpad * dhw)          # two matmuls per element
    bytes_accessed = 4 * (x_flat.size + f_taps.size + mask_arr.size
                          + 2 * (mpad * kpad + ch) + n * c * dhw)

    out_flat = pl.pallas_call(
        kern,
        out_shape=jax.ShapeDtypeStruct((n, c, dhw), x.dtype),
        grid=(n,),
        in_specs=[
            pl.BlockSpec((1, c, dhw), lambda i: (i, 0, 0)),
            pl.BlockSpec((1, kpad, dhw), lambda i: (i, 0, 0)),
            pl.BlockSpec((ntap, dhw), lambda i: (0, 0)),      # resident masks
            pl.BlockSpec((mpad, kpad), lambda i: (0, 0)),     # resident weights
            pl.BlockSpec((ch, 1), lambda i: (0, 0)),
            pl.BlockSpec((mpad, kpad), lambda i: (0, 0)),
            pl.BlockSpec((ch, 1), lambda i: (0, 0)),
        ],
        out_specs=pl.BlockSpec((1, c, dhw), lambda i: (i, 0, 0)),
        compiler_params=pltpu.CompilerParams(
            dimension_semantics=("parallel",)),   # >=2 steps keeps both v7x TCs busy
        cost_estimate=pl.CostEstimate(flops=flops, transcendentals=0,
                                      bytes_accessed=bytes_accessed),
    )(x_flat, f_taps, mask_arr, fw2, fb2, gw2, gb2)

    return out_flat.reshape(n, c, d, h, w)


# ---------------------------------------------------------------------------
# Pure-JAX reference (XLA conv) for correctness checking.
# ---------------------------------------------------------------------------
def _conv3d_ref(x, weight, bias, padding):
    out = jax.lax.conv_general_dilated(
        x, weight, window_strides=(1, 1, 1),
        padding=[(padding, padding)] * 3,
        dimension_numbers=("NCDHW", "OIDHW", "NCDHW"),
        precision=jax.lax.Precision.HIGHEST)
    return out + bias[None, :, None, None, None]


def _iconv3d_ref(x, f_w, f_b, g_w, g_b, padding=1):
    c_half = x.shape[1] // 2
    x1, x2 = x[:, :c_half], x[:, c_half:]
    y1 = x1 + _conv3d_ref(x2, f_w, f_b, padding)
    y2 = x2 + _conv3d_ref(y1, g_w, g_b, padding)
    return jnp.concatenate([y1, y2], axis=1)


if __name__ == "__main__":
    # Module config: IConv3d(in_channels=4, out_channels=4, kernel_size=3,
    #                        padding=1, invert=True)
    N, C, D, H, W = 2, 4, 8, 8, 8
    CH = C // 2          # channels per half-conv
    K, PAD = 3, 1

    key = jax.random.PRNGKey(0)
    kx, kfw, kfb, kgw, kgb = jax.random.split(key, 5)

    x = jax.random.normal(kx, (N, C, D, H, W), dtype=jnp.float32)

    # Deterministic Conv3d-style init: U(-b, b) with b = 1/sqrt(fan_in).
    fan_in = CH * K * K * K
    bound = 1.0 / (fan_in ** 0.5)
    f_w = jax.random.uniform(kfw, (CH, CH, K, K, K), jnp.float32, -bound, bound)
    f_b = jax.random.uniform(kfb, (CH,), jnp.float32, -bound, bound)
    g_w = jax.random.uniform(kgw, (CH, CH, K, K, K), jnp.float32, -bound, bound)
    g_b = jax.random.uniform(kgb, (CH,), jnp.float32, -bound, bound)

    out = jax.block_until_ready(iconv3d_forward(x, f_w, f_b, g_w, g_b, PAD))

    ref = jax.block_until_ready(_iconv3d_ref(x, f_w, f_b, g_w, g_b, PAD))
    assert out.shape == (N, C, D, H, W)
    # f32 contract precision on the MXU (Precision.HIGHEST) -> tiny accumulation-
    # order differences only.
    assert jnp.allclose(out, ref, atol=1e-4, rtol=1e-4), "mismatch vs XLA conv reference"

    print("KERNEL_OK")
</pallas_src>

<mosaic_0001>
module attributes {stable_mosaic.version = 11 : i64} {
  func.func @_iconv3d_kernel(%arg0: i32, %arg1: memref<1x4x512xf32, #tpu.memory_space<vmem>>, %arg2: memref<1x128x512xf32, #tpu.memory_space<vmem>>, %arg3: memref<27x512xf32, #tpu.memory_space<vmem>>, %arg4: memref<8x128xf32, #tpu.memory_space<vmem>>, %arg5: memref<2x1xf32, #tpu.memory_space<vmem>>, %arg6: memref<8x128xf32, #tpu.memory_space<vmem>>, %arg7: memref<2x1xf32, #tpu.memory_space<vmem>>, %arg8: memref<1x4x512xf32, #tpu.memory_space<vmem>>) attributes {dimension_semantics = [#tpu.dimension_semantics<parallel>], iteration_bounds = array<i64: 2>, scalar_prefetch = 0 : i64, scratch_operands = 0 : i64, tpu.core_type = #tpu.core_type<tc>, window_params = [{transform_indices = @transform_0, window_bounds = array<i64: 1, 4, 512>}, {transform_indices = @transform_1, window_bounds = array<i64: 1, 128, 512>}, {pipeline_mode = #tpu.pipeline_mode<synchronous>, transform_indices = @transform_2, window_bounds = array<i64: 27, 512>}, {pipeline_mode = #tpu.pipeline_mode<synchronous>, transform_indices = @transform_3, window_bounds = array<i64: 8, 128>}, {pipeline_mode = #tpu.pipeline_mode<synchronous>, transform_indices = @transform_4, window_bounds = array<i64: 2, 1>}, {pipeline_mode = #tpu.pipeline_mode<synchronous>, transform_indices = @transform_5, window_bounds = array<i64: 8, 128>}, {pipeline_mode = #tpu.pipeline_mode<synchronous>, transform_indices = @transform_6, window_bounds = array<i64: 2, 1>}, {transform_indices = @transform_7, window_bounds = array<i64: 1, 4, 512>}]} {
    %c0 = arith.constant 0 : index
    %c0_0 = arith.constant 0 : index
    %c0_1 = arith.constant 0 : index
    %0 = vector.load %arg1[%c0, %c0_0, %c0_1] : memref<1x4x512xf32, #tpu.memory_space<vmem>>, vector<1x2x512xf32>
    %1 = vector.shape_cast %0 : vector<1x2x512xf32> to vector<2x512xf32>
    %c0_2 = arith.constant 0 : index
    %c2 = arith.constant 2 : index
    %c0_3 = arith.constant 0 : index
    %2 = vector.load %arg1[%c0_2, %c2, %c0_3] : memref<1x4x512xf32, #tpu.memory_space<vmem>>, vector<1x2x512xf32>
    %3 = vector.shape_cast %2 : vector<1x2x512xf32> to vector<2x512xf32>
    %c0_4 = arith.constant 0 : index
    %c0_5 = arith.constant 0 : index
    %4 = vector.load %arg4[%c0_4, %c0_5] : memref<8x128xf32, #tpu.memory_space<vmem>>, vector<8x128xf32>
    %c0_6 = arith.constant 0 : index
    %c0_7 = arith.constant 0 : index
    %c0_8 = arith.constant 0 : index
    %5 = vector.load %arg2[%c0_6, %c0_7, %c0_8] : memref<1x128x512xf32, #tpu.memory_space<vmem>>, vector<1x128x512xf32>
    %6 = vector.shape_cast %5 : vector<1x128x512xf32> to vector<128x512xf32>
    %cst = arith.constant dense<0.000000e+00> : vector<8x512xf32>
    %7 = tpu.matmul %4, %6, %cst {dimension_numbers = #tpu.dot_dimension_numbers<[1], [0], [0], [1], [0, 0, 1, 1], [], []>, precision = #tpu.contract_precision<fp32>} : vector<8x128xf32>, vector<128x512xf32>, vector<8x512xf32> -> vector<8x512xf32>
    %c0_9 = arith.constant 0 : index
    %c0_10 = arith.constant 0 : index
    %8 = vector.load %arg5[%c0_9, %c0_10] : memref<2x1xf32, #tpu.memory_space<vmem>>, vector<2x1xf32>
    %9 = vector.broadcast %8 : vector<2x1xf32> to vector<2x512xf32>
    %10 = arith.addf %1, %9 : vector<2x512xf32>
    %11 = vector.extract_strided_slice %7 {offsets = [0, 0], sizes = [2, 512], strides = [1, 1]} : vector<8x512xf32> to vector<2x512xf32>
    %12 = arith.addf %10, %11 : vector<2x512xf32>
    %c73_i32 = arith.constant 73 : i32
    %13 = tpu.dynamic_rotate %12 by %c73_i32 dim 1 : vector<2x512xf32>, i32 -> vector<2x512xf32>
    %c0_11 = arith.constant 0 : index
    %c0_12 = arith.constant 0 : index
    %14 = vector.load %arg3[%c0_11, %c0_12] : memref<27x512xf32, #tpu.memory_space<vmem>>, vector<1x512xf32>
    %15 = vector.broadcast %14 : vector<1x512xf32> to vector<2x512xf32>
    %16 = arith.mulf %13, %15 : vector<2x512xf32>
    %c72_i32 = arith.constant 72 : i32
    %17 = tpu.dynamic_rotate %12 by %c72_i32 dim 1 : vector<2x512xf32>, i32 -> vector<2x512xf32>
    %c1 = arith.constant 1 : index
    %c0_13 = arith.constant 0 : index
    %18 = vector.load %arg3[%c1, %c0_13] : memref<27x512xf32, #tpu.memory_space<vmem>>, vector<1x512xf32>
    %19 = vector.broadcast %18 : vector<1x512xf32> to vector<2x512xf32>
    %20 = arith.mulf %17, %19 : vector<2x512xf32>
    %c71_i32 = arith.constant 71 : i32
    %21 = tpu.dynamic_rotate %12 by %c71_i32 dim 1 : vector<2x512xf32>, i32 -> vector<2x512xf32>
    %c2_14 = arith.constant 2 : index
    %c0_15 = arith.constant 0 : index
    %22 = vector.load %arg3[%c2_14, %c0_15] : memref<27x512xf32, #tpu.memory_space<vmem>>, vector<1x512xf32>
    %23 = vector.broadcast %22 : vector<1x512xf32> to vector<2x512xf32>
    %24 = arith.mulf %21, %23 : vector<2x512xf32>
    %c65_i32 = arith.constant 65 : i32
    %25 = tpu.dynamic_rotate %12 by %c65_i32 dim 1 : vector<2x512xf32>, i32 -> vector<2x512xf32>
    %c3 = arith.constant 3 : index
    %c0_16 = arith.constant 0 : index
    %26 = vector.load %arg3[%c3, %c0_16] : memref<27x512xf32, #tpu.memory_space<vmem>>, vector<1x512xf32>
    %27 = vector.broadcast %26 : vector<1x512xf32> to vector<2x512xf32>
    %28 = arith.mulf %25, %27 : vector<2x512xf32>
    %c64_i32 = arith.constant 64 : i32
    %29 = tpu.dynamic_rotate %12 by %c64_i32 dim 1 : vector<2x512xf32>, i32 -> vector<2x512xf32>
    %c4 = arith.constant 4 : index
    %c0_17 = arith.constant 0 : index
    %30 = vector.load %arg3[%c4, %c0_17] : memref<27x512xf32, #tpu.memory_space<vmem>>, vector<1x512xf32>
    %31 = vector.broadcast %30 : vector<1x512xf32> to vector<2x512xf32>
    %32 = arith.mulf %29, %31 : vector<2x512xf32>
    %c63_i32 = arith.constant 63 : i32
    %33 = tpu.dynamic_rotate %12 by %c63_i32 dim 1 : vector<2x512xf32>, i32 -> vector<2x512xf32>
    %c5 = arith.constant 5 : index
    %c0_18 = arith.constant 0 : index
    %34 = vector.load %arg3[%c5, %c0_18] : memref<27x512xf32, #tpu.memory_space<vmem>>, vector<1x512xf32>
    %35 = vector.broadcast %34 : vector<1x512xf32> to vector<2x512xf32>
    %36 = arith.mulf %33, %35 : vector<2x512xf32>
    %c57_i32 = arith.constant 57 : i32
    %37 = tpu.dynamic_rotate %12 by %c57_i32 dim 1 : vector<2x512xf32>, i32 -> vector<2x512xf32>
    %c6 = arith.constant 6 : index
    %c0_19 = arith.constant 0 : index
    %38 = vector.load %arg3[%c6, %c0_19] : memref<27x512xf32, #tpu.memory_space<vmem>>, vector<1x512xf32>
    %39 = vector.broadcast %38 : vector<1x512xf32> to vector<2x512xf32>
    %40 = arith.mulf %37, %39 : vector<2x512xf32>
    %c56_i32 = arith.constant 56 : i32
    %41 = tpu.dynamic_rotate %12 by %c56_i32 dim 1 : vector<2x512xf32>, i32 -> vector<2x512xf32>
    %c7 = arith.constant 7 : index
    %c0_20 = arith.constant 0 : index
    %42 = vector.load %arg3[%c7, %c0_20] : memref<27x512xf32, #tpu.memory_space<vmem>>, vector<1x512xf32>
    %43 = vector.broadcast %42 : vector<1x512xf32> to vector<2x512xf32>
    %44 = arith.mulf %41, %43 : vector<2x512xf32>
    %c55_i32 = arith.constant 55 : i32
    %45 = tpu.dynamic_rotate %12 by %c55_i32 dim 1 : vector<2x512xf32>, i32 -> vector<2x512xf32>
    %c8 = arith.constant 8 : index
    %c0_21 = arith.constant 0 : index
    %46 = vector.load %arg3[%c8, %c0_21] : memref<27x512xf32, #tpu.memory_space<vmem>>, vector<1x512xf32>
    %47 = vector.broadcast %46 : vector<1x512xf32> to vector<2x512xf32>
    %48 = arith.mulf %45, %47 : vector<2x512xf32>
    %c9_i32 = arith.constant 9 : i32
    %49 = tpu.dynamic_rotate %12 by %c9_i32 dim 1 : vector<2x512xf32>, i32 -> vector<2x512xf32>
    %c9 = arith.constant 9 : index
    %c0_22 = arith.constant 0 : index
    %50 = vector.load %arg3[%c9, %c0_22] : memref<27x512xf32, #tpu.memory_space<vmem>>, vector<1x512xf32>
    %51 = vector.broadcast %50 : vector<1x512xf32> to vector<2x512xf32>
    %52 = arith.mulf %49, %51 : vector<2x512xf32>
    %c8_i32 = arith.constant 8 : i32
    %53 = tpu.dynamic_rotate %12 by %c8_i32 dim 1 : vector<2x512xf32>, i32 -> vector<2x512xf32>
    %c10 = arith.constant 10 : index
    %c0_23 = arith.constant 0 : index
    %54 = vector.load %arg3[%c10, %c0_23] : memref<27x512xf32, #tpu.memory_space<vmem>>, vector<1x512xf32>
    %55 = vector.broadcast %54 : vector<1x512xf32> to vector<2x512xf32>
    %56 = arith.mulf %53, %55 : vector<2x512xf32>
    %c7_i32 = arith.constant 7 : i32
    %57 = tpu.dynamic_rotate %12 by %c7_i32 dim 1 : vector<2x512xf32>, i32 -> vector<2x512xf32>
    %c11 = arith.constant 11 : index
    %c0_24 = arith.constant 0 : index
    %58 = vector.load %arg3[%c11, %c0_24] : memref<27x512xf32, #tpu.memory_space<vmem>>, vector<1x512xf32>
    %59 = vector.broadcast %58 : vector<1x512xf32> to vector<2x512xf32>
    %60 = arith.mulf %57, %59 : vector<2x512xf32>
    %c1_i32 = arith.constant 1 : i32
    %61 = tpu.dynamic_rotate %12 by %c1_i32 dim 1 : vector<2x512xf32>, i32 -> vector<2x512xf32>
    %c12 = arith.constant 12 : index
    %c0_25 = arith.constant 0 : index
    %62 = vector.load %arg3[%c12, %c0_25] : memref<27x512xf32, #tpu.memory_space<vmem>>, vector<1x512xf32>
    %63 = vector.broadcast %62 : vector<1x512xf32> to vector<2x512xf32>
    %64 = arith.mulf %61, %63 : vector<2x512xf32>
    %c511_i32 = arith.constant 511 : i32
    %65 = tpu.dynamic_rotate %12 by %c511_i32 dim 1 : vector<2x512xf32>, i32 -> vector<2x512xf32>
    %c14 = arith.constant 14 : index
    %c0_26 = arith.constant 0 : index
    %66 = vector.load %arg3[%c14, %c0_26] : memref<27x512xf32, #tpu.memory_space<vmem>>, vector<1x512xf32>
    %67 = vector.broadcast %66 : vector<1x512xf32> to vector<2x512xf32>
    %68 = arith.mulf %65, %67 : vector<2x512xf32>
    %c505_i32 = arith.constant 505 : i32
    %69 = tpu.dynamic_rotate %12 by %c505_i32 dim 1 : vector<2x512xf32>, i32 -> vector<2x512xf32>
    %c15 = arith.constant 15 : index
    %c0_27 = arith.constant 0 : index
    %70 = vector.load %arg3[%c15, %c0_27] : memref<27x512xf32, #tpu.memory_space<vmem>>, vector<1x512xf32>
    %71 = vector.broadcast %70 : vector<1x512xf32> to vector<2x512xf32>
    %72 = arith.mulf %69, %71 : vector<2x512xf32>
    %c504_i32 = arith.constant 504 : i32
    %73 = tpu.dynamic_rotate %12 by %c504_i32 dim 1 : vector<2x512xf32>, i32 -> vector<2x512xf32>
    %c16 = arith.constant 16 : index
    %c0_28 = arith.constant 0 : index
    %74 = vector.load %arg3[%c16, %c0_28] : memref<27x512xf32, #tpu.memory_space<vmem>>, vector<1x512xf32>
    %75 = vector.broadcast %74 : vector<1x512xf32> to vector<2x512xf32>
    %76 = arith.mulf %73, %75 : vector<2x512xf32>
    %c503_i32 = arith.constant 503 : i32
    %77 = tpu.dynamic_rotate %12 by %c503_i32 dim 1 : vector<2x512xf32>, i32 -> vector<2x512xf32>
    %c17 = arith.constant 17 : index
    %c0_29 = arith.constant 0 : index
    %78 = vector.load %arg3[%c17, %c0_29] : memref<27x512xf32, #tpu.memory_space<vmem>>, vector<1x512xf32>
    %79 = vector.broadcast %78 : vector<1x512xf32> to vector<2x512xf32>
    %80 = arith.mulf %77, %79 : vector<2x512xf32>
    %c457_i32 = arith.constant 457 : i32
    %81 = tpu.dynamic_rotate %12 by %c457_i32 dim 1 : vector<2x512xf32>, i32 -> vector<2x512xf32>
    %c18 = arith.constant 18 : index
    %c0_30 = arith.constant 0 : index
    %82 = vector.load %arg3[%c18, %c0_30] : memref<27x512xf32, #tpu.memory_space<vmem>>, vector<1x512xf32>
    %83 = vector.broadcast %82 : vector<1x512xf32> to vector<2x512xf32>
    %84 = arith.mulf %81, %83 : vector<2x512xf32>
    %c456_i32 = arith.constant 456 : i32
    %85 = tpu.dynamic_rotate %12 by %c456_i32 dim 1 : vector<2x512xf32>, i32 -> vector<2x512xf32>
    %c19 = arith.constant 19 : index
    %c0_31 = arith.constant 0 : index
    %86 = vector.load %arg3[%c19, %c0_31] : memref<27x512xf32, #tpu.memory_space<vmem>>, vector<1x512xf32>
    %87 = vector.broadcast %86 : vector<1x512xf32> to vector<2x512xf32>
    %88 = arith.mulf %85, %87 : vector<2x512xf32>
    %c455_i32 = arith.constant 455 : i32
    %89 = tpu.dynamic_rotate %12 by %c455_i32 dim 1 : vector<2x512xf32>, i32 -> vector<2x512xf32>
    %c20 = arith.constant 20 : index
    %c0_32 = arith.constant 0 : index
    %90 = vector.load %arg3[%c20, %c0_32] : memref<27x512xf32, #tpu.memory_space<vmem>>, vector<1x512xf32>
    %91 = vector.broadcast %90 : vector<1x512xf32> to vector<2x512xf32>
    %92 = arith.mulf %89, %91 : vector<2x512xf32>
    %c449_i32 = arith.constant 449 : i32
    %93 = tpu.dynamic_rotate %12 by %c449_i32 dim 1 : vector<2x512xf32>, i32 -> vector<2x512xf32>
    %c21 = arith.constant 21 : index
    %c0_33 = arith.constant 0 : index
    %94 = vector.load %arg3[%c21, %c0_33] : memref<27x512xf32, #tpu.memory_space<vmem>>, vector<1x512xf32>
    %95 = vector.broadcast %94 : vector<1x512xf32> to vector<2x512xf32>
    %96 = arith.mulf %93, %95 : vector<2x512xf32>
    %c448_i32 = arith.constant 448 : i32
    %97 = tpu.dynamic_rotate %12 by %c448_i32 dim 1 : vector<2x512xf32>, i32 -> vector<2x512xf32>
    %c22 = arith.constant 22 : index
    %c0_34 = arith.constant 0 : index
    %98 = vector.load %arg3[%c22, %c0_34] : memref<27x512xf32, #tpu.memory_space<vmem>>, vector<1x512xf32>
    %99 = vector.broadcast %98 : vector<1x512xf32> to vector<2x512xf32>
    %100 = arith.mulf %97, %99 : vector<2x512xf32>
    %c447_i32 = arith.constant 447 : i32
    %101 = tpu.dynamic_rotate %12 by %c447_i32 dim 1 : vector<2x512xf32>, i32 -> vector<2x512xf32>
    %c23 = arith.constant 23 : index
    %c0_35 = arith.constant 0 : index
    %102 = vector.load %arg3[%c23, %c0_35] : memref<27x512xf32, #tpu.memory_space<vmem>>, vector<1x512xf32>
    %103 = vector.broadcast %102 : vector<1x512xf32> to vector<2x512xf32>
    %104 = arith.mulf %101, %103 : vector<2x512xf32>
    %c441_i32 = arith.constant 441 : i32
    %105 = tpu.dynamic_rotate %12 by %c441_i32 dim 1 : vector<2x512xf32>, i32 -> vector<2x512xf32>
    %c24 = arith.constant 24 : index
    %c0_36 = arith.constant 0 : index
    %106 = vector.load %arg3[%c24, %c0_36] : memref<27x512xf32, #tpu.memory_space<vmem>>, vector<1x512xf32>
    %107 = vector.broadcast %106 : vector<1x512xf32> to vector<2x512xf32>
    %108 = arith.mulf %105, %107 : vector<2x512xf32>
    %c440_i32 = arith.constant 440 : i32
    %109 = tpu.dynamic_rotate %12 by %c440_i32 dim 1 : vector<2x512xf32>, i32 -> vector<2x512xf32>
    %c25 = arith.constant 25 : index
    %c0_37 = arith.constant 0 : index
    %110 = vector.load %arg3[%c25, %c0_37] : memref<27x512xf32, #tpu.memory_space<vmem>>, vector<1x512xf32>
    %111 = vector.broadcast %110 : vector<1x512xf32> to vector<2x512xf32>
    %112 = arith.mulf %109, %111 : vector<2x512xf32>
    %c439_i32 = arith.constant 439 : i32
    %113 = tpu.dynamic_rotate %12 by %c439_i32 dim 1 : vector<2x512xf32>, i32 -> vector<2x512xf32>
    %c26 = arith.constant 26 : index
    %c0_38 = arith.constant 0 : index
    %114 = vector.load %arg3[%c26, %c0_38] : memref<27x512xf32, #tpu.memory_space<vmem>>, vector<1x512xf32>
    %115 = vector.broadcast %114 : vector<1x512xf32> to vector<2x512xf32>
    %116 = arith.mulf %113, %115 : vector<2x512xf32>
    %cst_39 = arith.constant 0.000000e+00 : f32
    %117 = vector.broadcast %cst_39 : f32 to vector<74x512xf32>
    %118 = tpu.concatenate %16, %20, %24, %28, %32, %36, %40, %44, %48, %52, %56, %60, %64, %12, %68, %72 in 0 : vector<2x512xf32>, vector<2x512xf32>, vector<2x512xf32>, vector<2x512xf32>, vector<2x512xf32>, vector<2x512xf32>, vector<2x512xf32>, vector<2x512xf32>, vector<2x512xf32>, vector<2x512xf32>, vector<2x512xf32>, vector<2x512xf32>, vector<2x512xf32>, vector<2x512xf32>, vector<2x512xf32>, vector<2x512xf32> -> vector<32x512xf32>
    %119 = tpu.concatenate %76, %80, %84, %88, %92, %96, %100, %104, %108, %112, %116, %117 in 0 : vector<2x512xf32>, vector<2x512xf32>, vector<2x512xf32>, vector<2x512xf32>, vector<2x512xf32>, vector<2x512xf32>, vector<2x512xf32>, vector<2x512xf32>, vector<2x512xf32>, vector<2x512xf32>, vector<2x512xf32>, vector<74x512xf32> -> vector<96x512xf32>
    %120 = tpu.concatenate %118, %119 in 0 : vector<32x512xf32>, vector<96x512xf32> -> vector<128x512xf32>
    %c0_40 = arith.constant 0 : index
    %c0_41 = arith.constant 0 : index
    %121 = vector.load %arg6[%c0_40, %c0_41] : memref<8x128xf32, #tpu.memory_space<vmem>>, vector<8x128xf32>
    %cst_42 = arith.constant dense<0.000000e+00> : vector<8x512xf32>
    %122 = tpu.matmul %121, %120, %cst_42 {dimension_numbers = #tpu.dot_dimension_numbers<[1], [0], [0], [1], [0, 0, 1, 1], [], []>, precision = #tpu.contract_precision<fp32>} : vector<8x128xf32>, vector<128x512xf32>, vector<8x512xf32> -> vector<8x512xf32>
    %c0_43 = arith.constant 0 : index
    %c0_44 = arith.constant 0 : index
    %123 = vector.load %arg7[%c0_43, %c0_44] : memref<2x1xf32, #tpu.memory_space<vmem>>, vector<2x1xf32>
    %124 = vector.broadcast %123 : vector<2x1xf32> to vector<2x512xf32>
    %125 = arith.addf %3, %124 : vector<2x512xf32>
    %126 = vector.extract_strided_slice %122 {offsets = [0, 0], sizes = [2, 512], strides = [1, 1]} : vector<8x512xf32> to vector<2x512xf32>
    %127 = arith.addf %125, %126 : vector<2x512xf32>
    %128 = tpu.concatenate %12, %127 in 0 : vector<2x512xf32>, vector<2x512xf32> -> vector<4x512xf32>
    %c0_45 = arith.constant 0 : index
    %c0_46 = arith.constant 0 : index
    %c0_47 = arith.constant 0 : index
    %129 = vector.load %arg8[%c0_45, %c0_46, %c0_47] : memref<1x4x512xf32, #tpu.memory_space<vmem>>, vector<1x4x512xf32>
    %130 = vector.shape_cast %129 : vector<1x4x512xf32> to vector<4x512xf32>
    %131 = vector.shape_cast %128 : vector<4x512xf32> to vector<1x4x512xf32>
    tpu.vector_store %arg8[%c0_45, %c0_46, %c0_47], %131 {strides = array<i32>} : memref<1x4x512xf32, #tpu.memory_space<vmem>>, vector<1x4x512xf32>,
    return
  }
  func.func @transform_0(%arg0: i32) -> (i32, i32, i32) {
    %c0_i32 = arith.constant 0 : i32
    %c0_i32_0 = arith.constant 0 : i32
    %c0_i32_1 = arith.constant 0 : i32
    return %arg0, %c0_i32, %c0_i32_0 : i32, i32, i32
  }
  func.func @transform_1(%arg0: i32) -> (i32, i32, i32) {
    %c0_i32 = arith.constant 0 : i32
    %c0_i32_0 = arith.constant 0 : i32
    %c0_i32_1 = arith.constant 0 : i32
    return %arg0, %c0_i32, %c0_i32_0 : i32, i32, i32
  }
  func.func @transform_2(%arg0: i32) -> (i32, i32) {
    %c0_i32 = arith.constant 0 : i32
    %c0_i32_0 = arith.constant 0 : i32
    %c0_i32_1 = arith.constant 0 : i32
    return %c0_i32, %c0_i32_0 : i32, i32
  }
  func.func @transform_3(%arg0: i32) -> (i32, i32) {
    %c0_i32 = arith.constant 0 : i32
    %c0_i32_0 = arith.constant 0 : i32
    %c0_i32_1 = arith.constant 0 : i32
    return %c0_i32, %c0_i32_0 : i32, i32
  }
  func.func @transform_4(%arg0: i32) -> (i32, i32) {
    %c0_i32 = arith.constant 0 : i32
    %c0_i32_0 = arith.constant 0 : i32
    %c0_i32_1 = arith.constant 0 : i32
    return %c0_i32, %c0_i32_0 : i32, i32
  }
  func.func @transform_5(%arg0: i32) -> (i32, i32) {
    %c0_i32 = arith.constant 0 : i32
    %c0_i32_0 = arith.constant 0 : i32
    %c0_i32_1 = arith.constant 0 : i32
    return %c0_i32, %c0_i32_0 : i32, i32
  }
  func.func @transform_6(%arg0: i32) -> (i32, i32) {
    %c0_i32 = arith.constant 0 : i32
    %c0_i32_0 = arith.constant 0 : i32
    %c0_i32_1 = arith.constant 0 : i32
    return %c0_i32, %c0_i32_0 : i32, i32
  }
  func.func @transform_7(%arg0: i32) -> (i32, i32, i32) {
    %c0_i32 = arith.constant 0 : i32
    %c0_i32_0 = arith.constant 0 : i32
    %c0_i32_1 = arith.constant 0 : i32
    return %arg0, %c0_i32, %c0_i32_0 : i32, i32, i32
  }
}

</mosaic_0001>

<llo_original>
// kernel: tpu_custom_call.1
$region0: #{tpu_custom_call.1}
  #allocation0 [shape = 'u32[]', space=smem, size = 0x4, offset = 0x4, fixed_abs, tag = 'smem constant byte address 0x4 - core index']
  #allocation1 [shape = 'u32[72,128]{1,0:T(1,128)}', space=vmem, size = 0x9000, scoped, tag = 'internal scratch']
  %s0 = inlined_call_operand.hbm [shape: f32[2,4,512], index: 0, kind: input, shape index: {}]
  %s1 = inlined_call_operand.hbm [shape: f32[2,128,512], index: 1, kind: input, shape index: {}]
  %s2 = inlined_call_operand.hbm [shape: f32[27,512], index: 2, kind: input, shape index: {}]
  %s3 = inlined_call_operand.vmem [shape: f32[8,128], index: 3, kind: input, shape index: {}]
  %s4 = inlined_call_operand.vmem [shape: f32[2,1], index: 4, kind: input, shape index: {}]
  %s5 = inlined_call_operand.hbm [shape: f32[8,128], index: 5, kind: input, shape index: {}]
  %s6 = inlined_call_operand.vmem [shape: f32[2,1], index: 6, kind: input, shape index: {}]
  %s7 = inlined_call_operand.hbm [shape: f32[2,4,512], index: 7, kind: output, shape index: {}]
  %s8 = sld [smem:[#allocation0]]
  $region77: #{tpu_custom_call.1} parent=0
    _
  %s10 = ssub.s32 1, %s8
  %s11 = scalar_select 0, %s10, %s8
  $region1: #{tpu_custom_call.1} parent=0
    #allocation2 [shape = 'u8[16384]{0}', space=vmem, size = 0x4000, scoped, tag = 'input window, operand 0']
    #allocation3 [shape = 's32[2]{0}', space=sflag, size = 0x8, scoped, tag = 'scoped memory for tpu_custom_call.1']
    #allocation4 [shape = 's32[2]{0}', space=sflag, size = 0x8, scoped, tag = 'scoped memory for tpu_custom_call.1']
    #allocation5 [shape = 'u8[524288]{0}', space=vmem, size = 0x80000, scoped, tag = 'input window, operand 1']
    #allocation6 [shape = 's32[2]{0}', space=sflag, size = 0x8, scoped, tag = 'scoped memory for tpu_custom_call.1']
    #allocation7 [shape = 'u8[65536]{0}', space=vmem, size = 0x10000, scoped, tag = 'input window, operand 2, single buffered']
    #allocation8 [shape = 'u8[4096]{0}', space=vmem, size = 0x1000, scoped, tag = 'input window, operand 5, single buffered']
    #allocation9 [shape = 's32[1]{0}', space=sflag, size = 0x4, scoped, tag = 'scoped memory for tpu_custom_call.1']
    #allocation10 [shape = 'u8[16384]{0}', space=vmem, size = 0x4000, scoped, tag = 'output window, operand 0']
    %12 = vsyncpa [#allocation3], 0
    %s13 = scalar_lea.sflag [#allocation3], 1
    %14 = vsyncpa %s13, 0
    %15 = vsyncpa [#allocation6], 0
    %s16 = scalar_lea.sflag [#allocation6], 1
    %17 = vsyncpa %s16, 0
    %18 = vsyncpa [#allocation9], 0
    %19 = vsyncpa [#allocation4], 0
    %s20 = scalar_lea.sflag [#allocation4], 1
    %21 = vsyncpa %s20, 0
    loop: start=0, step=1, limit=4
    $region2: #{tpu_custom_call.1} parent=1 // loop_pre_header
      _
    $region3: #{tpu_custom_call.1} parent=1 // loop_header
      %s23 = sphi 0, %s27
      %p24 = scmp.ge.s32.totalorder %s23, 4
      %s33 = sphi 0, %s35
      %s36 = sphi 0, %s33
      %s37 = sphi 0, %s36
      %s53 = sphi 0, %s37
      %s59 = sphi 0, %s61
      %s62 = sphi 0, %s59
      %s63 = sphi 0, %s62
      %s79 = sphi 0, %s63
      %s83 = sphi 0, %s83
      %s85 = sphi 0, %s83
      %s86 = sphi 0, %s85
      %s100 = sphi 0, %s86
      %s104 = sphi 0, %s104
      %s106 = sphi 0, %s104
      %s107 = sphi 0, %s106
      %s121 = sphi 0, %s107
      %s125 = sphi 0, %s125
      %s127 = sphi 0, %s125
      %s128 = sphi 0, %s127
      %s142 = sphi 0, %s128
      %s146 = sphi 0, %s146
      %s148 = sphi 0, %s146
      %s149 = sphi 0, %s148
      %s163 = sphi 0, %s149
      %s167 = sphi 0, %s167
      %s169 = sphi 0, %s167
      %s170 = sphi 0, %s169
      %s184 = sphi 0, %s170
      %s190 = sphi 0, %s192
      %s193 = sphi 0, %s190
      %s194 = sphi 0, %s193
      %s210 = sphi 0, %s194
    $region4: #{tpu_custom_call.1} parent=1 // loop_header_branch
      %26 = sbr.rel (%p24) target = $region8
    $region5: #{tpu_custom_call.1} parent=1 // loop_body
      %s28 = ssub.s32 %s23, 1
      %s29 = ssub.s32 %s23, 2
      %s30 = sadd.s32 %s23, 1
      %s31 = ssub.s32 %s23, %s30
      %p32 = scmp.eq.s32.totalorder %s31, 0
      %s34 = sadd.s32 %s33, 1
      %s35 = scalar_select %p32, %s33, %s34
      %p38 = pneg %p32
      %p39 = scmp.eq.s32.totalorder %s23, 1
      %p40 = por %p38, %p39
      %p41 = scmp.ne.s32.totalorder %s33, %s36
      %p42 = scmp.eq.s32.totalorder %s23, 0
      %p43 = por %p41, %p42
      %p44 = scmp.ne.s32.totalorder %s33, %s36
      %p45 = scmp.eq.s32.totalorder %s28, 1
      %p46 = por %p44, %p45
      %p47 = scmp.ne.s32.totalorder %s36, %s37
      %p48 = scmp.eq.s32.totalorder %s28, 0
      %p49 = por %p47, %p48
      %p50 = scmp.ne.s32.totalorder %s36, %s37
      %p51 = scmp.eq.s32.totalorder %s29, 1
      %p52 = por %p50, %p51
      %p54 = scmp.ne.s32.totalorder %s37, %s53
      %p55 = scmp.eq.s32.totalorder %s29, 0
      %p56 = por %p54, %p55
      %s57 = ssub.s32 %s23, %s30
      %p58 = scmp.eq.s32.totalorder %s57, 0
      %s60 = sadd.s32 %s59, 1
      %s61 = scalar_select %p58, %s59, %s60
      %p64 = pneg %p58
      %p65 = scmp.eq.s32.totalorder %s23, 1
      %p66 = por %p64, %p65
      %p67 = scmp.ne.s32.totalorder %s59, %s62
      %p68 = scmp.eq.s32.totalorder %s23, 0
      %p69 = por %p67, %p68
      %p70 = scmp.ne.s32.totalorder %s59, %s62
      %p71 = scmp.eq.s32.totalorder %s28, 1
      %p72 = por %p70, %p71
      %p73 = scmp.ne.s32.totalorder %s62, %s63
      %p74 = scmp.eq.s32.totalorder %s28, 0
      %p75 = por %p73, %p74
      %p76 = scmp.ne.s32.totalorder %s62, %s63
      %p77 = scmp.eq.s32.totalorder %s29, 1
      %p78 = por %p76, %p77
      %p80 = scmp.ne.s32.totalorder %s63, %s79
      %p81 = scmp.eq.s32.totalorder %s29, 0
      %p82 = por %p80, %p81
      %s84 = sadd.s32 %s83, 1
      %p87 = scmp.eq.s32.totalorder %s23, 1
      %p88 = scmp.ne.s32.totalorder %s83, %s85
      %p89 = scmp.eq.s32.totalorder %s23, 0
      %p90 = por %p88, %p89
      %p91 = scmp.ne.s32.totalorder %s83, %s85
      %p92 = scmp.eq.s32.totalorder %s28, 1
      %p93 = por %p91, %p92
      %p94 = scmp.ne.s32.totalorder %s85, %s86
      %p95 = scmp.eq.s32.totalorder %s28, 0
      %p96 = por %p94, %p95
      %p97 = scmp.ne.s32.totalorder %s85, %s86
      %p98 = scmp.eq.s32.totalorder %s29, 1
      %p99 = por %p97, %p98
      %p101 = scmp.ne.s32.totalorder %s86, %s100
      %p102 = scmp.eq.s32.totalorder %s29, 0
      %p103 = por %p101, %p102
      %s105 = sadd.s32 %s104, 1
      %p108 = scmp.eq.s32.totalorder %s23, 1
      %p109 = scmp.ne.s32.totalorder %s104, %s106
      %p110 = scmp.eq.s32.totalorder %s23, 0
      %p111 = por %p109, %p110
      %p112 = scmp.ne.s32.totalorder %s104, %s106
      %p113 = scmp.eq.s32.totalorder %s28, 1
      %p114 = por %p112, %p113
      %p115 = scmp.ne.s32.totalorder %s106, %s107
      %p116 = scmp.eq.s32.totalorder %s28, 0
      %p117 = por %p115, %p116
      %p118 = scmp.ne.s32.totalorder %s106, %s107
      %p119 = scmp.eq.s32.totalorder %s29, 1
      %p120 = por %p118, %p119
      %p122 = scmp.ne.s32.totalorder %s107, %s121
      %p123 = scmp.eq.s32.totalorder %s29, 0
      %p124 = por %p122, %p123
      %s126 = sadd.s32 %s125, 1
      %p129 = scmp.eq.s32.totalorder %s23, 1
      %p130 = scmp.ne.s32.totalorder %s125, %s127
      %p131 = scmp.eq.s32.totalorder %s23, 0
      %p132 = por %p130, %p131
      %p133 = scmp.ne.s32.totalorder %s125, %s127
      %p134 = scmp.eq.s32.totalorder %s28, 1
      %p135 = por %p133, %p134
      %p136 = scmp.ne.s32.totalorder %s127, %s128
      %p137 = scmp.eq.s32.totalorder %s28, 0
      %p138 = por %p136, %p137
      %p139 = scmp.ne.s32.totalorder %s127, %s128
      %p140 = scmp.eq.s32.totalorder %s29, 1
      %p141 = por %p139, %p140
      %p143 = scmp.ne.s32.totalorder %s128, %s142
      %p144 = scmp.eq.s32.totalorder %s29, 0
      %p145 = por %p143, %p144
      %s147 = sadd.s32 %s146, 1
      %p150 = scmp.eq.s32.totalorder %s23, 1
      %p151 = scmp.ne.s32.totalorder %s146, %s148
      %p152 = scmp.eq.s32.totalorder %s23, 0
      %p153 = por %p151, %p152
      %p154 = scmp.ne.s32.totalorder %s146, %s148
      %p155 = scmp.eq.s32.totalorder %s28, 1
      %p156 = por %p154, %p155
      %p157 = scmp.ne.s32.totalorder %s148, %s149
      %p158 = scmp.eq.s32.totalorder %s28, 0
      %p159 = por %p157, %p158
      %p160 = scmp.ne.s32.totalorder %s148, %s149
      %p161 = scmp.eq.s32.totalorder %s29, 1
      %p162 = por %p160, %p161
      %p164 = scmp.ne.s32.totalorder %s149, %s163
      %p165 = scmp.eq.s32.totalorder %s29, 0
      %p166 = por %p164, %p165
      %s168 = sadd.s32 %s167, 1
      %p171 = scmp.eq.s32.totalorder %s23, 1
      %p172 = scmp.ne.s32.totalorder %s167, %s169
      %p173 = scmp.eq.s32.totalorder %s23, 0
      %p174 = por %p172, %p173
      %p175 = scmp.ne.s32.totalorder %s167, %s169
      %p176 = scmp.eq.s32.totalorder %s28, 1
      %p177 = por %p175, %p176
      %p178 = scmp.ne.s32.totalorder %s169, %s170
      %p179 = scmp.eq.s32.totalorder %s28, 0
      %p180 = por %p178, %p179
      %p181 = scmp.ne.s32.totalorder %s169, %s170
      %p182 = scmp.eq.s32.totalorder %s29, 1
      %p183 = por %p181, %p182
      %p185 = scmp.ne.s32.totalorder %s170, %s184
      %p186 = scmp.eq.s32.totalorder %s29, 0
      %p187 = por %p185, %p186
      %s188 = ssub.s32 %s23, %s30
      %p189 = scmp.eq.s32.totalorder %s188, 0
      %s191 = sadd.s32 %s190, 1
      %s192 = scalar_select %p189, %s190, %s191
      %p195 = pneg %p189
      %p196 = scmp.eq.s32.totalorder %s23, 1
      %p197 = por %p195, %p196
      %p198 = scmp.ne.s32.totalorder %s190, %s193
      %p199 = scmp.eq.s32.totalorder %s23, 0
      %p200 = por %p198, %p199
      %p201 = scmp.ne.s32.totalorder %s190, %s193
      %p202 = scmp.eq.s32.totalorder %s28, 1
      %p203 = por %p201, %p202
      %p204 = scmp.ne.s32.totalorder %s193, %s194
      %p205 = scmp.eq.s32.totalorder %s28, 0
      %p206 = por %p204, %p205
      %p207 = scmp.ne.s32.totalorder %s193, %s194
      %p208 = scmp.eq.s32.totalorder %s29, 1
      %p209 = por %p207, %p208
      %p211 = scmp.ne.s32.totalorder %s194, %s210
      %p212 = scmp.eq.s32.totalorder %s29, 0
      %p213 = por %p211, %p212
      %p214 = scmp.le.s32.totalorder 1, %s23
      %p215 = scmp.lt.s32.totalorder %s23, 3
      %p216 = pnand %p214, %p215
      %p217 = pneg %p216
      // Predicated region
      $region9: #{tpu_custom_call.1} parent=5 // pred_check
        _
      $region10: #{tpu_custom_call.1} parent=5 // pred_check_branch
        %219 = sbr.rel (%p216) target = $region12
      $region11: #{tpu_custom_call.1} parent=5 // pred_region
        %s220 = ssub.s32 %s23, 1
        // Predicated region
        $region13: #{tpu_custom_call.1} parent=11 // pred_check
          %p221 = pneg %p96
        $region14: #{tpu_custom_call.1} parent=11 // pred_check_branch
          %223 = sbr.rel (%p221) target = $region16
        $region15: #{tpu_custom_call.1} parent=11 // pred_region
          %225 = vsyncadd [#allocation6], 0
          %s226 = sshll.u32 %s2, 4
          %s227 = int_to_ptr.hbm [resolvable:$true] %s226
          %s228 = sshll.u32 [#allocation7], 4
          %s229 = int_to_ptr.vmem [resolvable:$true] %s228
          %234 = dma.hbm_to_vmem [thread:$0]  %s227, 2048, %s229, [#allocation6], 512, 512, 32
        $region16: #{tpu_custom_call.1} parent=11 // pred_fallthru
          _
        // Predicated region
        $region17: #{tpu_custom_call.1} parent=11 // pred_check
          %p235 = pneg %p117
        $region18: #{tpu_custom_call.1} parent=11 // pred_check_branch
          %237 = sbr.rel (%p235) target = $region20
        $region19: #{tpu_custom_call.1} parent=11 // pred_region
          _
        $region20: #{tpu_custom_call.1} parent=11 // pred_fallthru
          _
        // Predicated region
        $region21: #{tpu_custom_call.1} parent=11 // pred_check
          %p238 = pneg %p138
        $region22: #{tpu_custom_call.1} parent=11 // pred_check_branch
          %240 = sbr.rel (%p238) target = $region24
        $region23: #{tpu_custom_call.1} parent=11 // pred_region
          _
        $region24: #{tpu_custom_call.1} parent=11 // pred_fallthru
          _
        // Predicated region
        $region25: #{tpu_custom_call.1} parent=11 // pred_check
          %p241 = pneg %p159
        $region26: #{tpu_custom_call.1} parent=11 // pred_check_branch
          %243 = sbr.rel (%p241) target = $region28
        $region27: #{tpu_custom_call.1} parent=11 // pred_region
          %245 = vsyncadd [#allocation9], 0
          %s247 = sshll.u32 %s5, 4
          %s248 = int_to_ptr.hbm [resolvable:$true] %s247
          %s249 = sshll.u32 [#allocation8], 4
          %s250 = int_to_ptr.vmem [resolvable:$true] %s249
          %252 = dma.hbm_to_vmem [thread:$0]  %s248, 128, %s250, [#allocation9]
        $region28: #{tpu_custom_call.1} parent=11 // pred_fallthru
          _
        // Predicated region
        $region29: #{tpu_custom_call.1} parent=11 // pred_check
          %p253 = pneg %p180
        $region30: #{tpu_custom_call.1} parent=11 // pred_check_branch
          %255 = sbr.rel (%p253) target = $region32
        $region31: #{tpu_custom_call.1} parent=11 // pred_region
          _
        $region32: #{tpu_custom_call.1} parent=11 // pred_fallthru
          _
      $region12: #{tpu_custom_call.1} parent=5 // pred_fallthru
        _
      %p256 = scmp.lt.s32.totalorder %s23, 2
      // Predicated region
      $region33: #{tpu_custom_call.1} parent=5 // pred_check
        %p257 = pneg %p256
      $region34: #{tpu_custom_call.1} parent=5 // pred_check_branch
        %259 = sbr.rel (%p257) target = $region36
      $region35: #{tpu_custom_call.1} parent=5 // pred_region
        // Predicated region
        $region37: #{tpu_custom_call.1} parent=35 // pred_check
          %p260 = pneg %p43
        $region38: #{tpu_custom_call.1} parent=35 // pred_check_branch
          %262 = sbr.rel (%p260) target = $region40
        $region39: #{tpu_custom_call.1} parent=35 // pred_region
          %s263 = sand.u32 %s33, 1
          %s264 = scalar_lea.sflag [#allocation3], %s263
          %s265 = sand.u32 %s33, 1
          %s266 = smul.addr %s265, 16
          %s267 = scalar_lea.vmem [#allocation2], %s266
          %269 = vsyncadd %s264, 0
          %s270 = smul.addr %s23, 4
          %s271 = smul.addr %s270, 4
          %s272 = scalar_lea.hbm %s0, %s271
          %s274 = sshll.u32 %s272, 4
          %s275 = int_to_ptr.hbm [resolvable:$true] %s274
          %s276 = sshll.u32 %s267, 4
          %s277 = int_to_ptr.vmem [resolvable:$true] %s276
          %279 = dma.hbm_to_vmem [thread:$0]  %s275, 256, %s277, %s264
        $region40: #{tpu_custom_call.1} parent=35 // pred_fallthru
          _
        // Predicated region
        $region41: #{tpu_custom_call.1} parent=35 // pred_check
          %p280 = pneg %p69
        $region42: #{tpu_custom_call.1} parent=35 // pred_check_branch
          %282 = sbr.rel (%p280) target = $region44
        $region43: #{tpu_custom_call.1} parent=35 // pred_region
          %s283 = sand.u32 %s23, 1
          %s284 = scalar_lea.sflag [#allocation6], %s283
          %s285 = sand.u32 %s59, 1
          %s286 = smul.addr %s285, 512
          %s287 = scalar_lea.vmem [#allocation5], %s286
          %289 = vsyncadd %s284, 0
          %s290 = smul.addr %s23, 64
          %s291 = smul.addr %s290, 8
          %s292 = scalar_lea.hbm %s1, %s291
          %s293 = sshll.u32 %s292, 4
          %s294 = int_to_ptr.hbm [resolvable:$true] %s293
          %s295 = sshll.u32 %s287, 4
          %s296 = int_to_ptr.vmem [resolvable:$true] %s295
          %301 = dma.hbm_to_vmem [thread:$0]  %s294, 8192, %s296, %s284, 512, 512, 32
        $region44: #{tpu_custom_call.1} parent=35 // pred_fallthru
          _
      $region36: #{tpu_custom_call.1} parent=5 // pred_fallthru
        _
      %p302 = scmp.le.s32.totalorder 1, %s23
      %p303 = scmp.lt.s32.totalorder %s23, 3
      %p304 = pnand %p302, %p303
      %p305 = pneg %p304
      // Predicated region
      $region45: #{tpu_custom_call.1} parent=5 // pred_check
        _
      $region46: #{tpu_custom_call.1} parent=5 // pred_check_branch
        %307 = sbr.rel (%p304) target = $region48
      $region47: #{tpu_custom_call.1} parent=5 // pred_region
        %s308 = ssub.s32 %s23, 1
        %s309 = sand.u32 %s36, 1
        %s310 = scalar_lea.sflag [#allocation3], %s309
        %s311 = sand.u32 %s36, 1
        %s312 = smul.addr %s311, 16
        %s313 = scalar_lea.vmem [#allocation2], %s312
        // Predicated region
        $region49: #{tpu_custom_call.1} parent=47 // pred_check
          %p314 = pneg %p49
        $region50: #{tpu_custom_call.1} parent=47 // pred_check_branch
          %316 = sbr.rel (%p314) target = $region52
        $region51: #{tpu_custom_call.1} parent=47 // pred_region
          %318 = dma.done %s310, 256
        $region52: #{tpu_custom_call.1} parent=47 // pred_fallthru
          _
        %s319 = sand.u32 %s28, 1
        %s320 = scalar_lea.sflag [#allocation6], %s319
        %s321 = sand.u32 %s62, 1
        %s322 = smul.addr %s321, 512
        %s323 = scalar_lea.vmem [#allocation5], %s322
        // Predicated region
        $region53: #{tpu_custom_call.1} parent=47 // pred_check
          %p324 = pneg %p75
        $region54: #{tpu_custom_call.1} parent=47 // pred_check_branch
          %326 = sbr.rel (%p324) target = $region56
        $region55: #{tpu_custom_call.1} parent=47 // pred_region
          %328 = dma.done %s320, 8192
        $region56: #{tpu_custom_call.1} parent=47 // pred_fallthru
          _
        // Predicated region
        $region57: #{tpu_custom_call.1} parent=47 // pred_check
          %p329 = pneg %p96
        $region58: #{tpu_custom_call.1} parent=47 // pred_check_branch
          %331 = sbr.rel (%p329) target = $region60
        $region59: #{tpu_custom_call.1} parent=47 // pred_region
          %333 = dma.done [#allocation6], 2048
        $region60: #{tpu_custom_call.1} parent=47 // pred_fallthru
          _
        // Predicated region
        $region61: #{tpu_custom_call.1} parent=47 // pred_check
          %p334 = pneg %p159
        $region62: #{tpu_custom_call.1} parent=47 // pred_check_branch
          %336 = sbr.rel (%p334) target = $region64
        $region63: #{tpu_custom_call.1} parent=47 // pred_region
          %338 = dma.done [#allocation9], 128
        $region64: #{tpu_custom_call.1} parent=47 // pred_fallthru
          _
        %s339 = sand.u32 %s36, 1
        %s340 = scalar_lea.sflag [#allocation3], %s339
        %s341 = sand.u32 %s36, 1
        %s342 = smul.addr %s341, 16
        %s343 = scalar_lea.vmem [#allocation2], %s342
        %p344 = pneg %p49
        %p345 = pneg %p46
        %s346 = sand.u32 %s28, 1
        %s347 = scalar_lea.sflag [#allocation6], %s346
        %s348 = sand.u32 %s62, 1
        %s349 = smul.addr %s348, 512
        %s350 = scalar_lea.vmem [#allocation5], %s349
        %p351 = pneg %p75
        %p352 = pneg %p72
        %p353 = pneg %p96
        %p354 = pneg %p93
        %p355 = pneg %p117
        %p356 = pneg %p114
        %p357 = pneg %p138
        %p358 = pneg %p135
        %p359 = pneg %p159
        %p360 = pneg %p156
        %p361 = pneg %p180
        %p362 = pneg %p177
        %p363 = pneg %p206
        %p364 = pneg %p203
        %s365 = sand.u32 %s193, 1
        %s366 = scalar_lea.sflag [#allocation4], %s365
        %s367 = sand.u32 %s193, 1
        %s368 = smul.addr %s367, 16
        %s369 = scalar_lea.vmem [#allocation10], %s368
        %v370 = vld [vmem:[%s313] sm:$0x33]
        %v371 = vld [vmem:[%s313 + $0x8] sm:$0x33]
        %v372 = vld [vmem:[%s313] sm:$0xcc]
        %v373 = vld [vmem:[%s313 + $0x8] sm:$0xcc]
        %v374 = vld [vmem:[%s3] sm:$0xff]
        %v375 = vld [vmem:[%s323] sm:$0xff]
        %v376 = vld [vmem:[%s323 + $0x8] sm:$0xff]
        %v377 = vld [vmem:[%s323 + $0x10] sm:$0xff]
        %v378 = vld [vmem:[%s323 + $0x18] sm:$0xff]
        %v379 = vld [vmem:[%s323 + $0x20] sm:$0xff]
        %v380 = vld [vmem:[%s323 + $0x28] sm:$0xff]
        %v381 = vld [vmem:[%s323 + $0x30] sm:$0xff]
        %v382 = vld [vmem:[%s323 + $0x38] sm:$0xff]
        %v383 = vld [vmem:[%s323 + $0x40] sm:$0xff]
        %v384 = vld [vmem:[%s323 + $0x48] sm:$0xff]
        %v385 = vld [vmem:[%s323 + $0x50] sm:$0xff]
        %v386 = vld [vmem:[%s323 + $0x58] sm:$0xff]
        %v387 = vld [vmem:[%s323 + $0x60] sm:$0xff]
        %v388 = vld [vmem:[%s323 + $0x68] sm:$0xff]
        %v389 = vld [vmem:[%s323 + $0x70] sm:$0xff]
        %v390 = vld [vmem:[%s323 + $0x78] sm:$0xff]
        %v391 = vld [vmem:[%s323 + $0x80] sm:$0xff]
        %v392 = vld [vmem:[%s323 + $0x88] sm:$0xff]
        %v393 = vld [vmem:[%s323 + $0x90] sm:$0xff]
        %v394 = vld [vmem:[%s323 + $0x98] sm:$0xff]
        %v395 = vld [vmem:[%s323 + $0xa0] sm:$0xff]
        %v396 = vld [vmem:[%s323 + $0xa8] sm:$0xff]
        %v397 = vld [vmem:[%s323 + $0xb0] sm:$0xff]
        %v398 = vld [vmem:[%s323 + $0xb8] sm:$0xff]
        %v399 = vld [vmem:[%s323 + $0xc0] sm:$0xff]
        %v400 = vld [vmem:[%s323 + $0xc8] sm:$0xff]
        %v401 = vld [vmem:[%s323 + $0xd0] sm:$0xff]
        %v402 = vld [vmem:[%s323 + $0xd8] sm:$0xff]
        %v403 = vld [vmem:[%s323 + $0xe0] sm:$0xff]
        %v404 = vld [vmem:[%s323 + $0xe8] sm:$0xff]
        %v405 = vld [vmem:[%s323 + $0xf0] sm:$0xff]
        %v406 = vld [vmem:[%s323 + $0xf8] sm:$0xff]
        %v407 = vld [vmem:[%s323 + $0x100] sm:$0xff]
        %v408 = vld [vmem:[%s323 + $0x108] sm:$0xff]
        %v409 = vld [vmem:[%s323 + $0x110] sm:$0xff]
        %v410 = vld [vmem:[%s323 + $0x118] sm:$0xff]
        %v411 = vld [vmem:[%s323 + $0x120] sm:$0xff]
        %v412 = vld [vmem:[%s323 + $0x128] sm:$0xff]
        %v413 = vld [vmem:[%s323 + $0x130] sm:$0xff]
        %v414 = vld [vmem:[%s323 + $0x138] sm:$0xff]
        %v415 = vld [vmem:[%s323 + $0x140] sm:$0xff]
        %v416 = vld [vmem:[%s323 + $0x148] sm:$0xff]
        %v417 = vld [vmem:[%s323 + $0x150] sm:$0xff]
        %v418 = vld [vmem:[%s323 + $0x158] sm:$0xff]
        %v419 = vld [vmem:[%s323 + $0x160] sm:$0xff]
        %v420 = vld [vmem:[%s323 + $0x168] sm:$0xff]
        %v421 = vld [vmem:[%s323 + $0x170] sm:$0xff]
        %v422 = vld [vmem:[%s323 + $0x178] sm:$0xff]
        %v423 = vld [vmem:[%s323 + $0x180] sm:$0xff]
        %v424 = vld [vmem:[%s323 + $0x188] sm:$0xff]
        %v425 = vld [vmem:[%s323 + $0x190] sm:$0xff]
        %v426 = vld [vmem:[%s323 + $0x198] sm:$0xff]
        %v427 = vld [vmem:[%s323 + $0x1a0] sm:$0xff]
        %v428 = vld [vmem:[%s323 + $0x1a8] sm:$0xff]
        %v429 = vld [vmem:[%s323 + $0x1b0] sm:$0xff]
        %v430 = vld [vmem:[%s323 + $0x1b8] sm:$0xff]
        %v431 = vld [vmem:[%s323 + $0x1c0] sm:$0xff]
        %v432 = vld [vmem:[%s323 + $0x1c8] sm:$0xff]
        %v433 = vld [vmem:[%s323 + $0x1d0] sm:$0xff]
        %v434 = vld [vmem:[%s323 + $0x1d8] sm:$0xff]
        %v435 = vld [vmem:[%s323 + $0x1e0] sm:$0xff]
        %v436 = vld [vmem:[%s323 + $0x1e8] sm:$0xff]
        %v437 = vld [vmem:[%s323 + $0x1f0] sm:$0xff]
        %v438 = vld [vmem:[%s323 + $0x1f8] sm:$0xff]
        %v439 = vand.u32 %v435, 4294901760
        %440 = vmatpush.msra.mxu0 %v439
        %v441 = vand.u32 %v431, 4294901760
        %442 = vmatpush.msra.mxu0 %v441
        %v443 = vand.u32 %v427, 4294901760
        %444 = vmatpush.msra.mxu0 %v443
        %v445 = vand.u32 %v423, 4294901760
        %446 = vmatpush.msra.mxu0 %v445
        %v447 = vand.u32 %v419, 4294901760
        %448 = vmatpush.msra.mxu0 %v447
        %v449 = vand.u32 %v415, 4294901760
        %450 = vmatpush.msra.mxu0 %v449
        %v451 = vand.u32 %v411, 4294901760
        %452 = vmatpush.msra.mxu0 %v451
        %v453 = vand.u32 %v407, 4294901760
        %454 = vmatpush.msra.mxu0 %v453
        %v455 = vand.u32 %v403, 4294901760
        %456 = vmatpush.msra.mxu0 %v455
        %v457 = vand.u32 %v399, 4294901760
        %458 = vmatpush.msra.mxu0 %v457
        %v459 = vand.u32 %v395, 4294901760
        %460 = vmatpush.msra.mxu0 %v459
        %v461 = vand.u32 %v391, 4294901760
        %462 = vmatpush.msra.mxu0 %v461
        %v463 = vand.u32 %v387, 4294901760
        %464 = vmatpush.msra.mxu0 %v463
        %v465 = vand.u32 %v383, 4294901760
        %466 = vmatpush.msra.mxu0 %v465
        %v467 = vand.u32 %v379, 4294901760
        %468 = vmatpush.msra.mxu0 %v467
        %v469 = vand.u32 %v375, 4294901760
        %470 = vmatpush.msra.mxu0 %v469
        %v471 = vand.u32 %v374, 4294901760
        %v472 = vsub.f32 %v374, %v471
        %v473 = vand.u32 %v472, 4294901760
        %v474 = vsub.f32 %v472, %v473
        %v475 = vand.u32 %v474, 4294901760
        %476 = vmatmul.f32.gmra.mxu0 %v475
        %v477 = vpop.f32.mrf.mxu0
        %v478 = vadd.f32 0.0, %v477
        %479 = vdwg.mxu0
        %v480 = vand.u32 %v435, 4294901760
        %v481 = vsub.f32 %v435, %v480
        %v482 = vand.u32 %v481, 4294901760
        %v483 = vsub.f32 %v481, %v482
        %v484 = vand.u32 %v483, 4294901760
        %485 = vmatpush.msra.mxu0 %v484
        %v486 = vand.u32 %v431, 4294901760
        %v487 = vsub.f32 %v431, %v486
        %v488 = vand.u32 %v487, 4294901760
        %v489 = vsub.f32 %v487, %v488
        %v490 = vand.u32 %v489, 4294901760
        %491 = vmatpush.msra.mxu0 %v490
        %v492 = vand.u32 %v427, 4294901760
        %v493 = vsub.f32 %v427, %v492
        %v494 = vand.u32 %v493, 4294901760
        %v495 = vsub.f32 %v493, %v494
        %v496 = vand.u32 %v495, 4294901760
        %497 = vmatpush.msra.mxu0 %v496
        %v498 = vand.u32 %v423, 4294901760
        %v499 = vsub.f32 %v423, %v498
        %v500 = vand.u32 %v499, 4294901760
        %v501 = vsub.f32 %v499, %v500
        %v502 = vand.u32 %v501, 4294901760
        %503 = vmatpush.msra.mxu0 %v502
        %v504 = vand.u32 %v419, 4294901760
        %v505 = vsub.f32 %v419, %v504
        %v506 = vand.u32 %v505, 4294901760
        %v507 = vsub.f32 %v505, %v506
        %v508 = vand.u32 %v507, 4294901760
        %509 = vmatpush.msra.mxu0 %v508
        %v510 = vand.u32 %v415, 4294901760
        %v511 = vsub.f32 %v415, %v510
        %v512 = vand.u32 %v511, 4294901760
        %v513 = vsub.f32 %v511, %v512
        %v514 = vand.u32 %v513, 4294901760
        %515 = vmatpush.msra.mxu0 %v514
        %v516 = vand.u32 %v411, 4294901760
        %v517 = vsub.f32 %v411, %v516
        %v518 = vand.u32 %v517, 4294901760
        %v519 = vsub.f32 %v517, %v518
        %v520 = vand.u32 %v519, 4294901760
        %521 = vmatpush.msra.mxu0 %v520
        %v522 = vand.u32 %v407, 4294901760
        %v523 = vsub.f32 %v407, %v522
        %v524 = vand.u32 %v523, 4294901760
        %v525 = vsub.f32 %v523, %v524
        %v526 = vand.u32 %v525, 4294901760
        %527 = vmatpush.msra.mxu0 %v526
        %v528 = vand.u32 %v403, 4294901760
        %v529 = vsub.f32 %v403, %v528
        %v530 = vand.u32 %v529, 4294901760
        %v531 = vsub.f32 %v529, %v530
        %v532 = vand.u32 %v531, 4294901760
        %533 = vmatpush.msra.mxu0 %v532
        %v534 = vand.u32 %v399, 4294901760
        %v535 = vsub.f32 %v399, %v534
        %v536 = vand.u32 %v535, 4294901760
        %v537 = vsub.f32 %v535, %v536
        %v538 = vand.u32 %v537, 4294901760
        %539 = vmatpush.msra.mxu0 %v538
        %v540 = vand.u32 %v395, 4294901760
        %v541 = vsub.f32 %v395, %v540
        %v542 = vand.u32 %v541, 4294901760
        %v543 = vsub.f32 %v541, %v542
        %v544 = vand.u32 %v543, 4294901760
        %545 = vmatpush.msra.mxu0 %v544
        %v546 = vand.u32 %v391, 4294901760
        %v547 = vsub.f32 %v391, %v546
        %v548 = vand.u32 %v547, 4294901760
        %v549 = vsub.f32 %v547, %v548
        %v550 = vand.u32 %v549, 4294901760
        %551 = vmatpush.msra.mxu0 %v550
        %v552 = vand.u32 %v387, 4294901760
        %v553 = vsub.f32 %v387, %v552
        %v554 = vand.u32 %v553, 4294901760
        %v555 = vsub.f32 %v553, %v554
        %v556 = vand.u32 %v555, 4294901760
        %557 = vmatpush.msra.mxu0 %v556
        %v558 = vand.u32 %v383, 4294901760
        %v559 = vsub.f32 %v383, %v558
        %v560 = vand.u32 %v559, 4294901760
        %v561 = vsub.f32 %v559, %v560
        %v562 = vand.u32 %v561, 4294901760
        %563 = vmatpush.msra.mxu0 %v562
        %v564 = vand.u32 %v379, 4294901760
        %v565 = vsub.f32 %v379, %v564
        %v566 = vand.u32 %v565, 4294901760
        %v567 = vsub.f32 %v565, %v566
        %v568 = vand.u32 %v567, 4294901760
        %569 = vmatpush.msra.mxu0 %v568
        %v570 = vand.u32 %v375, 4294901760
        %v571 = vsub.f32 %v375, %v570
        %v572 = vand.u32 %v571, 4294901760
        %v573 = vsub.f32 %v571, %v572
        %v574 = vand.u32 %v573, 4294901760
        %575 = vmatpush.msra.mxu0 %v574
        %v576 = vand.u32 %v374, 4294901760
        %577 = vmatmul.f32.gmra.mxu0 %v576
        %v578 = vpop.f32.mrf.mxu0
        %v579 = vadd.f32 %v478, %v578
        %580 = vdwg.mxu0
        %v581 = vand.u32 %v435, 4294901760
        %v582 = vsub.f32 %v435, %v581
        %583 = vmatpush.msra.mxu0 %v582
        %v584 = vand.u32 %v431, 4294901760
        %v585 = vsub.f32 %v431, %v584
        %586 = vmatpush.msra.mxu0 %v585
        %v587 = vand.u32 %v427, 4294901760
        %v588 = vsub.f32 %v427, %v587
        %589 = vmatpush.msra.mxu0 %v588
        %v590 = vand.u32 %v423, 4294901760
        %v591 = vsub.f32 %v423, %v590
        %592 = vmatpush.msra.mxu0 %v591
        %v593 = vand.u32 %v419, 4294901760
        %v594 = vsub.f32 %v419, %v593
        %595 = vmatpush.msra.mxu0 %v594
        %v596 = vand.u32 %v415, 4294901760
        %v597 = vsub.f32 %v415, %v596
        %598 = vmatpush.msra.mxu0 %v597
        %v599 = vand.u32 %v411, 4294901760
        %v600 = vsub.f32 %v411, %v599
        %601 = vmatpush.msra.mxu0 %v600
        %v602 = vand.u32 %v407, 4294901760
        %v603 = vsub.f32 %v407, %v602
        %604 = vmatpush.msra.mxu0 %v603
        %v605 = vand.u32 %v403, 4294901760
        %v606 = vsub.f32 %v403, %v605
        %607 = vmatpush.msra.mxu0 %v606
        %v608 = vand.u32 %v399, 4294901760
        %v609 = vsub.f32 %v399, %v608
        %610 = vmatpush.msra.mxu0 %v609
        %v611 = vand.u32 %v395, 4294901760
        %v612 = vsub.f32 %v395, %v611
        %613 = vmatpush.msra.mxu0 %v612
        %v614 = vand.u32 %v391, 4294901760
        %v615 = vsub.f32 %v391, %v614
        %616 = vmatpush.msra.mxu0 %v615
        %v617 = vand.u32 %v387, 4294901760
        %v618 = vsub.f32 %v387, %v617
        %619 = vmatpush.msra.mxu0 %v618
        %v620 = vand.u32 %v383, 4294901760
        %v621 = vsub.f32 %v383, %v620
        %622 = vmatpush.msra.mxu0 %v621
        %v623 = vand.u32 %v379, 4294901760
        %v624 = vsub.f32 %v379, %v623
        %625 = vmatpush.msra.mxu0 %v624
        %v626 = vand.u32 %v375, 4294901760
        %v627 = vsub.f32 %v375, %v626
        %628 = vmatpush.msra.mxu0 %v627
        %v629 = vand.u32 %v374, 4294901760
        %v630 = vsub.f32 %v374, %v629
        %631 = vmatmul.f32.gmra.mxu0 %v630
        %v632 = vpop.f32.mrf.mxu0
        %v633 = vadd.f32 %v579, %v632
        %634 = vdwg.mxu0
        %v635 = vand.u32 %v435, 4294901760
        %636 = vmatpush.msra.mxu0 %v635
        %v637 = vand.u32 %v431, 4294901760
        %638 = vmatpush.msra.mxu0 %v637
        %v639 = vand.u32 %v427, 4294901760
        %640 = vmatpush.msra.mxu0 %v639
        %v641 = vand.u32 %v423, 4294901760
        %642 = vmatpush.msra.mxu0 %v641
        %v643 = vand.u32 %v419, 4294901760
        %644 = vmatpush.msra.mxu0 %v643
        %v645 = vand.u32 %v415, 4294901760
        %646 = vmatpush.msra.mxu0 %v645
        %v647 = vand.u32 %v411, 4294901760
        %648 = vmatpush.msra.mxu0 %v647
        %v649 = vand.u32 %v407, 4294901760
        %650 = vmatpush.msra.mxu0 %v649
        %v651 = vand.u32 %v403, 4294901760
        %652 = vmatpush.msra.mxu0 %v651
        %v653 = vand.u32 %v399, 4294901760
        %654 = vmatpush.msra.mxu0 %v653
        %v655 = vand.u32 %v395, 4294901760
        %656 = vmatpush.msra.mxu0 %v655
        %v657 = vand.u32 %v391, 4294901760
        %658 = vmatpush.msra.mxu0 %v657
        %v659 = vand.u32 %v387, 4294901760
        %660 = vmatpush.msra.mxu0 %v659
        %v661 = vand.u32 %v383, 4294901760
        %662 = vmatpush.msra.mxu0 %v661
        %v663 = vand.u32 %v379, 4294901760
        %664 = vmatpush.msra.mxu0 %v663
        %v665 = vand.u32 %v375, 4294901760
        %666 = vmatpush.msra.mxu0 %v665
        %v667 = vand.u32 %v374, 4294901760
        %v668 = vsub.f32 %v374, %v667
        %v669 = vand.u32 %v668, 4294901760
        %670 = vmatmul.f32.gmra.mxu0 %v669
        %v671 = vpop.f32.mrf.mxu0
        %v672 = vadd.f32 %v633, %v671
        %673 = vdwg.mxu0
        %v674 = vand.u32 %v435, 4294901760
        %v675 = vsub.f32 %v435, %v674
        %v676 = vand.u32 %v675, 4294901760
        %677 = vmatpush.msra.mxu0 %v676
        %v678 = vand.u32 %v431, 4294901760
        %v679 = vsub.f32 %v431, %v678
        %v680 = vand.u32 %v679, 4294901760
        %681 = vmatpush.msra.mxu0 %v680
        %v682 = vand.u32 %v427, 4294901760
        %v683 = vsub.f32 %v427, %v682
        %v684 = vand.u32 %v683, 4294901760
        %685 = vmatpush.msra.mxu0 %v684
        %v686 = vand.u32 %v423, 4294901760
        %v687 = vsub.f32 %v423, %v686
        %v688 = vand.u32 %v687, 4294901760
        %689 = vmatpush.msra.mxu0 %v688
        %v690 = vand.u32 %v419, 4294901760
        %v691 = vsub.f32 %v419, %v690
        %v692 = vand.u32 %v691, 4294901760
        %693 = vmatpush.msra.mxu0 %v692
        %v694 = vand.u32 %v415, 4294901760
        %v695 = vsub.f32 %v415, %v694
        %v696 = vand.u32 %v695, 4294901760
        %697 = vmatpush.msra.mxu0 %v696
        %v698 = vand.u32 %v411, 4294901760
        %v699 = vsub.f32 %v411, %v698
        %v700 = vand.u32 %v699, 4294901760
        %701 = vmatpush.msra.mxu0 %v700
        %v702 = vand.u32 %v407, 4294901760
        %v703 = vsub.f32 %v407, %v702
        %v704 = vand.u32 %v703, 4294901760
        %705 = vmatpush.msra.mxu0 %v704
        %v706 = vand.u32 %v403, 4294901760
        %v707 = vsub.f32 %v403, %v706
        %v708 = vand.u32 %v707, 4294901760
        %709 = vmatpush.msra.mxu0 %v708
        %v710 = vand.u32 %v399, 4294901760
        %v711 = vsub.f32 %v399, %v710
        %v712 = vand.u32 %v711, 4294901760
        %713 = vmatpush.msra.mxu0 %v712
        %v714 = vand.u32 %v395, 4294901760
        %v715 = vsub.f32 %v395, %v714
        %v716 = vand.u32 %v715, 4294901760
        %717 = vmatpush.msra.mxu0 %v716
        %v718 = vand.u32 %v391, 4294901760
        %v719 = vsub.f32 %v391, %v718
        %v720 = vand.u32 %v719, 4294901760
        %721 = vmatpush.msra.mxu0 %v720
        %v722 = vand.u32 %v387, 4294901760
        %v723 = vsub.f32 %v387, %v722
        %v724 = vand.u32 %v723, 4294901760
        %725 = vmatpush.msra.mxu0 %v724
        %v726 = vand.u32 %v383, 4294901760
        %v727 = vsub.f32 %v383, %v726
        %v728 = vand.u32 %v727, 4294901760
        %729 = vmatpush.msra.mxu0 %v728
        %v730 = vand.u32 %v379, 4294901760
        %v731 = vsub.f32 %v379, %v730
        %v732 = vand.u32 %v731, 4294901760
        %733 = vmatpush.msra.mxu0 %v732
        %v734 = vand.u32 %v375, 4294901760
        %v735 = vsub.f32 %v375, %v734
        %v736 = vand.u32 %v735, 4294901760
        %737 = vmatpush.msra.mxu0 %v736
        %v738 = vand.u32 %v374, 4294901760
        %739 = vmatmul.f32.gmra.mxu0 %v738
        %v740 = vpop.f32.mrf.mxu0
        %v741 = vadd.f32 %v672, %v740
        %742 = vdwg.mxu0
        %v743 = vand.u32 %v435, 4294901760
        %744 = vmatpush.msra.mxu0 %v743
        %v745 = vand.u32 %v431, 4294901760
        %746 = vmatpush.msra.mxu0 %v745
        %v747 = vand.u32 %v427, 4294901760
        %748 = vmatpush.msra.mxu0 %v747
        %v749 = vand.u32 %v423, 4294901760
        %750 = vmatpush.msra.mxu0 %v749
        %v751 = vand.u32 %v419, 4294901760
        %752 = vmatpush.msra.mxu0 %v751
        %v753 = vand.u32 %v415, 4294901760
        %754 = vmatpush.msra.mxu0 %v753
        %v755 = vand.u32 %v411, 4294901760
        %756 = vmatpush.msra.mxu0 %v755
        %v757 = vand.u32 %v407, 4294901760
        %758 = vmatpush.msra.mxu0 %v757
        %v759 = vand.u32 %v403, 4294901760
        %760 = vmatpush.msra.mxu0 %v759
        %v761 = vand.u32 %v399, 4294901760
        %762 = vmatpush.msra.mxu0 %v761
        %v763 = vand.u32 %v395, 4294901760
        %764 = vmatpush.msra.mxu0 %v763
        %v765 = vand.u32 %v391, 4294901760
        %766 = vmatpush.msra.mxu0 %v765
        %v767 = vand.u32 %v387, 4294901760
        %768 = vmatpush.msra.mxu0 %v767
        %v769 = vand.u32 %v383, 4294901760
        %770 = vmatpush.msra.mxu0 %v769
        %v771 = vand.u32 %v379, 4294901760
        %772 = vmatpush.msra.mxu0 %v771
        %v773 = vand.u32 %v375, 4294901760
        %774 = vmatpush.msra.mxu0 %v773
        %v775 = vand.u32 %v374, 4294901760
        %776 = vmatmul.f32.gmra.mxu0 %v775
        %v777 = vpop.f32.mrf.mxu0
        %v778 = vadd.f32 %v741, %v777
        %779 = vdwg.mxu0
        %v780 = vand.u32 %v436, 4294901760
        %781 = vmatpush.msra.mxu0 %v780
        %v782 = vand.u32 %v432, 4294901760
        %783 = vmatpush.msra.mxu0 %v782
        %v784 = vand.u32 %v428, 4294901760
        %785 = vmatpush.msra.mxu0 %v784
        %v786 = vand.u32 %v424, 4294901760
        %787 = vmatpush.msra.mxu0 %v786
        %v788 = vand.u32 %v420, 4294901760
        %789 = vmatpush.msra.mxu0 %v788
        %v790 = vand.u32 %v416, 4294901760
        %791 = vmatpush.msra.mxu0 %v790
        %v792 = vand.u32 %v412, 4294901760
        %793 = vmatpush.msra.mxu0 %v792
        %v794 = vand.u32 %v408, 4294901760
        %795 = vmatpush.msra.mxu0 %v794
        %v796 = vand.u32 %v404, 4294901760
        %797 = vmatpush.msra.mxu0 %v796
        %v798 = vand.u32 %v400, 4294901760
        %799 = vmatpush.msra.mxu0 %v798
        %v800 = vand.u32 %v396, 4294901760
        %801 = vmatpush.msra.mxu0 %v800
        %v802 = vand.u32 %v392, 4294901760
        %803 = vmatpush.msra.mxu0 %v802
        %v804 = vand.u32 %v388, 4294901760
        %805 = vmatpush.msra.mxu0 %v804
        %v806 = vand.u32 %v384, 4294901760
        %807 = vmatpush.msra.mxu0 %v806
        %v808 = vand.u32 %v380, 4294901760
        %809 = vmatpush.msra.mxu0 %v808
        %v810 = vand.u32 %v376, 4294901760
        %811 = vmatpush.msra.mxu0 %v810
        %v812 = vand.u32 %v374, 4294901760
        %v813 = vsub.f32 %v374, %v812
        %v814 = vand.u32 %v813, 4294901760
        %v815 = vsub.f32 %v813, %v814
        %v816 = vand.u32 %v815, 4294901760
        %817 = vmatmul.f32.gmra.mxu0 %v816
        %v818 = vpop.f32.mrf.mxu0
        %v819 = vadd.f32 0.0, %v818
        %820 = vdwg.mxu0
        %v821 = vand.u32 %v436, 4294901760
        %v822 = vsub.f32 %v436, %v821
        %v823 = vand.u32 %v822, 4294901760
        %v824 = vsub.f32 %v822, %v823
        %v825 = vand.u32 %v824, 4294901760
        %826 = vmatpush.msra.mxu0 %v825
        %v827 = vand.u32 %v432, 4294901760
        %v828 = vsub.f32 %v432, %v827
        %v829 = vand.u32 %v828, 4294901760
        %v830 = vsub.f32 %v828, %v829
        %v831 = vand.u32 %v830, 4294901760
        %832 = vmatpush.msra.mxu0 %v831
        %v833 = vand.u32 %v428, 4294901760
        %v834 = vsub.f32 %v428, %v833
        %v835 = vand.u32 %v834, 4294901760
        %v836 = vsub.f32 %v834, %v835
        %v837 = vand.u32 %v836, 4294901760
        %838 = vmatpush.msra.mxu0 %v837
        %v839 = vand.u32 %v424, 4294901760
        %v840 = vsub.f32 %v424, %v839
        %v841 = vand.u32 %v840, 4294901760
        %v842 = vsub.f32 %v840, %v841
        %v843 = vand.u32 %v842, 4294901760
        %844 = vmatpush.msra.mxu0 %v843
        %v845 = vand.u32 %v420, 4294901760
        %v846 = vsub.f32 %v420, %v845
        %v847 = vand.u32 %v846, 4294901760
        %v848 = vsub.f32 %v846, %v847
        %v849 = vand.u32 %v848, 4294901760
        %850 = vmatpush.msra.mxu0 %v849
        %v851 = vand.u32 %v416, 4294901760
        %v852 = vsub.f32 %v416, %v851
        %v853 = vand.u32 %v852, 4294901760
        %v854 = vsub.f32 %v852, %v853
        %v855 = vand.u32 %v854, 4294901760
        %856 = vmatpush.msra.mxu0 %v855
        %v857 = vand.u32 %v412, 4294901760
        %v858 = vsub.f32 %v412, %v857
        %v859 = vand.u32 %v858, 4294901760
        %v860 = vsub.f32 %v858, %v859
        %v861 = vand.u32 %v860, 4294901760
        %862 = vmatpush.msra.mxu0 %v861
        %v863 = vand.u32 %v408, 4294901760
        %v864 = vsub.f32 %v408, %v863
        %v865 = vand.u32 %v864, 4294901760
        %v866 = vsub.f32 %v864, %v865
        %v867 = vand.u32 %v866, 4294901760
        %868 = vmatpush.msra.mxu0 %v867
        %v869 = vand.u32 %v404, 4294901760
        %v870 = vsub.f32 %v404, %v869
        %v871 = vand.u32 %v870, 4294901760
        %v872 = vsub.f32 %v870, %v871
        %v873 = vand.u32 %v872, 4294901760
        %874 = vmatpush.msra.mxu0 %v873
        %v875 = vand.u32 %v400, 4294901760
        %v876 = vsub.f32 %v400, %v875
        %v877 = vand.u32 %v876, 4294901760
        %v878 = vsub.f32 %v876, %v877
        %v879 = vand.u32 %v878, 4294901760
        %880 = vmatpush.msra.mxu0 %v879
        %v881 = vand.u32 %v396, 4294901760
        %v882 = vsub.f32 %v396, %v881
        %v883 = vand.u32 %v882, 4294901760
        %v884 = vsub.f32 %v882, %v883
        %v885 = vand.u32 %v884, 4294901760
        %886 = vmatpush.msra.mxu0 %v885
        %v887 = vand.u32 %v392, 4294901760
        %v888 = vsub.f32 %v392, %v887
        %v889 = vand.u32 %v888, 4294901760
        %v890 = vsub.f32 %v888, %v889
        %v891 = vand.u32 %v890, 4294901760
        %892 = vmatpush.msra.mxu0 %v891
        %v893 = vand.u32 %v388, 4294901760
        %v894 = vsub.f32 %v388, %v893
        %v895 = vand.u32 %v894, 4294901760
        %v896 = vsub.f32 %v894, %v895
        %v897 = vand.u32 %v896, 4294901760
        %898 = vmatpush.msra.mxu0 %v897
        %v899 = vand.u32 %v384, 4294901760
        %v900 = vsub.f32 %v384, %v899
        %v901 = vand.u32 %v900, 4294901760
        %v902 = vsub.f32 %v900, %v901
        %v903 = vand.u32 %v902, 4294901760
        %904 = vmatpush.msra.mxu0 %v903
        %v905 = vand.u32 %v380, 4294901760
        %v906 = vsub.f32 %v380, %v905
        %v907 = vand.u32 %v906, 4294901760
        %v908 = vsub.f32 %v906, %v907
        %v909 = vand.u32 %v908, 4294901760
        %910 = vmatpush.msra.mxu0 %v909
        %v911 = vand.u32 %v376, 4294901760
        %v912 = vsub.f32 %v376, %v911
        %v913 = vand.u32 %v912, 4294901760
        %v914 = vsub.f32 %v912, %v913
        %v915 = vand.u32 %v914, 4294901760
        %916 = vmatpush.msra.mxu0 %v915
        %v917 = vand.u32 %v374, 4294901760
        %918 = vmatmul.f32.gmra.mxu0 %v917
        %v919 = vpop.f32.mrf.mxu0
        %v920 = vadd.f32 %v819, %v919
        %921 = vdwg.mxu0
        %v922 = vand.u32 %v436, 4294901760
        %v923 = vsub.f32 %v436, %v922
        %924 = vmatpush.msra.mxu0 %v923
        %v925 = vand.u32 %v432, 4294901760
        %v926 = vsub.f32 %v432, %v925
        %927 = vmatpush.msra.mxu0 %v926
        %v928 = vand.u32 %v428, 4294901760
        %v929 = vsub.f32 %v428, %v928
        %930 = vmatpush.msra.mxu0 %v929
        %v931 = vand.u32 %v424, 4294901760
        %v932 = vsub.f32 %v424, %v931
        %933 = vmatpush.msra.mxu0 %v932
        %v934 = vand.u32 %v420, 4294901760
        %v935 = vsub.f32 %v420, %v934
        %936 = vmatpush.msra.mxu0 %v935
        %v937 = vand.u32 %v416, 4294901760
        %v938 = vsub.f32 %v416, %v937
        %939 = vmatpush.msra.mxu0 %v938
        %v940 = vand.u32 %v412, 4294901760
        %v941 = vsub.f32 %v412, %v940
        %942 = vmatpush.msra.mxu0 %v941
        %v943 = vand.u32 %v408, 4294901760
        %v944 = vsub.f32 %v408, %v943
        %945 = vmatpush.msra.mxu0 %v944
        %v946 = vand.u32 %v404, 4294901760
        %v947 = vsub.f32 %v404, %v946
        %948 = vmatpush.msra.mxu0 %v947
        %v949 = vand.u32 %v400, 4294901760
        %v950 = vsub.f32 %v400, %v949
        %951 = vmatpush.msra.mxu0 %v950
        %v952 = vand.u32 %v396, 4294901760
        %v953 = vsub.f32 %v396, %v952
        %954 = vmatpush.msra.mxu0 %v953
        %v955 = vand.u32 %v392, 4294901760
        %v956 = vsub.f32 %v392, %v955
        %957 = vmatpush.msra.mxu0 %v956
        %v958 = vand.u32 %v388, 4294901760
        %v959 = vsub.f32 %v388, %v958
        %960 = vmatpush.msra.mxu0 %v959
        %v961 = vand.u32 %v384, 4294901760
        %v962 = vsub.f32 %v384, %v961
        %963 = vmatpush.msra.mxu0 %v962
        %v964 = vand.u32 %v380, 4294901760
        %v965 = vsub.f32 %v380, %v964
        %966 = vmatpush.msra.mxu0 %v965
        %v967 = vand.u32 %v376, 4294901760
        %v968 = vsub.f32 %v376, %v967
        %969 = vmatpush.msra.mxu0 %v968
        %v970 = vand.u32 %v374, 4294901760
        %v971 = vsub.f32 %v374, %v970
        %972 = vmatmul.f32.gmra.mxu0 %v971
        %v973 = vpop.f32.mrf.mxu0
        %v974 = vadd.f32 %v920, %v973
        %975 = vdwg.mxu0
        %v976 = vand.u32 %v436, 4294901760
        %977 = vmatpush.msra.mxu0 %v976
        %v978 = vand.u32 %v432, 4294901760
        %979 = vmatpush.msra.mxu0 %v978
        %v980 = vand.u32 %v428, 4294901760
        %981 = vmatpush.msra.mxu0 %v980
        %v982 = vand.u32 %v424, 4294901760
        %983 = vmatpush.msra.mxu0 %v982
        %v984 = vand.u32 %v420, 4294901760
        %985 = vmatpush.msra.mxu0 %v984
        %v986 = vand.u32 %v416, 4294901760
        %987 = vmatpush.msra.mxu0 %v986
        %v988 = vand.u32 %v412, 4294901760
        %989 = vmatpush.msra.mxu0 %v988
        %v990 = vand.u32 %v408, 4294901760
        %991 = vmatpush.msra.mxu0 %v990
        %v992 = vand.u32 %v404, 4294901760
        %993 = vmatpush.msra.mxu0 %v992
        %v994 = vand.u32 %v400, 4294901760
        %995 = vmatpush.msra.mxu0 %v994
        %v996 = vand.u32 %v396, 4294901760
        %997 = vmatpush.msra.mxu0 %v996
        %v998 = vand.u32 %v392, 4294901760
        %999 = vmatpush.msra.mxu0 %v998
        %v1000 = vand.u32 %v388, 4294901760
        %1001 = vmatpush.msra.mxu0 %v1000
        %v1002 = vand.u32 %v384, 4294901760
        %1003 = vmatpush.msra.mxu0 %v1002
        %v1004 = vand.u32 %v380, 4294901760
        %1005 = vmatpush.msra.mxu0 %v1004
        %v1006 = vand.u32 %v376, 4294901760
        %1007 = vmatpush.msra.mxu0 %v1006
        %v1008 = vand.u32 %v374, 4294901760
        %v1009 = vsub.f32 %v374, %v1008
        %v1010 = vand.u32 %v1009, 4294901760
        %1011 = vmatmul.f32.gmra.mxu0 %v1010
        %v1012 = vpop.f32.mrf.mxu0
        %v1013 = vadd.f32 %v974, %v1012
        %1014 = vdwg.mxu0
        %v1015 = vand.u32 %v436, 4294901760
        %v1016 = vsub.f32 %v436, %v1015
        %v1017 = vand.u32 %v1016, 4294901760
        %1018 = vmatpush.msra.mxu0 %v1017
        %v1019 = vand.u32 %v432, 4294901760
        %v1020 = vsub.f32 %v432, %v1019
        %v1021 = vand.u32 %v1020, 4294901760
        %1022 = vmatpush.msra.mxu0 %v1021
        %v1023 = vand.u32 %v428, 4294901760
        %v1024 = vsub.f32 %v428, %v1023
        %v1025 = vand.u32 %v1024, 4294901760
        %1026 = vmatpush.msra.mxu0 %v1025
        %v1027 = vand.u32 %v424, 4294901760
        %v1028 = vsub.f32 %v424, %v1027
        %v1029 = vand.u32 %v1028, 4294901760
        %1030 = vmatpush.msra.mxu0 %v1029
        %v1031 = vand.u32 %v420, 4294901760
        %v1032 = vsub.f32 %v420, %v1031
        %v1033 = vand.u32 %v1032, 4294901760
        %1034 = vmatpush.msra.mxu0 %v1033
        %v1035 = vand.u32 %v416, 4294901760
        %v1036 = vsub.f32 %v416, %v1035
        %v1037 = vand.u32 %v1036, 4294901760
        %1038 = vmatpush.msra.mxu0 %v1037
        %v1039 = vand.u32 %v412, 4294901760
        %v1040 = vsub.f32 %v412, %v1039
        %v1041 = vand.u32 %v1040, 4294901760
        %1042 = vmatpush.msra.mxu0 %v1041
        %v1043 = vand.u32 %v408, 4294901760
        %v1044 = vsub.f32 %v408, %v1043
        %v1045 = vand.u32 %v1044, 4294901760
        %1046 = vmatpush.msra.mxu0 %v1045
        %v1047 = vand.u32 %v404, 4294901760
        %v1048 = vsub.f32 %v404, %v1047
        %v1049 = vand.u32 %v1048, 4294901760
        %1050 = vmatpush.msra.mxu0 %v1049
        %v1051 = vand.u32 %v400, 4294901760
        %v1052 = vsub.f32 %v400, %v1051
        %v1053 = vand.u32 %v1052, 4294901760
        %1054 = vmatpush.msra.mxu0 %v1053
        %v1055 = vand.u32 %v396, 4294901760
        %v1056 = vsub.f32 %v396, %v1055
        %v1057 = vand.u32 %v1056, 4294901760
        %1058 = vmatpush.msra.mxu0 %v1057
        %v1059 = vand.u32 %v392, 4294901760
        %v1060 = vsub.f32 %v392, %v1059
        %v1061 = vand.u32 %v1060, 4294901760
        %1062 = vmatpush.msra.mxu0 %v1061
        %v1063 = vand.u32 %v388, 4294901760
        %v1064 = vsub.f32 %v388, %v1063
        %v1065 = vand.u32 %v1064, 4294901760
        %1066 = vmatpush.msra.mxu0 %v1065
        %v1067 = vand.u32 %v384, 4294901760
        %v1068 = vsub.f32 %v384, %v1067
        %v1069 = vand.u32 %v1068, 4294901760
        %1070 = vmatpush.msra.mxu0 %v1069
        %v1071 = vand.u32 %v380, 4294901760
        %v1072 = vsub.f32 %v380, %v1071
        %v1073 = vand.u32 %v1072, 4294901760
        %1074 = vmatpush.msra.mxu0 %v1073
        %v1075 = vand.u32 %v376, 4294901760
        %v1076 = vsub.f32 %v376, %v1075
        %v1077 = vand.u32 %v1076, 4294901760
        %1078 = vmatpush.msra.mxu0 %v1077
        %v1079 = vand.u32 %v374, 4294901760
        %1080 = vmatmul.f32.gmra.mxu0 %v1079
        %v1081 = vpop.f32.mrf.mxu0
        %v1082 = vadd.f32 %v1013, %v1081
        %1083 = vdwg.mxu0
        %v1084 = vand.u32 %v436, 4294901760
        %1085 = vmatpush.msra.mxu0 %v1084
        %v1086 = vand.u32 %v432, 4294901760
        %1087 = vmatpush.msra.mxu0 %v1086
        %v1088 = vand.u32 %v428, 4294901760
        %1089 = vmatpush.msra.mxu0 %v1088
        %v1090 = vand.u32 %v424, 4294901760
        %1091 = vmatpush.msra.mxu0 %v1090
        %v1092 = vand.u32 %v420, 4294901760
        %1093 = vmatpush.msra.mxu0 %v1092
        %v1094 = vand.u32 %v416, 4294901760
        %1095 = vmatpush.msra.mxu0 %v1094
        %v1096 = vand.u32 %v412, 4294901760
        %1097 = vmatpush.msra.mxu0 %v1096
        %v1098 = vand.u32 %v408, 4294901760
        %1099 = vmatpush.msra.mxu0 %v1098
        %v1100 = vand.u32 %v404, 4294901760
        %1101 = vmatpush.msra.mxu0 %v1100
        %v1102 = vand.u32 %v400, 4294901760
        %1103 = vmatpush.msra.mxu0 %v1102
        %v1104 = vand.u32 %v396, 4294901760
        %1105 = vmatpush.msra.mxu0 %v1104
        %v1106 = vand.u32 %v392, 4294901760
        %1107 = vmatpush.msra.mxu0 %v1106
        %v1108 = vand.u32 %v388, 4294901760
        %1109 = vmatpush.msra.mxu0 %v1108
        %v1110 = vand.u32 %v384, 4294901760
        %1111 = vmatpush.msra.mxu0 %v1110
        %v1112 = vand.u32 %v380, 4294901760
        %1113 = vmatpush.msra.mxu0 %v1112
        %v1114 = vand.u32 %v376, 4294901760
        %1115 = vmatpush.msra.mxu0 %v1114
        %v1116 = vand.u32 %v374, 4294901760
        %1117 = vmatmul.f32.gmra.mxu0 %v1116
        %v1118 = vpop.f32.mrf.mxu0
        %v1119 = vadd.f32 %v1082, %v1118
        %1120 = vdwg.mxu0
        %v1121 = vand.u32 %v437, 4294901760
        %1122 = vmatpush.msra.mxu0 %v1121
        %v1123 = vand.u32 %v433, 4294901760
        %1124 = vmatpush.msra.mxu0 %v1123
        %v1125 = vand.u32 %v429, 4294901760
        %1126 = vmatpush.msra.mxu0 %v1125
        %v1127 = vand.u32 %v425, 4294901760
        %1128 = vmatpush.msra.mxu0 %v1127
        %v1129 = vand.u32 %v421, 4294901760
        %1130 = vmatpush.msra.mxu0 %v1129
        %v1131 = vand.u32 %v417, 4294901760
        %1132 = vmatpush.msra.mxu0 %v1131
        %v1133 = vand.u32 %v413, 4294901760
        %1134 = vmatpush.msra.mxu0 %v1133
        %v1135 = vand.u32 %v409, 4294901760
        %1136 = vmatpush.msra.mxu0 %v1135
        %v1137 = vand.u32 %v405, 4294901760
        %1138 = vmatpush.msra.mxu0 %v1137
        %v1139 = vand.u32 %v401, 4294901760
        %1140 = vmatpush.msra.mxu0 %v1139
        %v1141 = vand.u32 %v397, 4294901760
        %1142 = vmatpush.msra.mxu0 %v1141
        %v1143 = vand.u32 %v393, 4294901760
        %1144 = vmatpush.msra.mxu0 %v1143
        %v1145 = vand.u32 %v389, 4294901760
        %1146 = vmatpush.msra.mxu0 %v1145
        %v1147 = vand.u32 %v385, 4294901760
        %1148 = vmatpush.msra.mxu0 %v1147
        %v1149 = vand.u32 %v381, 4294901760
        %1150 = vmatpush.msra.mxu0 %v1149
        %v1151 = vand.u32 %v377, 4294901760
        %1152 = vmatpush.msra.mxu0 %v1151
        %v1153 = vand.u32 %v374, 4294901760
        %v1154 = vsub.f32 %v374, %v1153
        %v1155 = vand.u32 %v1154, 4294901760
        %v1156 = vsub.f32 %v1154, %v1155
        %v1157 = vand.u32 %v1156, 4294901760
        %1158 = vmatmul.f32.gmra.mxu0 %v1157
        %v1159 = vpop.f32.mrf.mxu0
        %v1160 = vadd.f32 0.0, %v1159
        %1161 = vdwg.mxu0
        %v1162 = vand.u32 %v437, 4294901760
        %v1163 = vsub.f32 %v437, %v1162
        %v1164 = vand.u32 %v1163, 4294901760
        %v1165 = vsub.f32 %v1163, %v1164
        %v1166 = vand.u32 %v1165, 4294901760
        %1167 = vmatpush.msra.mxu0 %v1166
        %v1168 = vand.u32 %v433, 4294901760
        %v1169 = vsub.f32 %v433, %v1168
        %v1170 = vand.u32 %v1169, 4294901760
        %v1171 = vsub.f32 %v1169, %v1170
        %v1172 = vand.u32 %v1171, 4294901760
        %1173 = vmatpush.msra.mxu0 %v1172
        %v1174 = vand.u32 %v429, 4294901760
        %v1175 = vsub.f32 %v429, %v1174
        %v1176 = vand.u32 %v1175, 4294901760
        %v1177 = vsub.f32 %v1175, %v1176
        %v1178 = vand.u32 %v1177, 4294901760
        %1179 = vmatpush.msra.mxu0 %v1178
        %v1180 = vand.u32 %v425, 4294901760
        %v1181 = vsub.f32 %v425, %v1180
        %v1182 = vand.u32 %v1181, 4294901760
        %v1183 = vsub.f32 %v1181, %v1182
        %v1184 = vand.u32 %v1183, 4294901760
        %1185 = vmatpush.msra.mxu0 %v1184
        %v1186 = vand.u32 %v421, 4294901760
        %v1187 = vsub.f32 %v421, %v1186
        %v1188 = vand.u32 %v1187, 4294901760
        %v1189 = vsub.f32 %v1187, %v1188
        %v1190 = vand.u32 %v1189, 4294901760
        %1191 = vmatpush.msra.mxu0 %v1190
        %v1192 = vand.u32 %v417, 4294901760
        %v1193 = vsub.f32 %v417, %v1192
        %v1194 = vand.u32 %v1193, 4294901760
        %v1195 = vsub.f32 %v1193, %v1194
        %v1196 = vand.u32 %v1195, 4294901760
        %1197 = vmatpush.msra.mxu0 %v1196
        %v1198 = vand.u32 %v413, 4294901760
        %v1199 = vsub.f32 %v413, %v1198
        %v1200 = vand.u32 %v1199, 4294901760
        %v1201 = vsub.f32 %v1199, %v1200
        %v1202 = vand.u32 %v1201, 4294901760
        %1203 = vmatpush.msra.mxu0 %v1202
        %v1204 = vand.u32 %v409, 4294901760
        %v1205 = vsub.f32 %v409, %v1204
        %v1206 = vand.u32 %v1205, 4294901760
        %v1207 = vsub.f32 %v1205, %v1206
        %v1208 = vand.u32 %v1207, 4294901760
        %1209 = vmatpush.msra.mxu0 %v1208
        %v1210 = vand.u32 %v405, 4294901760
        %v1211 = vsub.f32 %v405, %v1210
        %v1212 = vand.u32 %v1211, 4294901760
        %v1213 = vsub.f32 %v1211, %v1212
        %v1214 = vand.u32 %v1213, 4294901760
        %1215 = vmatpush.msra.mxu0 %v1214
        %v1216 = vand.u32 %v401, 4294901760
        %v1217 = vsub.f32 %v401, %v1216
        %v1218 = vand.u32 %v1217, 4294901760
        %v1219 = vsub.f32 %v1217, %v1218
        %v1220 = vand.u32 %v1219, 4294901760
        %1221 = vmatpush.msra.mxu0 %v1220
        %v1222 = vand.u32 %v397, 4294901760
        %v1223 = vsub.f32 %v397, %v1222
        %v1224 = vand.u32 %v1223, 4294901760
        %v1225 = vsub.f32 %v1223, %v1224
        %v1226 = vand.u32 %v1225, 4294901760
        %1227 = vmatpush.msra.mxu0 %v1226
        %v1228 = vand.u32 %v393, 4294901760
        %v1229 = vsub.f32 %v393, %v1228
        %v1230 = vand.u32 %v1229, 4294901760
        %v1231 = vsub.f32 %v1229, %v1230
        %v1232 = vand.u32 %v1231, 4294901760
        %1233 = vmatpush.msra.mxu0 %v1232
        %v1234 = vand.u32 %v389, 4294901760
        %v1235 = vsub.f32 %v389, %v1234
        %v1236 = vand.u32 %v1235, 4294901760
        %v1237 = vsub.f32 %v1235, %v1236
        %v1238 = vand.u32 %v1237, 4294901760
        %1239 = vmatpush.msra.mxu0 %v1238
        %v1240 = vand.u32 %v385, 4294901760
        %v1241 = vsub.f32 %v385, %v1240
        %v1242 = vand.u32 %v1241, 4294901760
        %v1243 = vsub.f32 %v1241, %v1242
        %v1244 = vand.u32 %v1243, 4294901760
        %1245 = vmatpush.msra.mxu0 %v1244
        %v1246 = vand.u32 %v381, 4294901760
        %v1247 = vsub.f32 %v381, %v1246
        %v1248 = vand.u32 %v1247, 4294901760
        %v1249 = vsub.f32 %v1247, %v1248
        %v1250 = vand.u32 %v1249, 4294901760
        %1251 = vmatpush.msra.mxu0 %v1250
        %v1252 = vand.u32 %v377, 4294901760
        %v1253 = vsub.f32 %v377, %v1252
        %v1254 = vand.u32 %v1253, 4294901760
        %v1255 = vsub.f32 %v1253, %v1254
        %v1256 = vand.u32 %v1255, 4294901760
        %1257 = vmatpush.msra.mxu0 %v1256
        %v1258 = vand.u32 %v374, 4294901760
        %1259 = vmatmul.f32.gmra.mxu0 %v1258
        %v1260 = vpop.f32.mrf.mxu0
        %v1261 = vadd.f32 %v1160, %v1260
        %1262 = vdwg.mxu0
        %v1263 = vand.u32 %v437, 4294901760
        %v1264 = vsub.f32 %v437, %v1263
        %1265 = vmatpush.msra.mxu0 %v1264
        %v1266 = vand.u32 %v433, 4294901760
        %v1267 = vsub.f32 %v433, %v1266
        %1268 = vmatpush.msra.mxu0 %v1267
        %v1269 = vand.u32 %v429, 4294901760
        %v1270 = vsub.f32 %v429, %v1269
        %1271 = vmatpush.msra.mxu0 %v1270
        %v1272 = vand.u32 %v425, 4294901760
        %v1273 = vsub.f32 %v425, %v1272
        %1274 = vmatpush.msra.mxu0 %v1273
        %v1275 = vand.u32 %v421, 4294901760
        %v1276 = vsub.f32 %v421, %v1275
        %1277 = vmatpush.msra.mxu0 %v1276
        %v1278 = vand.u32 %v417, 4294901760
        %v1279 = vsub.f32 %v417, %v1278
        %1280 = vmatpush.msra.mxu0 %v1279
        %v1281 = vand.u32 %v413, 4294901760
        %v1282 = vsub.f32 %v413, %v1281
        %1283 = vmatpush.msra.mxu0 %v1282
        %v1284 = vand.u32 %v409, 4294901760
        %v1285 = vsub.f32 %v409, %v1284
        %1286 = vmatpush.msra.mxu0 %v1285
        %v1287 = vand.u32 %v405, 4294901760
        %v1288 = vsub.f32 %v405, %v1287
        %1289 = vmatpush.msra.mxu0 %v1288
        %v1290 = vand.u32 %v401, 4294901760
        %v1291 = vsub.f32 %v401, %v1290
        %1292 = vmatpush.msra.mxu0 %v1291
        %v1293 = vand.u32 %v397, 4294901760
        %v1294 = vsub.f32 %v397, %v1293
        %1295 = vmatpush.msra.mxu0 %v1294
        %v1296 = vand.u32 %v393, 4294901760
        %v1297 = vsub.f32 %v393, %v1296
        %1298 = vmatpush.msra.mxu0 %v1297
        %v1299 = vand.u32 %v389, 4294901760
        %v1300 = vsub.f32 %v389, %v1299
        %1301 = vmatpush.msra.mxu0 %v1300
        %v1302 = vand.u32 %v385, 4294901760
        %v1303 = vsub.f32 %v385, %v1302
        %1304 = vmatpush.msra.mxu0 %v1303
        %v1305 = vand.u32 %v381, 4294901760
        %v1306 = vsub.f32 %v381, %v1305
        %1307 = vmatpush.msra.mxu0 %v1306
        %v1308 = vand.u32 %v377, 4294901760
        %v1309 = vsub.f32 %v377, %v1308
        %1310 = vmatpush.msra.mxu0 %v1309
        %v1311 = vand.u32 %v374, 4294901760
        %v1312 = vsub.f32 %v374, %v1311
        %1313 = vmatmul.f32.gmra.mxu0 %v1312
        %v1314 = vpop.f32.mrf.mxu0
        %v1315 = vadd.f32 %v1261, %v1314
        %1316 = vdwg.mxu0
        %v1317 = vand.u32 %v437, 4294901760
        %1318 = vmatpush.msra.mxu0 %v1317
        %v1319 = vand.u32 %v433, 4294901760
        %1320 = vmatpush.msra.mxu0 %v1319
        %v1321 = vand.u32 %v429, 4294901760
        %1322 = vmatpush.msra.mxu0 %v1321
        %v1323 = vand.u32 %v425, 4294901760
        %1324 = vmatpush.msra.mxu0 %v1323
        %v1325 = vand.u32 %v421, 4294901760
        %1326 = vmatpush.msra.mxu0 %v1325
        %v1327 = vand.u32 %v417, 4294901760
        %1328 = vmatpush.msra.mxu0 %v1327
        %v1329 = vand.u32 %v413, 4294901760
        %1330 = vmatpush.msra.mxu0 %v1329
        %v1331 = vand.u32 %v409, 4294901760
        %1332 = vmatpush.msra.mxu0 %v1331
        %v1333 = vand.u32 %v405, 4294901760
        %1334 = vmatpush.msra.mxu0 %v1333
        %v1335 = vand.u32 %v401, 4294901760
        %1336 = vmatpush.msra.mxu0 %v1335
        %v1337 = vand.u32 %v397, 4294901760
        %1338 = vmatpush.msra.mxu0 %v1337
        %v1339 = vand.u32 %v393, 4294901760
        %1340 = vmatpush.msra.mxu0 %v1339
        %v1341 = vand.u32 %v389, 4294901760
        %1342 = vmatpush.msra.mxu0 %v1341
        %v1343 = vand.u32 %v385, 4294901760
        %1344 = vmatpush.msra.mxu0 %v1343
        %v1345 = vand.u32 %v381, 4294901760
        %1346 = vmatpush.msra.mxu0 %v1345
        %v1347 = vand.u32 %v377, 4294901760
        %1348 = vmatpush.msra.mxu0 %v1347
        %v1349 = vand.u32 %v374, 4294901760
        %v1350 = vsub.f32 %v374, %v1349
        %v1351 = vand.u32 %v1350, 4294901760
        %1352 = vmatmul.f32.gmra.mxu0 %v1351
        %v1353 = vpop.f32.mrf.mxu0
        %v1354 = vadd.f32 %v1315, %v1353
        %1355 = vdwg.mxu0
        %v1356 = vand.u32 %v437, 4294901760
        %v1357 = vsub.f32 %v437, %v1356
        %v1358 = vand.u32 %v1357, 4294901760
        %1359 = vmatpush.msra.mxu0 %v1358
        %v1360 = vand.u32 %v433, 4294901760
        %v1361 = vsub.f32 %v433, %v1360
        %v1362 = vand.u32 %v1361, 4294901760
        %1363 = vmatpush.msra.mxu0 %v1362
        %v1364 = vand.u32 %v429, 4294901760
        %v1365 = vsub.f32 %v429, %v1364
        %v1366 = vand.u32 %v1365, 4294901760
        %1367 = vmatpush.msra.mxu0 %v1366
        %v1368 = vand.u32 %v425, 4294901760
        %v1369 = vsub.f32 %v425, %v1368
        %v1370 = vand.u32 %v1369, 4294901760
        %1371 = vmatpush.msra.mxu0 %v1370
        %v1372 = vand.u32 %v421, 4294901760
        %v1373 = vsub.f32 %v421, %v1372
        %v1374 = vand.u32 %v1373, 4294901760
        %1375 = vmatpush.msra.mxu0 %v1374
        %v1376 = vand.u32 %v417, 4294901760
        %v1377 = vsub.f32 %v417, %v1376
        %v1378 = vand.u32 %v1377, 4294901760
        %1379 = vmatpush.msra.mxu0 %v1378
        %v1380 = vand.u32 %v413, 4294901760
        %v1381 = vsub.f32 %v413, %v1380
        %v1382 = vand.u32 %v1381, 4294901760
        %1383 = vmatpush.msra.mxu0 %v1382
        %v1384 = vand.u32 %v409, 4294901760
        %v1385 = vsub.f32 %v409, %v1384
        %v1386 = vand.u32 %v1385, 4294901760
        %1387 = vmatpush.msra.mxu0 %v1386
        %v1388 = vand.u32 %v405, 4294901760
        %v1389 = vsub.f32 %v405, %v1388
        %v1390 = vand.u32 %v1389, 4294901760
        %1391 = vmatpush.msra.mxu0 %v1390
        %v1392 = vand.u32 %v401, 4294901760
        %v1393 = vsub.f32 %v401, %v1392
        %v1394 = vand.u32 %v1393, 4294901760
        %1395 = vmatpush.msra.mxu0 %v1394
        %v1396 = vand.u32 %v397, 4294901760
        %v1397 = vsub.f32 %v397, %v1396
        %v1398 = vand.u32 %v1397, 4294901760
        %1399 = vmatpush.msra.mxu0 %v1398
        %v1400 = vand.u32 %v393, 4294901760
        %v1401 = vsub.f32 %v393, %v1400
        %v1402 = vand.u32 %v1401, 4294901760
        %1403 = vmatpush.msra.mxu0 %v1402
        %v1404 = vand.u32 %v389, 4294901760
        %v1405 = vsub.f32 %v389, %v1404
        %v1406 = vand.u32 %v1405, 4294901760
        %1407 = vmatpush.msra.mxu0 %v1406
        %v1408 = vand.u32 %v385, 4294901760
        %v1409 = vsub.f32 %v385, %v1408
        %v1410 = vand.u32 %v1409, 4294901760
        %1411 = vmatpush.msra.mxu0 %v1410
        %v1412 = vand.u32 %v381, 4294901760
        %v1413 = vsub.f32 %v381, %v1412
        %v1414 = vand.u32 %v1413, 4294901760
        %1415 = vmatpush.msra.mxu0 %v1414
        %v1416 = vand.u32 %v377, 4294901760
        %v1417 = vsub.f32 %v377, %v1416
        %v1418 = vand.u32 %v1417, 4294901760
        %1419 = vmatpush.msra.mxu0 %v1418
        %v1420 = vand.u32 %v374, 4294901760
        %1421 = vmatmul.f32.gmra.mxu0 %v1420
        %v1422 = vpop.f32.mrf.mxu0
        %v1423 = vadd.f32 %v1354, %v1422
        %1424 = vdwg.mxu0
        %v1425 = vand.u32 %v437, 4294901760
        %1426 = vmatpush.msra.mxu0 %v1425
        %v1427 = vand.u32 %v433, 4294901760
        %1428 = vmatpush.msra.mxu0 %v1427
        %v1429 = vand.u32 %v429, 4294901760
        %1430 = vmatpush.msra.mxu0 %v1429
        %v1431 = vand.u32 %v425, 4294901760
        %1432 = vmatpush.msra.mxu0 %v1431
        %v1433 = vand.u32 %v421, 4294901760
        %1434 = vmatpush.msra.mxu0 %v1433
        %v1435 = vand.u32 %v417, 4294901760
        %1436 = vmatpush.msra.mxu0 %v1435
        %v1437 = vand.u32 %v413, 4294901760
        %1438 = vmatpush.msra.mxu0 %v1437
        %v1439 = vand.u32 %v409, 4294901760
        %1440 = vmatpush.msra.mxu0 %v1439
        %v1441 = vand.u32 %v405, 4294901760
        %1442 = vmatpush.msra.mxu0 %v1441
        %v1443 = vand.u32 %v401, 4294901760
        %1444 = vmatpush.msra.mxu0 %v1443
        %v1445 = vand.u32 %v397, 4294901760
        %1446 = vmatpush.msra.mxu0 %v1445
        %v1447 = vand.u32 %v393, 4294901760
        %1448 = vmatpush.msra.mxu0 %v1447
        %v1449 = vand.u32 %v389, 4294901760
        %1450 = vmatpush.msra.mxu0 %v1449
        %v1451 = vand.u32 %v385, 4294901760
        %1452 = vmatpush.msra.mxu0 %v1451
        %v1453 = vand.u32 %v381, 4294901760
        %1454 = vmatpush.msra.mxu0 %v1453
        %v1455 = vand.u32 %v377, 4294901760
        %1456 = vmatpush.msra.mxu0 %v1455
        %v1457 = vand.u32 %v374, 4294901760
        %1458 = vmatmul.f32.gmra.mxu0 %v1457
        %v1459 = vpop.f32.mrf.mxu0
        %v1460 = vadd.f32 %v1423, %v1459
        %1461 = vdwg.mxu0
        %v1462 = vand.u32 %v438, 4294901760
        %1463 = vmatpush.msra.mxu0 %v1462
        %v1464 = vand.u32 %v434, 4294901760
        %1465 = vmatpush.msra.mxu0 %v1464
        %v1466 = vand.u32 %v430, 4294901760
        %1467 = vmatpush.msra.mxu0 %v1466
        %v1468 = vand.u32 %v426, 4294901760
        %1469 = vmatpush.msra.mxu0 %v1468
        %v1470 = vand.u32 %v422, 4294901760
        %1471 = vmatpush.msra.mxu0 %v1470
        %v1472 = vand.u32 %v418, 4294901760
        %1473 = vmatpush.msra.mxu0 %v1472
        %v1474 = vand.u32 %v414, 4294901760
        %1475 = vmatpush.msra.mxu0 %v1474
        %v1476 = vand.u32 %v410, 4294901760
        %1477 = vmatpush.msra.mxu0 %v1476
        %v1478 = vand.u32 %v406, 4294901760
        %1479 = vmatpush.msra.mxu0 %v1478
        %v1480 = vand.u32 %v402, 4294901760
        %1481 = vmatpush.msra.mxu0 %v1480
        %v1482 = vand.u32 %v398, 4294901760
        %1483 = vmatpush.msra.mxu0 %v1482
        %v1484 = vand.u32 %v394, 4294901760
        %1485 = vmatpush.msra.mxu0 %v1484
        %v1486 = vand.u32 %v390, 4294901760
        %1487 = vmatpush.msra.mxu0 %v1486
        %v1488 = vand.u32 %v386, 4294901760
        %1489 = vmatpush.msra.mxu0 %v1488
        %v1490 = vand.u32 %v382, 4294901760
        %1491 = vmatpush.msra.mxu0 %v1490
        %v1492 = vand.u32 %v378, 4294901760
        %1493 = vmatpush.msra.mxu0 %v1492
        %v1494 = vand.u32 %v374, 4294901760
        %v1495 = vsub.f32 %v374, %v1494
        %v1496 = vand.u32 %v1495, 4294901760
        %v1497 = vsub.f32 %v1495, %v1496
        %v1498 = vand.u32 %v1497, 4294901760
        %1499 = vmatmul.f32.gmra.mxu0 %v1498
        %v1500 = vpop.f32.mrf.mxu0
        %v1501 = vadd.f32 0.0, %v1500
        %1502 = vdwg.mxu0
        %v1503 = vand.u32 %v438, 4294901760
        %v1504 = vsub.f32 %v438, %v1503
        %v1505 = vand.u32 %v1504, 4294901760
        %v1506 = vsub.f32 %v1504, %v1505
        %v1507 = vand.u32 %v1506, 4294901760
        %1508 = vmatpush.msra.mxu0 %v1507
        %v1509 = vand.u32 %v434, 4294901760
        %v1510 = vsub.f32 %v434, %v1509
        %v1511 = vand.u32 %v1510, 4294901760
        %v1512 = vsub.f32 %v1510, %v1511
        %v1513 = vand.u32 %v1512, 4294901760
        %1514 = vmatpush.msra.mxu0 %v1513
        %v1515 = vand.u32 %v430, 4294901760
        %v1516 = vsub.f32 %v430, %v1515
        %v1517 = vand.u32 %v1516, 4294901760
        %v1518 = vsub.f32 %v1516, %v1517
        %v1519 = vand.u32 %v1518, 4294901760
        %1520 = vmatpush.msra.mxu0 %v1519
        %v1521 = vand.u32 %v426, 4294901760
        %v1522 = vsub.f32 %v426, %v1521
        %v1523 = vand.u32 %v1522, 4294901760
        %v1524 = vsub.f32 %v1522, %v1523
        %v1525 = vand.u32 %v1524, 4294901760
        %1526 = vmatpush.msra.mxu0 %v1525
        %v1527 = vand.u32 %v422, 4294901760
        %v1528 = vsub.f32 %v422, %v1527
        %v1529 = vand.u32 %v1528, 4294901760
        %v1530 = vsub.f32 %v1528, %v1529
        %v1531 = vand.u32 %v1530, 4294901760
        %1532 = vmatpush.msra.mxu0 %v1531
        %v1533 = vand.u32 %v418, 4294901760
        %v1534 = vsub.f32 %v418, %v1533
        %v1535 = vand.u32 %v1534, 4294901760
        %v1536 = vsub.f32 %v1534, %v1535
        %v1537 = vand.u32 %v1536, 4294901760
        %1538 = vmatpush.msra.mxu0 %v1537
        %v1539 = vand.u32 %v414, 4294901760
        %v1540 = vsub.f32 %v414, %v1539
        %v1541 = vand.u32 %v1540, 4294901760
        %v1542 = vsub.f32 %v1540, %v1541
        %v1543 = vand.u32 %v1542, 4294901760
        %1544 = vmatpush.msra.mxu0 %v1543
        %v1545 = vand.u32 %v410, 4294901760
        %v1546 = vsub.f32 %v410, %v1545
        %v1547 = vand.u32 %v1546, 4294901760
        %v1548 = vsub.f32 %v1546, %v1547
        %v1549 = vand.u32 %v1548, 4294901760
        %1550 = vmatpush.msra.mxu0 %v1549
        %v1551 = vand.u32 %v406, 4294901760
        %v1552 = vsub.f32 %v406, %v1551
        %v1553 = vand.u32 %v1552, 4294901760
        %v1554 = vsub.f32 %v1552, %v1553
        %v1555 = vand.u32 %v1554, 4294901760
        %1556 = vmatpush.msra.mxu0 %v1555
        %v1557 = vand.u32 %v402, 4294901760
        %v1558 = vsub.f32 %v402, %v1557
        %v1559 = vand.u32 %v1558, 4294901760
        %v1560 = vsub.f32 %v1558, %v1559
        %v1561 = vand.u32 %v1560, 4294901760
        %1562 = vmatpush.msra.mxu0 %v1561
        %v1563 = vand.u32 %v398, 4294901760
        %v1564 = vsub.f32 %v398, %v1563
        %v1565 = vand.u32 %v1564, 4294901760
        %v1566 = vsub.f32 %v1564, %v1565
        %v1567 = vand.u32 %v1566, 4294901760
        %1568 = vmatpush.msra.mxu0 %v1567
        %v1569 = vand.u32 %v394, 4294901760
        %v1570 = vsub.f32 %v394, %v1569
        %v1571 = vand.u32 %v1570, 4294901760
        %v1572 = vsub.f32 %v1570, %v1571
        %v1573 = vand.u32 %v1572, 4294901760
        %1574 = vmatpush.msra.mxu0 %v1573
        %v1575 = vand.u32 %v390, 4294901760
        %v1576 = vsub.f32 %v390, %v1575
        %v1577 = vand.u32 %v1576, 4294901760
        %v1578 = vsub.f32 %v1576, %v1577
        %v1579 = vand.u32 %v1578, 4294901760
        %1580 = vmatpush.msra.mxu0 %v1579
        %v1581 = vand.u32 %v386, 4294901760
        %v1582 = vsub.f32 %v386, %v1581
        %v1583 = vand.u32 %v1582, 4294901760
        %v1584 = vsub.f32 %v1582, %v1583
        %v1585 = vand.u32 %v1584, 4294901760
        %1586 = vmatpush.msra.mxu0 %v1585
        %v1587 = vand.u32 %v382, 4294901760
        %v1588 = vsub.f32 %v382, %v1587
        %v1589 = vand.u32 %v1588, 4294901760
        %v1590 = vsub.f32 %v1588, %v1589
        %v1591 = vand.u32 %v1590, 4294901760
        %1592 = vmatpush.msra.mxu0 %v1591
        %v1593 = vand.u32 %v378, 4294901760
        %v1594 = vsub.f32 %v378, %v1593
        %v1595 = vand.u32 %v1594, 4294901760
        %v1596 = vsub.f32 %v1594, %v1595
        %v1597 = vand.u32 %v1596, 4294901760
        %1598 = vmatpush.msra.mxu0 %v1597
        %v1599 = vand.u32 %v374, 4294901760
        %1600 = vmatmul.f32.gmra.mxu0 %v1599
        %v1601 = vpop.f32.mrf.mxu0
        %v1602 = vadd.f32 %v1501, %v1601
        %1603 = vdwg.mxu0
        %v1604 = vand.u32 %v438, 4294901760
        %v1605 = vsub.f32 %v438, %v1604
        %1606 = vmatpush.msra.mxu0 %v1605
        %v1607 = vand.u32 %v434, 4294901760
        %v1608 = vsub.f32 %v434, %v1607
        %1609 = vmatpush.msra.mxu0 %v1608
        %v1610 = vand.u32 %v430, 4294901760
        %v1611 = vsub.f32 %v430, %v1610
        %1612 = vmatpush.msra.mxu0 %v1611
        %v1613 = vand.u32 %v426, 4294901760
        %v1614 = vsub.f32 %v426, %v1613
        %1615 = vmatpush.msra.mxu0 %v1614
        %v1616 = vand.u32 %v422, 4294901760
        %v1617 = vsub.f32 %v422, %v1616
        %1618 = vmatpush.msra.mxu0 %v1617
        %v1619 = vand.u32 %v418, 4294901760
        %v1620 = vsub.f32 %v418, %v1619
        %1621 = vmatpush.msra.mxu0 %v1620
        %v1622 = vand.u32 %v414, 4294901760
        %v1623 = vsub.f32 %v414, %v1622
        %1624 = vmatpush.msra.mxu0 %v1623
        %v1625 = vand.u32 %v410, 4294901760
        %v1626 = vsub.f32 %v410, %v1625
        %1627 = vmatpush.msra.mxu0 %v1626
        %v1628 = vand.u32 %v406, 4294901760
        %v1629 = vsub.f32 %v406, %v1628
        %1630 = vmatpush.msra.mxu0 %v1629
        %v1631 = vand.u32 %v402, 4294901760
        %v1632 = vsub.f32 %v402, %v1631
        %1633 = vmatpush.msra.mxu0 %v1632
        %v1634 = vand.u32 %v398, 4294901760
        %v1635 = vsub.f32 %v398, %v1634
        %1636 = vmatpush.msra.mxu0 %v1635
        %v1637 = vand.u32 %v394, 4294901760
        %v1638 = vsub.f32 %v394, %v1637
        %1639 = vmatpush.msra.mxu0 %v1638
        %v1640 = vand.u32 %v390, 4294901760
        %v1641 = vsub.f32 %v390, %v1640
        %1642 = vmatpush.msra.mxu0 %v1641
        %v1643 = vand.u32 %v386, 4294901760
        %v1644 = vsub.f32 %v386, %v1643
        %1645 = vmatpush.msra.mxu0 %v1644
        %v1646 = vand.u32 %v382, 4294901760
        %v1647 = vsub.f32 %v382, %v1646
        %1648 = vmatpush.msra.mxu0 %v1647
        %v1649 = vand.u32 %v378, 4294901760
        %v1650 = vsub.f32 %v378, %v1649
        %1651 = vmatpush.msra.mxu0 %v1650
        %v1652 = vand.u32 %v374, 4294901760
        %v1653 = vsub.f32 %v374, %v1652
        %1654 = vmatmul.f32.gmra.mxu0 %v1653
        %v1655 = vpop.f32.mrf.mxu0
        %v1656 = vadd.f32 %v1602, %v1655
        %1657 = vdwg.mxu0
        %v1658 = vand.u32 %v438, 4294901760
        %1659 = vmatpush.msra.mxu0 %v1658
        %v1660 = vand.u32 %v434, 4294901760
        %1661 = vmatpush.msra.mxu0 %v1660
        %v1662 = vand.u32 %v430, 4294901760
        %1663 = vmatpush.msra.mxu0 %v1662
        %v1664 = vand.u32 %v426, 4294901760
        %1665 = vmatpush.msra.mxu0 %v1664
        %v1666 = vand.u32 %v422, 4294901760
        %1667 = vmatpush.msra.mxu0 %v1666
        %v1668 = vand.u32 %v418, 4294901760
        %1669 = vmatpush.msra.mxu0 %v1668
        %v1670 = vand.u32 %v414, 4294901760
        %1671 = vmatpush.msra.mxu0 %v1670
        %v1672 = vand.u32 %v410, 4294901760
        %1673 = vmatpush.msra.mxu0 %v1672
        %v1674 = vand.u32 %v406, 4294901760
        %1675 = vmatpush.msra.mxu0 %v1674
        %v1676 = vand.u32 %v402, 4294901760
        %1677 = vmatpush.msra.mxu0 %v1676
        %v1678 = vand.u32 %v398, 4294901760
        %1679 = vmatpush.msra.mxu0 %v1678
        %v1680 = vand.u32 %v394, 4294901760
        %1681 = vmatpush.msra.mxu0 %v1680
        %v1682 = vand.u32 %v390, 4294901760
        %1683 = vmatpush.msra.mxu0 %v1682
        %v1684 = vand.u32 %v386, 4294901760
        %1685 = vmatpush.msra.mxu0 %v1684
        %v1686 = vand.u32 %v382, 4294901760
        %1687 = vmatpush.msra.mxu0 %v1686
        %v1688 = vand.u32 %v378, 4294901760
        %1689 = vmatpush.msra.mxu0 %v1688
        %v1690 = vand.u32 %v374, 4294901760
        %v1691 = vsub.f32 %v374, %v1690
        %v1692 = vand.u32 %v1691, 4294901760
        %1693 = vmatmul.f32.gmra.mxu0 %v1692
        %v1694 = vpop.f32.mrf.mxu0
        %v1695 = vadd.f32 %v1656, %v1694
        %1696 = vdwg.mxu0
        %v1697 = vand.u32 %v438, 4294901760
        %v1698 = vsub.f32 %v438, %v1697
        %v1699 = vand.u32 %v1698, 4294901760
        %1700 = vmatpush.msra.mxu0 %v1699
        %v1701 = vand.u32 %v434, 4294901760
        %v1702 = vsub.f32 %v434, %v1701
        %v1703 = vand.u32 %v1702, 4294901760
        %1704 = vmatpush.msra.mxu0 %v1703
        %v1705 = vand.u32 %v430, 4294901760
        %v1706 = vsub.f32 %v430, %v1705
        %v1707 = vand.u32 %v1706, 4294901760
        %1708 = vmatpush.msra.mxu0 %v1707
        %v1709 = vand.u32 %v426, 4294901760
        %v1710 = vsub.f32 %v426, %v1709
        %v1711 = vand.u32 %v1710, 4294901760
        %1712 = vmatpush.msra.mxu0 %v1711
        %v1713 = vand.u32 %v422, 4294901760
        %v1714 = vsub.f32 %v422, %v1713
        %v1715 = vand.u32 %v1714, 4294901760
        %1716 = vmatpush.msra.mxu0 %v1715
        %v1717 = vand.u32 %v418, 4294901760
        %v1718 = vsub.f32 %v418, %v1717
        %v1719 = vand.u32 %v1718, 4294901760
        %1720 = vmatpush.msra.mxu0 %v1719
        %v1721 = vand.u32 %v414, 4294901760
        %v1722 = vsub.f32 %v414, %v1721
        %v1723 = vand.u32 %v1722, 4294901760
        %1724 = vmatpush.msra.mxu0 %v1723
        %v1725 = vand.u32 %v410, 4294901760
        %v1726 = vsub.f32 %v410, %v1725
        %v1727 = vand.u32 %v1726, 4294901760
        %1728 = vmatpush.msra.mxu0 %v1727
        %v1729 = vand.u32 %v406, 4294901760
        %v1730 = vsub.f32 %v406, %v1729
        %v1731 = vand.u32 %v1730, 4294901760
        %1732 = vmatpush.msra.mxu0 %v1731
        %v1733 = vand.u32 %v402, 4294901760
        %v1734 = vsub.f32 %v402, %v1733
        %v1735 = vand.u32 %v1734, 4294901760
        %1736 = vmatpush.msra.mxu0 %v1735
        %v1737 = vand.u32 %v398, 4294901760
        %v1738 = vsub.f32 %v398, %v1737
        %v1739 = vand.u32 %v1738, 4294901760
        %1740 = vmatpush.msra.mxu0 %v1739
        %v1741 = vand.u32 %v394, 4294901760
        %v1742 = vsub.f32 %v394, %v1741
        %v1743 = vand.u32 %v1742, 4294901760
        %1744 = vmatpush.msra.mxu0 %v1743
        %v1745 = vand.u32 %v390, 4294901760
        %v1746 = vsub.f32 %v390, %v1745
        %v1747 = vand.u32 %v1746, 4294901760
        %1748 = vmatpush.msra.mxu0 %v1747
        %v1749 = vand.u32 %v386, 4294901760
        %v1750 = vsub.f32 %v386, %v1749
        %v1751 = vand.u32 %v1750, 4294901760
        %1752 = vmatpush.msra.mxu0 %v1751
        %v1753 = vand.u32 %v382, 4294901760
        %v1754 = vsub.f32 %v382, %v1753
        %v1755 = vand.u32 %v1754, 4294901760
        %1756 = vmatpush.msra.mxu0 %v1755
        %v1757 = vand.u32 %v378, 4294901760
        %v1758 = vsub.f32 %v378, %v1757
        %v1759 = vand.u32 %v1758, 4294901760
        %1760 = vmatpush.msra.mxu0 %v1759
        %v1761 = vand.u32 %v374, 4294901760
        %1762 = vmatmul.f32.gmra.mxu0 %v1761
        %v1763 = vpop.f32.mrf.mxu0
        %v1764 = vadd.f32 %v1695, %v1763
        %1765 = vdwg.mxu0
        %v1766 = vand.u32 %v438, 4294901760
        %1767 = vmatpush.msra.mxu0 %v1766
        %v1768 = vand.u32 %v434, 4294901760
        %1769 = vmatpush.msra.mxu0 %v1768
        %v1770 = vand.u32 %v430, 4294901760
        %1771 = vmatpush.msra.mxu0 %v1770
        %v1772 = vand.u32 %v426, 4294901760
        %1773 = vmatpush.msra.mxu0 %v1772
        %v1774 = vand.u32 %v422, 4294901760
        %1775 = vmatpush.msra.mxu0 %v1774
        %v1776 = vand.u32 %v418, 4294901760
        %1777 = vmatpush.msra.mxu0 %v1776
        %v1778 = vand.u32 %v414, 4294901760
        %1779 = vmatpush.msra.mxu0 %v1778
        %v1780 = vand.u32 %v410, 4294901760
        %1781 = vmatpush.msra.mxu0 %v1780
        %v1782 = vand.u32 %v406, 4294901760
        %1783 = vmatpush.msra.mxu0 %v1782
        %v1784 = vand.u32 %v402, 4294901760
        %1785 = vmatpush.msra.mxu0 %v1784
        %v1786 = vand.u32 %v398, 4294901760
        %1787 = vmatpush.msra.mxu0 %v1786
        %v1788 = vand.u32 %v394, 4294901760
        %1789 = vmatpush.msra.mxu0 %v1788
        %v1790 = vand.u32 %v390, 4294901760
        %1791 = vmatpush.msra.mxu0 %v1790
        %v1792 = vand.u32 %v386, 4294901760
        %1793 = vmatpush.msra.mxu0 %v1792
        %v1794 = vand.u32 %v382, 4294901760
        %1795 = vmatpush.msra.mxu0 %v1794
        %v1796 = vand.u32 %v378, 4294901760
        %1797 = vmatpush.msra.mxu0 %v1796
        %v1798 = vand.u32 %v374, 4294901760
        %1799 = vmatmul.f32.gmra.mxu0 %v1798
        %v1800 = vpop.f32.mrf.mxu0
        %v1801 = vadd.f32 %v1764, %v1800
        %1802 = vdwg.mxu0
        %v1803 = vld [vmem:[%s4] sm:$0x3]
        %1805 = vset.pattern.permute.xlu0 0
        %1806 = vperm.xlu0 %1805, %v1803
        %v1807 = vpop.permute.xlu0 %1806
        %v1809 = vunpack.c.l.s4 839922192
        %v1810 = vunpack.c.0.s8 %v1809
        %v1811 = vperm.slane %v1807, %v1810
        %v1813 = vadd.f32 %v370, %v1811
        %v1814 = vadd.f32 %v371, %v1811
        %v1819 = vrot.slane %v1119, 4
        %v1820 = vrot.slane %v1801, 4
        %vm1821 = vcmask 1043456
        %v1822 = vsel %vm1821, %v778, %v1819
        %v1823 = vsel %vm1821, %v1460, %v1820
        %v1826 = vadd.f32 %v1813, %v1822
        %v1827 = vadd.f32 %v1814, %v1823
        %1830 = vst [vmem:[#allocation1] ss:$2 sm:$0xff] %v1826
        %s1831 = scalar_lea.vmem [#allocation1], 16
        %1832 = vst [vmem:[%s1831] ss:$2 sm:$0xff] %v1827
        %v1833 = vld.sshfl [vmem:[#allocation1] sm:$0xff pattern:$0x75316420]
        %v1834 = vld.sshfl [vmem:[#allocation1 + $0x8] sm:$0xff pattern:$0x75316420]
        %v1835 = vld.sshfl [vmem:[#allocation1 + $0x10] sm:$0xff pattern:$0x75316420]
        %v1836 = vld.sshfl [vmem:[#allocation1 + $0x18] sm:$0xff pattern:$0x75316420]
        %1841 = vrot.lane.b32.xlu0 %v1833, 73
        %v1842 = vpop.permute.xlu0 %1841
        %1843 = vrot.lane.b32.xlu0 %v1834, 73
        %v1844 = vpop.permute.xlu0 %1843
        %1845 = vrot.lane.b32.xlu0 %v1835, 73
        %v1846 = vpop.permute.xlu0 %1845
        %1847 = vrot.lane.b32.xlu0 %v1836, 73
        %v1848 = vpop.permute.xlu0 %1847
        %v1849 = vlaneseq
        %v1850 = vand.u32 %v1849, 127
        %vm1851 = vcmp.lt.s32.totalorder %v1850, 73
        %v1852 = vsel %vm1851, %v1846, %v1848
        %v1853 = vsel %vm1851, %v1844, %v1846
        %v1854 = vsel %vm1851, %v1842, %v1844
        %v1855 = vsel %vm1851, %v1848, %v1842
        %v1856 = vld [vmem:[#allocation7] ss:$8 sm:$0xf]
        %v1858 = vperm.slane %v1856, 0
        %v1859 = vperm.slane %v1856, 1
        %v1860 = vperm.slane %v1856, 2
        %v1861 = vperm.slane %v1856, 3
        %v1866 = vmul.f32 %v1855, %v1858
        %v1867 = vmul.f32 %v1854, %v1859
        %v1868 = vmul.f32 %v1853, %v1860
        %v1869 = vmul.f32 %v1852, %v1861
        %1870 = vst [vmem:[#allocation1] ss:$2 sm:$0xff] %v1826
        %s1871 = scalar_lea.vmem [#allocation1], 16
        %1872 = vst [vmem:[%s1871] ss:$2 sm:$0xff] %v1827
        %v1873 = vld.sshfl [vmem:[#allocation1] sm:$0xff pattern:$0x75316420]
        %v1874 = vld.sshfl [vmem:[#allocation1 + $0x8] sm:$0xff pattern:$0x75316420]
        %v1875 = vld.sshfl [vmem:[#allocation1 + $0x10] sm:$0xff pattern:$0x75316420]
        %v1876 = vld.sshfl [vmem:[#allocation1 + $0x18] sm:$0xff pattern:$0x75316420]
        %1881 = vrot.lane.b32.xlu0 %v1873, 72
        %v1882 = vpop.permute.xlu0 %1881
        %1883 = vrot.lane.b32.xlu0 %v1874, 72
        %v1884 = vpop.permute.xlu0 %1883
        %1885 = vrot.lane.b32.xlu0 %v1875, 72
        %v1886 = vpop.permute.xlu0 %1885
        %1887 = vrot.lane.b32.xlu0 %v1876, 72
        %v1888 = vpop.permute.xlu0 %1887
        %vm1889 = vcmp.lt.s32.totalorder %v1850, 72
        %v1890 = vsel %vm1889, %v1886, %v1888
        %v1891 = vsel %vm1889, %v1884, %v1886
        %v1892 = vsel %vm1889, %v1882, %v1884
        %v1893 = vsel %vm1889, %v1888, %v1882
        %s1894 = scalar_lea.vmem [#allocation7], 1
        %v1895 = vld [vmem:[%s1894] ss:$8 sm:$0xf]
        %v1897 = vperm.slane %v1895, 0
        %v1898 = vperm.slane %v1895, 1
        %v1899 = vperm.slane %v1895, 2
        %v1900 = vperm.slane %v1895, 3
        %v1905 = vmul.f32 %v1893, %v1897
        %v1906 = vmul.f32 %v1892, %v1898
        %v1907 = vmul.f32 %v1891, %v1899
        %v1908 = vmul.f32 %v1890, %v1900
        %1909 = vst [vmem:[#allocation1] ss:$2 sm:$0xff] %v1826
        %s1910 = scalar_lea.vmem [#allocation1], 16
        %1911 = vst [vmem:[%s1910] ss:$2 sm:$0xff] %v1827
        %v1912 = vld.sshfl [vmem:[#allocation1] sm:$0xff pattern:$0x75316420]
        %v1913 = vld.sshfl [vmem:[#allocation1 + $0x8] sm:$0xff pattern:$0x75316420]
        %v1914 = vld.sshfl [vmem:[#allocation1 + $0x10] sm:$0xff pattern:$0x75316420]
        %v1915 = vld.sshfl [vmem:[#allocation1 + $0x18] sm:$0xff pattern:$0x75316420]
        %1920 = vrot.lane.b32.xlu0 %v1912, 71
        %v1921 = vpop.permute.xlu0 %1920
        %1922 = vrot.lane.b32.xlu0 %v1913, 71
        %v1923 = vpop.permute.xlu0 %1922
        %1924 = vrot.lane.b32.xlu0 %v1914, 71
        %v1925 = vpop.permute.xlu0 %1924
        %1926 = vrot.lane.b32.xlu0 %v1915, 71
        %v1927 = vpop.permute.xlu0 %1926
        %vm1928 = vcmp.lt.s32.totalorder %v1850, 71
        %v1929 = vsel %vm1928, %v1925, %v1927
        %v1930 = vsel %vm1928, %v1923, %v1925
        %v1931 = vsel %vm1928, %v1921, %v1923
        %v1932 = vsel %vm1928, %v1927, %v1921
        %s1933 = scalar_lea.vmem [#allocation7], 2
        %v1934 = vld [vmem:[%s1933] ss:$8 sm:$0xf]
        %v1936 = vperm.slane %v1934, 0
        %v1937 = vperm.slane %v1934, 1
        %v1938 = vperm.slane %v1934, 2
        %v1939 = vperm.slane %v1934, 3
        %v1944 = vmul.f32 %v1932, %v1936
        %v1945 = vmul.f32 %v1931, %v1937
        %v1946 = vmul.f32 %v1930, %v1938
        %v1947 = vmul.f32 %v1929, %v1939
        %1948 = vst [vmem:[#allocation1] ss:$2 sm:$0xff] %v1826
        %s1949 = scalar_lea.vmem [#allocation1], 16
        %1950 = vst [vmem:[%s1949] ss:$2 sm:$0xff] %v1827
        %v1951 = vld.sshfl [vmem:[#allocation1] sm:$0xff pattern:$0x75316420]
        %v1952 = vld.sshfl [vmem:[#allocation1 + $0x8] sm:$0xff pattern:$0x75316420]
        %v1953 = vld.sshfl [vmem:[#allocation1 + $0x10] sm:$0xff pattern:$0x75316420]
        %v1954 = vld.sshfl [vmem:[#allocation1 + $0x18] sm:$0xff pattern:$0x75316420]
        %1959 = vrot.lane.b32.xlu0 %v1951, 65
        %v1960 = vpop.permute.xlu0 %1959
        %1961 = vrot.lane.b32.xlu0 %v1952, 65
        %v1962 = vpop.permute.xlu0 %1961
        %1963 = vrot.lane.b32.xlu0 %v1953, 65
        %v1964 = vpop.permute.xlu0 %1963
        %1965 = vrot.lane.b32.xlu0 %v1954, 65
        %v1966 = vpop.permute.xlu0 %1965
        %vm1967 = vcmp.lt.s32.totalorder %v1850, 65
        %v1968 = vsel %vm1967, %v1964, %v1966
        %v1969 = vsel %vm1967, %v1962, %v1964
        %v1970 = vsel %vm1967, %v1960, %v1962
        %v1971 = vsel %vm1967, %v1966, %v1960
        %s1972 = scalar_lea.vmem [#allocation7], 3
        %v1973 = vld [vmem:[%s1972] ss:$8 sm:$0xf]
        %v1975 = vperm.slane %v1973, 0
        %v1976 = vperm.slane %v1973, 1
        %v1977 = vperm.slane %v1973, 2
        %v1978 = vperm.slane %v1973, 3
        %v1983 = vmul.f32 %v1971, %v1975
        %v1984 = vmul.f32 %v1970, %v1976
        %v1985 = vmul.f32 %v1969, %v1977
        %v1986 = vmul.f32 %v1968, %v1978
        %1987 = vst [vmem:[#allocation1] ss:$2 sm:$0xff] %v1826
        %s1988 = scalar_lea.vmem [#allocation1], 16
        %1989 = vst [vmem:[%s1988] ss:$2 sm:$0xff] %v1827
        %v1990 = vld.sshfl [vmem:[#allocation1] sm:$0xff pattern:$0x75316420]
        %v1991 = vld.sshfl [vmem:[#allocation1 + $0x8] sm:$0xff pattern:$0x75316420]
        %v1992 = vld.sshfl [vmem:[#allocation1 + $0x10] sm:$0xff pattern:$0x75316420]
        %v1993 = vld.sshfl [vmem:[#allocation1 + $0x18] sm:$0xff pattern:$0x75316420]
        %1998 = vrot.lane.b32.xlu0 %v1990, 64
        %v1999 = vpop.permute.xlu0 %1998
        %2000 = vrot.lane.b32.xlu0 %v1991, 64
        %v2001 = vpop.permute.xlu0 %2000
        %2002 = vrot.lane.b32.xlu0 %v1992, 64
        %v2003 = vpop.permute.xlu0 %2002
        %2004 = vrot.lane.b32.xlu0 %v1993, 64
        %v2005 = vpop.permute.xlu0 %2004
        %vm2006 = vcmp.lt.s32.totalorder %v1850, 64
        %v2007 = vsel %vm2006, %v2003, %v2005
        %v2008 = vsel %vm2006, %v2001, %v2003
        %v2009 = vsel %vm2006, %v1999, %v2001
        %v2010 = vsel %vm2006, %v2005, %v1999
        %s2011 = scalar_lea.vmem [#allocation7], 4
        %v2012 = vld [vmem:[%s2011] ss:$8 sm:$0xf]
        %v2014 = vperm.slane %v2012, 0
        %v2015 = vperm.slane %v2012, 1
        %v2016 = vperm.slane %v2012, 2
        %v2017 = vperm.slane %v2012, 3
        %v2022 = vmul.f32 %v2010, %v2014
        %v2023 = vmul.f32 %v2009, %v2015
        %v2024 = vmul.f32 %v2008, %v2016
        %v2025 = vmul.f32 %v2007, %v2017
        %2026 = vst [vmem:[#allocation1] ss:$2 sm:$0xff] %v1826
        %s2027 = scalar_lea.vmem [#allocation1], 16
        %2028 = vst [vmem:[%s2027] ss:$2 sm:$0xff] %v1827
        %v2029 = vld.sshfl [vmem:[#allocation1] sm:$0xff pattern:$0x75316420]
        %v2030 = vld.sshfl [vmem:[#allocation1 + $0x8] sm:$0xff pattern:$0x75316420]
        %v2031 = vld.sshfl [vmem:[#allocation1 + $0x10] sm:$0xff pattern:$0x75316420]
        %v2032 = vld.sshfl [vmem:[#allocation1 + $0x18] sm:$0xff pattern:$0x75316420]
        %2037 = vrot.lane.b32.xlu0 %v2029, 63
        %v2038 = vpop.permute.xlu0 %2037
        %2039 = vrot.lane.b32.xlu0 %v2030, 63
        %v2040 = vpop.permute.xlu0 %2039
        %2041 = vrot.lane.b32.xlu0 %v2031, 63
        %v2042 = vpop.permute.xlu0 %2041
        %2043 = vrot.lane.b32.xlu0 %v2032, 63
        %v2044 = vpop.permute.xlu0 %2043
        %vm2045 = vcmp.lt.s32.totalorder %v1850, 63
        %v2046 = vsel %vm2045, %v2042, %v2044
        %v2047 = vsel %vm2045, %v2040, %v2042
        %v2048 = vsel %vm2045, %v2038, %v2040
        %v2049 = vsel %vm2045, %v2044, %v2038
        %s2050 = scalar_lea.vmem [#allocation7], 5
        %v2051 = vld [vmem:[%s2050] ss:$8 sm:$0xf]
        %v2053 = vperm.slane %v2051, 0
        %v2054 = vperm.slane %v2051, 1
        %v2055 = vperm.slane %v2051, 2
        %v2056 = vperm.slane %v2051, 3
        %v2061 = vmul.f32 %v2049, %v2053
        %v2062 = vmul.f32 %v2048, %v2054
        %v2063 = vmul.f32 %v2047, %v2055
        %v2064 = vmul.f32 %v2046, %v2056
        %2065 = vst [vmem:[#allocation1] ss:$2 sm:$0xff] %v1826
        %s2066 = scalar_lea.vmem [#allocation1], 16
        %2067 = vst [vmem:[%s2066] ss:$2 sm:$0xff] %v1827
        %v2068 = vld.sshfl [vmem:[#allocation1] sm:$0xff pattern:$0x75316420]
        %v2069 = vld.sshfl [vmem:[#allocation1 + $0x8] sm:$0xff pattern:$0x75316420]
        %v2070 = vld.sshfl [vmem:[#allocation1 + $0x10] sm:$0xff pattern:$0x75316420]
        %v2071 = vld.sshfl [vmem:[#allocation1 + $0x18] sm:$0xff pattern:$0x75316420]
        %2076 = vrot.lane.b32.xlu0 %v2068, 57
        %v2077 = vpop.permute.xlu0 %2076
        %2078 = vrot.lane.b32.xlu0 %v2069, 57
        %v2079 = vpop.permute.xlu0 %2078
        %2080 = vrot.lane.b32.xlu0 %v2070, 57
        %v2081 = vpop.permute.xlu0 %2080
        %2082 = vrot.lane.b32.xlu0 %v2071, 57
        %v2083 = vpop.permute.xlu0 %2082
        %vm2084 = vcmp.lt.s32.totalorder %v1850, 57
        %v2085 = vsel %vm2084, %v2081, %v2083
        %v2086 = vsel %vm2084, %v2079, %v2081
        %v2087 = vsel %vm2084, %v2077, %v2079
        %v2088 = vsel %vm2084, %v2083, %v2077
        %s2089 = scalar_lea.vmem [#allocation7], 6
        %v2090 = vld [vmem:[%s2089] ss:$8 sm:$0xf]
        %v2092 = vperm.slane %v2090, 0
        %v2093 = vperm.slane %v2090, 1
        %v2094 = vperm.slane %v2090, 2
        %v2095 = vperm.slane %v2090, 3
        %v2100 = vmul.f32 %v2088, %v2092
        %v2101 = vmul.f32 %v2087, %v2093
        %v2102 = vmul.f32 %v2086, %v2094
        %v2103 = vmul.f32 %v2085, %v2095
        %2104 = vst [vmem:[#allocation1] ss:$2 sm:$0xff] %v1826
        %s2105 = scalar_lea.vmem [#allocation1], 16
        %2106 = vst [vmem:[%s2105] ss:$2 sm:$0xff] %v1827
        %v2107 = vld.sshfl [vmem:[#allocation1] sm:$0xff pattern:$0x75316420]
        %v2108 = vld.sshfl [vmem:[#allocation1 + $0x8] sm:$0xff pattern:$0x75316420]
        %v2109 = vld.sshfl [vmem:[#allocation1 + $0x10] sm:$0xff pattern:$0x75316420]
        %v2110 = vld.sshfl [vmem:[#allocation1 + $0x18] sm:$0xff pattern:$0x75316420]
        %2115 = vrot.lane.b32.xlu0 %v2107, 56
        %v2116 = vpop.permute.xlu0 %2115
        %2117 = vrot.lane.b32.xlu0 %v2108, 56
        %v2118 = vpop.permute.xlu0 %2117
        %2119 = vrot.lane.b32.xlu0 %v2109, 56
        %v2120 = vpop.permute.xlu0 %2119
        %2121 = vrot.lane.b32.xlu0 %v2110, 56
        %v2122 = vpop.permute.xlu0 %2121
        %vm2123 = vcmp.lt.s32.totalorder %v1850, 56
        %v2124 = vsel %vm2123, %v2120, %v2122
        %v2125 = vsel %vm2123, %v2118, %v2120
        %v2126 = vsel %vm2123, %v2116, %v2118
        %v2127 = vsel %vm2123, %v2122, %v2116
        %s2128 = scalar_lea.vmem [#allocation7], 7
        %v2129 = vld [vmem:[%s2128] ss:$8 sm:$0xf]
        %v2131 = vperm.slane %v2129, 0
        %v2132 = vperm.slane %v2129, 1
        %v2133 = vperm.slane %v2129, 2
        %v2134 = vperm.slane %v2129, 3
        %v2139 = vmul.f32 %v2127, %v2131
        %v2140 = vmul.f32 %v2126, %v2132
        %v2141 = vmul.f32 %v2125, %v2133
        %v2142 = vmul.f32 %v2124, %v2134
        %2143 = vst [vmem:[#allocation1] ss:$2 sm:$0xff] %v1826
        %s2144 = scalar_lea.vmem [#allocation1], 16
        %2145 = vst [vmem:[%s2144] ss:$2 sm:$0xff] %v1827
        %v2146 = vld.sshfl [vmem:[#allocation1] sm:$0xff pattern:$0x75316420]
        %v2147 = vld.sshfl [vmem:[#allocation1 + $0x8] sm:$0xff pattern:$0x75316420]
        %v2148 = vld.sshfl [vmem:[#allocation1 + $0x10] sm:$0xff pattern:$0x75316420]
        %v2149 = vld.sshfl [vmem:[#allocation1 + $0x18] sm:$0xff pattern:$0x75316420]
        %2154 = vrot.lane.b32.xlu0 %v2146, 55
        %v2155 = vpop.permute.xlu0 %2154
        %2156 = vrot.lane.b32.xlu0 %v2147, 55
        %v2157 = vpop.permute.xlu0 %2156
        %2158 = vrot.lane.b32.xlu0 %v2148, 55
        %v2159 = vpop.permute.xlu0 %2158
        %2160 = vrot.lane.b32.xlu0 %v2149, 55
        %v2161 = vpop.permute.xlu0 %2160
        %vm2162 = vcmp.lt.s32.totalorder %v1850, 55
        %v2163 = vsel %vm2162, %v2159, %v2161
        %v2164 = vsel %vm2162, %v2157, %v2159
        %v2165 = vsel %vm2162, %v2155, %v2157
        %v2166 = vsel %vm2162, %v2161, %v2155
        %s2167 = scalar_lea.vmem [#allocation7], 32
        %v2168 = vld [vmem:[%s2167] ss:$8 sm:$0xf]
        %v2170 = vperm.slane %v2168, 0
        %v2171 = vperm.slane %v2168, 1
        %v2172 = vperm.slane %v2168, 2
        %v2173 = vperm.slane %v2168, 3
        %v2178 = vmul.f32 %v2166, %v2170
        %v2179 = vmul.f32 %v2165, %v2171
        %v2180 = vmul.f32 %v2164, %v2172
        %v2181 = vmul.f32 %v2163, %v2173
        %2182 = vst [vmem:[#allocation1] ss:$2 sm:$0xff] %v1826
        %s2183 = scalar_lea.vmem [#allocation1], 16
        %2184 = vst [vmem:[%s2183] ss:$2 sm:$0xff] %v1827
        %v2185 = vld.sshfl [vmem:[#allocation1] sm:$0xff pattern:$0x75316420]
        %v2186 = vld.sshfl [vmem:[#allocation1 + $0x8] sm:$0xff pattern:$0x75316420]
        %v2187 = vld.sshfl [vmem:[#allocation1 + $0x10] sm:$0xff pattern:$0x75316420]
        %v2188 = vld.sshfl [vmem:[#allocation1 + $0x18] sm:$0xff pattern:$0x75316420]
        %2193 = vrot.lane.b32.xlu0 %v2185, 9
        %v2194 = vpop.permute.xlu0 %2193
        %2195 = vrot.lane.b32.xlu0 %v2186, 9
        %v2196 = vpop.permute.xlu0 %2195
        %2197 = vrot.lane.b32.xlu0 %v2187, 9
        %v2198 = vpop.permute.xlu0 %2197
        %2199 = vrot.lane.b32.xlu0 %v2188, 9
        %v2200 = vpop.permute.xlu0 %2199
        %vm2201 = vcmp.lt.s32.totalorder %v1850, 9
        %v2202 = vsel %vm2201, %v2198, %v2200
        %v2203 = vsel %vm2201, %v2196, %v2198
        %v2204 = vsel %vm2201, %v2194, %v2196
        %v2205 = vsel %vm2201, %v2200, %v2194
        %s2206 = scalar_lea.vmem [#allocation7], 33
        %v2207 = vld [vmem:[%s2206] ss:$8 sm:$0xf]
        %v2209 = vperm.slane %v2207, 0
        %v2210 = vperm.slane %v2207, 1
        %v2211 = vperm.slane %v2207, 2
        %v2212 = vperm.slane %v2207, 3
        %v2217 = vmul.f32 %v2205, %v2209
        %v2218 = vmul.f32 %v2204, %v2210
        %v2219 = vmul.f32 %v2203, %v2211
        %v2220 = vmul.f32 %v2202, %v2212
        %2221 = vst [vmem:[#allocation1] ss:$2 sm:$0xff] %v1826
        %s2222 = scalar_lea.vmem [#allocation1], 16
        %2223 = vst [vmem:[%s2222] ss:$2 sm:$0xff] %v1827
        %v2224 = vld.sshfl [vmem:[#allocation1] sm:$0xff pattern:$0x75316420]
        %v2225 = vld.sshfl [vmem:[#allocation1 + $0x8] sm:$0xff pattern:$0x75316420]
        %v2226 = vld.sshfl [vmem:[#allocation1 + $0x10] sm:$0xff pattern:$0x75316420]
        %v2227 = vld.sshfl [vmem:[#allocation1 + $0x18] sm:$0xff pattern:$0x75316420]
        %2232 = vrot.lane.b32.xlu0 %v2224, 8
        %v2233 = vpop.permute.xlu0 %2232
        %2234 = vrot.lane.b32.xlu0 %v2225, 8
        %v2235 = vpop.permute.xlu0 %2234
        %2236 = vrot.lane.b32.xlu0 %v2226, 8
        %v2237 = vpop.permute.xlu0 %2236
        %2238 = vrot.lane.b32.xlu0 %v2227, 8
        %v2239 = vpop.permute.xlu0 %2238
        %vm2240 = vcmp.lt.s32.totalorder %v1850, 8
        %v2241 = vsel %vm2240, %v2237, %v2239
        %v2242 = vsel %vm2240, %v2235, %v2237
        %v2243 = vsel %vm2240, %v2233, %v2235
        %v2244 = vsel %vm2240, %v2239, %v2233
        %s2245 = scalar_lea.vmem [#allocation7], 34
        %v2246 = vld [vmem:[%s2245] ss:$8 sm:$0xf]
        %v2248 = vperm.slane %v2246, 0
        %v2249 = vperm.slane %v2246, 1
        %v2250 = vperm.slane %v2246, 2
        %v2251 = vperm.slane %v2246, 3
        %v2256 = vmul.f32 %v2244, %v2248
        %v2257 = vmul.f32 %v2243, %v2249
        %v2258 = vmul.f32 %v2242, %v2250
        %v2259 = vmul.f32 %v2241, %v2251
        %2260 = vst [vmem:[#allocation1] ss:$2 sm:$0xff] %v1826
        %s2261 = scalar_lea.vmem [#allocation1], 16
        %2262 = vst [vmem:[%s2261] ss:$2 sm:$0xff] %v1827
        %v2263 = vld.sshfl [vmem:[#allocation1] sm:$0xff pattern:$0x75316420]
        %v2264 = vld.sshfl [vmem:[#allocation1 + $0x8] sm:$0xff pattern:$0x75316420]
        %v2265 = vld.sshfl [vmem:[#allocation1 + $0x10] sm:$0xff pattern:$0x75316420]
        %v2266 = vld.sshfl [vmem:[#allocation1 + $0x18] sm:$0xff pattern:$0x75316420]
        %2271 = vrot.lane.b32.xlu0 %v2263, 7
        %v2272 = vpop.permute.xlu0 %2271
        %2273 = vrot.lane.b32.xlu0 %v2264, 7
        %v2274 = vpop.permute.xlu0 %2273
        %2275 = vrot.lane.b32.xlu0 %v2265, 7
        %v2276 = vpop.permute.xlu0 %2275
        %2277 = vrot.lane.b32.xlu0 %v2266, 7
        %v2278 = vpop.permute.xlu0 %2277
        %vm2279 = vcmp.lt.s32.totalorder %v1850, 7
        %v2280 = vsel %vm2279, %v2276, %v2278
        %v2281 = vsel %vm2279, %v2274, %v2276
        %v2282 = vsel %vm2279, %v2272, %v2274
        %v2283 = vsel %vm2279, %v2278, %v2272
        %s2284 = scalar_lea.vmem [#allocation7], 35
        %v2285 = vld [vmem:[%s2284] ss:$8 sm:$0xf]
        %v2287 = vperm.slane %v2285, 0
        %v2288 = vperm.slane %v2285, 1
        %v2289 = vperm.slane %v2285, 2
        %v2290 = vperm.slane %v2285, 3
        %v2295 = vmul.f32 %v2283, %v2287
        %v2296 = vmul.f32 %v2282, %v2288
        %v2297 = vmul.f32 %v2281, %v2289
        %v2298 = vmul.f32 %v2280, %v2290
        %2299 = vst [vmem:[#allocation1] ss:$2 sm:$0xff] %v1826
        %s2300 = scalar_lea.vmem [#allocation1], 16
        %2301 = vst [vmem:[%s2300] ss:$2 sm:$0xff] %v1827
        %v2302 = vld.sshfl [vmem:[#allocation1] sm:$0xff pattern:$0x75316420]
        %v2303 = vld.sshfl [vmem:[#allocation1 + $0x8] sm:$0xff pattern:$0x75316420]
        %v2304 = vld.sshfl [vmem:[#allocation1 + $0x10] sm:$0xff pattern:$0x75316420]
        %v2305 = vld.sshfl [vmem:[#allocation1 + $0x18] sm:$0xff pattern:$0x75316420]
        %2310 = vrot.lane.b32.xlu0 %v2302, 1
        %v2311 = vpop.permute.xlu0 %2310
        %2312 = vrot.lane.b32.xlu0 %v2303, 1
        %v2313 = vpop.permute.xlu0 %2312
        %2314 = vrot.lane.b32.xlu0 %v2304, 1
        %v2315 = vpop.permute.xlu0 %2314
        %2316 = vrot.lane.b32.xlu0 %v2305, 1
        %v2317 = vpop.permute.xlu0 %2316
        %vm2318 = vcmp.lt.s32.totalorder %v1850, 1
        %v2319 = vsel %vm2318, %v2315, %v2317
        %v2320 = vsel %vm2318, %v2313, %v2315
        %v2321 = vsel %vm2318, %v2311, %v2313
        %v2322 = vsel %vm2318, %v2317, %v2311
        %s2323 = scalar_lea.vmem [#allocation7], 36
        %v2324 = vld [vmem:[%s2323] ss:$8 sm:$0xf]
        %v2326 = vperm.slane %v2324, 0
        %v2327 = vperm.slane %v2324, 1
        %v2328 = vperm.slane %v2324, 2
        %v2329 = vperm.slane %v2324, 3
        %v2334 = vmul.f32 %v2322, %v2326
        %v2335 = vmul.f32 %v2321, %v2327
        %v2336 = vmul.f32 %v2320, %v2328
        %v2337 = vmul.f32 %v2319, %v2329
        %2338 = vst [vmem:[#allocation1] ss:$2 sm:$0xff] %v1826
        %s2339 = scalar_lea.vmem [#allocation1], 16
        %2340 = vst [vmem:[%s2339] ss:$2 sm:$0xff] %v1827
        %v2341 = vld.sshfl [vmem:[#allocation1] sm:$0xff pattern:$0x75316420]
        %v2342 = vld.sshfl [vmem:[#allocation1 + $0x8] sm:$0xff pattern:$0x75316420]
        %v2343 = vld.sshfl [vmem:[#allocation1 + $0x10] sm:$0xff pattern:$0x75316420]
        %v2344 = vld.sshfl [vmem:[#allocation1 + $0x18] sm:$0xff pattern:$0x75316420]
        %2349 = vrot.lane.b32.xlu0 %v2341, 127
        %v2350 = vpop.permute.xlu0 %2349
        %2351 = vrot.lane.b32.xlu0 %v2342, 127
        %v2352 = vpop.permute.xlu0 %2351
        %2353 = vrot.lane.b32.xlu0 %v2343, 127
        %v2354 = vpop.permute.xlu0 %2353
        %2355 = vrot.lane.b32.xlu0 %v2344, 127
        %v2356 = vpop.permute.xlu0 %2355
        %vm2357 = vcmp.lt.s32.totalorder %v1850, 127
        %v2358 = vsel %vm2357, %v2354, %v2356
        %v2359 = vsel %vm2357, %v2352, %v2354
        %v2360 = vsel %vm2357, %v2350, %v2352
        %v2361 = vsel %vm2357, %v2356, %v2350
        %s2362 = scalar_lea.vmem [#allocation7], 38
        %v2363 = vld [vmem:[%s2362] ss:$8 sm:$0xf]
        %v2365 = vperm.slane %v2363, 0
        %v2366 = vperm.slane %v2363, 1
        %v2367 = vperm.slane %v2363, 2
        %v2368 = vperm.slane %v2363, 3
        %v2373 = vmul.f32 %v2360, %v2365
        %v2374 = vmul.f32 %v2359, %v2366
        %v2375 = vmul.f32 %v2358, %v2367
        %v2376 = vmul.f32 %v2361, %v2368
        %2377 = vst [vmem:[#allocation1] ss:$2 sm:$0xff] %v1826
        %s2378 = scalar_lea.vmem [#allocation1], 16
        %2379 = vst [vmem:[%s2378] ss:$2 sm:$0xff] %v1827
        %v2380 = vld.sshfl [vmem:[#allocation1] sm:$0xff pattern:$0x75316420]
        %v2381 = vld.sshfl [vmem:[#allocation1 + $0x8] sm:$0xff pattern:$0x75316420]
        %v2382 = vld.sshfl [vmem:[#allocation1 + $0x10] sm:$0xff pattern:$0x75316420]
        %v2383 = vld.sshfl [vmem:[#allocation1 + $0x18] sm:$0xff pattern:$0x75316420]
        %2388 = vrot.lane.b32.xlu0 %v2380, 121
        %v2389 = vpop.permute.xlu0 %2388
        %2390 = vrot.lane.b32.xlu0 %v2381, 121
        %v2391 = vpop.permute.xlu0 %2390
        %2392 = vrot.lane.b32.xlu0 %v2382, 121
        %v2393 = vpop.permute.xlu0 %2392
        %2394 = vrot.lane.b32.xlu0 %v2383, 121
        %v2395 = vpop.permute.xlu0 %2394
        %vm2396 = vcmp.lt.s32.totalorder %v1850, 121
        %v2397 = vsel %vm2396, %v2393, %v2395
        %v2398 = vsel %vm2396, %v2391, %v2393
        %v2399 = vsel %vm2396, %v2389, %v2391
        %v2400 = vsel %vm2396, %v2395, %v2389
        %s2401 = scalar_lea.vmem [#allocation7], 39
        %v2402 = vld [vmem:[%s2401] ss:$8 sm:$0xf]
        %v2404 = vperm.slane %v2402, 0
        %v2405 = vperm.slane %v2402, 1
        %v2406 = vperm.slane %v2402, 2
        %v2407 = vperm.slane %v2402, 3
        %v2412 = vmul.f32 %v2399, %v2404
        %v2413 = vmul.f32 %v2398, %v2405
        %v2414 = vmul.f32 %v2397, %v2406
        %v2415 = vmul.f32 %v2400, %v2407
        %2416 = vst [vmem:[#allocation1] ss:$2 sm:$0xff] %v1826
        %s2417 = scalar_lea.vmem [#allocation1], 16
        %2418 = vst [vmem:[%s2417] ss:$2 sm:$0xff] %v1827
        %v2419 = vld.sshfl [vmem:[#allocation1] sm:$0xff pattern:$0x75316420]
        %v2420 = vld.sshfl [vmem:[#allocation1 + $0x8] sm:$0xff pattern:$0x75316420]
        %v2421 = vld.sshfl [vmem:[#allocation1 + $0x10] sm:$0xff pattern:$0x75316420]
        %v2422 = vld.sshfl [vmem:[#allocation1 + $0x18] sm:$0xff pattern:$0x75316420]
        %2427 = vrot.lane.b32.xlu0 %v2419, 120
        %v2428 = vpop.permute.xlu0 %2427
        %2429 = vrot.lane.b32.xlu0 %v2420, 120
        %v2430 = vpop.permute.xlu0 %2429
        %2431 = vrot.lane.b32.xlu0 %v2421, 120
        %v2432 = vpop.permute.xlu0 %2431
        %2433 = vrot.lane.b32.xlu0 %v2422, 120
        %v2434 = vpop.permute.xlu0 %2433
        %vm2435 = vcmp.lt.s32.totalorder %v1850, 120
        %v2436 = vsel %vm2435, %v2432, %v2434
        %v2437 = vsel %vm2435, %v2430, %v2432
        %v2438 = vsel %vm2435, %v2428, %v2430
        %v2439 = vsel %vm2435, %v2434, %v2428
        %s2440 = scalar_lea.vmem [#allocation7], 64
        %v2441 = vld [vmem:[%s2440] ss:$8 sm:$0xf]
        %v2443 = vperm.slane %v2441, 0
        %v2444 = vperm.slane %v2441, 1
        %v2445 = vperm.slane %v2441, 2
        %v2446 = vperm.slane %v2441, 3
        %v2451 = vmul.f32 %v2438, %v2443
        %v2452 = vmul.f32 %v2437, %v2444
        %v2453 = vmul.f32 %v2436, %v2445
        %v2454 = vmul.f32 %v2439, %v2446
        %2455 = vst [vmem:[#allocation1] ss:$2 sm:$0xff] %v1826
        %s2456 = scalar_lea.vmem [#allocation1], 16
        %2457 = vst [vmem:[%s2456] ss:$2 sm:$0xff] %v1827
        %v2458 = vld.sshfl [vmem:[#allocation1] sm:$0xff pattern:$0x75316420]
        %v2459 = vld.sshfl [vmem:[#allocation1 + $0x8] sm:$0xff pattern:$0x75316420]
        %v2460 = vld.sshfl [vmem:[#allocation1 + $0x10] sm:$0xff pattern:$0x75316420]
        %v2461 = vld.sshfl [vmem:[#allocation1 + $0x18] sm:$0xff pattern:$0x75316420]
        %2466 = vrot.lane.b32.xlu0 %v2458, 119
        %v2467 = vpop.permute.xlu0 %2466
        %2468 = vrot.lane.b32.xlu0 %v2459, 119
        %v2469 = vpop.permute.xlu0 %2468
        %2470 = vrot.lane.b32.xlu0 %v2460, 119
        %v2471 = vpop.permute.xlu0 %2470
        %2472 = vrot.lane.b32.xlu0 %v2461, 119
        %v2473 = vpop.permute.xlu0 %2472
        %vm2474 = vcmp.lt.s32.totalorder %v1850, 119
        %v2475 = vsel %vm2474, %v2471, %v2473
        %v2476 = vsel %vm2474, %v2469, %v2471
        %v2477 = vsel %vm2474, %v2467, %v2469
        %v2478 = vsel %vm2474, %v2473, %v2467
        %s2479 = scalar_lea.vmem [#allocation7], 65
        %v2480 = vld [vmem:[%s2479] ss:$8 sm:$0xf]
        %v2482 = vperm.slane %v2480, 0
        %v2483 = vperm.slane %v2480, 1
        %v2484 = vperm.slane %v2480, 2
        %v2485 = vperm.slane %v2480, 3
        %v2490 = vmul.f32 %v2477, %v2482
        %v2491 = vmul.f32 %v2476, %v2483
        %v2492 = vmul.f32 %v2475, %v2484
        %v2493 = vmul.f32 %v2478, %v2485
        %2494 = vst [vmem:[#allocation1] ss:$2 sm:$0xff] %v1826
        %s2495 = scalar_lea.vmem [#allocation1], 16
        %2496 = vst [vmem:[%s2495] ss:$2 sm:$0xff] %v1827
        %v2497 = vld.sshfl [vmem:[#allocation1] sm:$0xff pattern:$0x75316420]
        %v2498 = vld.sshfl [vmem:[#allocation1 + $0x8] sm:$0xff pattern:$0x75316420]
        %v2499 = vld.sshfl [vmem:[#allocation1 + $0x10] sm:$0xff pattern:$0x75316420]
        %v2500 = vld.sshfl [vmem:[#allocation1 + $0x18] sm:$0xff pattern:$0x75316420]
        %2505 = vrot.lane.b32.xlu0 %v2497, 73
        %v2506 = vpop.permute.xlu0 %2505
        %2507 = vrot.lane.b32.xlu0 %v2498, 73
        %v2508 = vpop.permute.xlu0 %2507
        %2509 = vrot.lane.b32.xlu0 %v2499, 73
        %v2510 = vpop.permute.xlu0 %2509
        %2511 = vrot.lane.b32.xlu0 %v2500, 73
        %v2512 = vpop.permute.xlu0 %2511
        %v2513 = vsel %vm1851, %v2510, %v2512
        %v2514 = vsel %vm1851, %v2508, %v2510
        %v2515 = vsel %vm1851, %v2506, %v2508
        %v2516 = vsel %vm1851, %v2512, %v2506
        %s2517 = scalar_lea.vmem [#allocation7], 66
        %v2518 = vld [vmem:[%s2517] ss:$8 sm:$0xf]
        %v2520 = vperm.slane %v2518, 0
        %v2521 = vperm.slane %v2518, 1
        %v2522 = vperm.slane %v2518, 2
        %v2523 = vperm.slane %v2518, 3
        %v2528 = vmul.f32 %v2515, %v2520
        %v2529 = vmul.f32 %v2514, %v2521
        %v2530 = vmul.f32 %v2513, %v2522
        %v2531 = vmul.f32 %v2516, %v2523
        %2532 = vst [vmem:[#allocation1] ss:$2 sm:$0xff] %v1826
        %s2533 = scalar_lea.vmem [#allocation1], 16
        %2534 = vst [vmem:[%s2533] ss:$2 sm:$0xff] %v1827
        %v2535 = vld.sshfl [vmem:[#allocation1] sm:$0xff pattern:$0x75316420]
        %v2536 = vld.sshfl [vmem:[#allocation1 + $0x8] sm:$0xff pattern:$0x75316420]
        %v2537 = vld.sshfl [vmem:[#allocation1 + $0x10] sm:$0xff pattern:$0x75316420]
        %v2538 = vld.sshfl [vmem:[#allocation1 + $0x18] sm:$0xff pattern:$0x75316420]
        %2543 = vrot.lane.b32.xlu0 %v2535, 72
        %v2544 = vpop.permute.xlu0 %2543
        %2545 = vrot.lane.b32.xlu0 %v2536, 72
        %v2546 = vpop.permute.xlu0 %2545
        %2547 = vrot.lane.b32.xlu0 %v2537, 72
        %v2548 = vpop.permute.xlu0 %2547
        %2549 = vrot.lane.b32.xlu0 %v2538, 72
        %v2550 = vpop.permute.xlu0 %2549
        %v2551 = vsel %vm1889, %v2548, %v2550
        %v2552 = vsel %vm1889, %v2546, %v2548
        %v2553 = vsel %vm1889, %v2544, %v2546
        %v2554 = vsel %vm1889, %v2550, %v2544
        %s2555 = scalar_lea.vmem [#allocation7], 67
        %v2556 = vld [vmem:[%s2555] ss:$8 sm:$0xf]
        %v2558 = vperm.slane %v2556, 0
        %v2559 = vperm.slane %v2556, 1
        %v2560 = vperm.slane %v2556, 2
        %v2561 = vperm.slane %v2556, 3
        %v2566 = vmul.f32 %v2553, %v2558
        %v2567 = vmul.f32 %v2552, %v2559
        %v2568 = vmul.f32 %v2551, %v2560
        %v2569 = vmul.f32 %v2554, %v2561
        %2570 = vst [vmem:[#allocation1] ss:$2 sm:$0xff] %v1826
        %s2571 = scalar_lea.vmem [#allocation1], 16
        %2572 = vst [vmem:[%s2571] ss:$2 sm:$0xff] %v1827
        %v2573 = vld.sshfl [vmem:[#allocation1] sm:$0xff pattern:$0x75316420]
        %v2574 = vld.sshfl [vmem:[#allocation1 + $0x8] sm:$0xff pattern:$0x75316420]
        %v2575 = vld.sshfl [vmem:[#allocation1 + $0x10] sm:$0xff pattern:$0x75316420]
        %v2576 = vld.sshfl [vmem:[#allocation1 + $0x18] sm:$0xff pattern:$0x75316420]
        %2581 = vrot.lane.b32.xlu0 %v2573, 71
        %v2582 = vpop.permute.xlu0 %2581
        %2583 = vrot.lane.b32.xlu0 %v2574, 71
        %v2584 = vpop.permute.xlu0 %2583
        %2585 = vrot.lane.b32.xlu0 %v2575, 71
        %v2586 = vpop.permute.xlu0 %2585
        %2587 = vrot.lane.b32.xlu0 %v2576, 71
        %v2588 = vpop.permute.xlu0 %2587
        %v2589 = vsel %vm1928, %v2586, %v2588
        %v2590 = vsel %vm1928, %v2584, %v2586
        %v2591 = vsel %vm1928, %v2582, %v2584
        %v2592 = vsel %vm1928, %v2588, %v2582
        %s2593 = scalar_lea.vmem [#allocation7], 68
        %v2594 = vld [vmem:[%s2593] ss:$8 sm:$0xf]
        %v2596 = vperm.slane %v2594, 0
        %v2597 = vperm.slane %v2594, 1
        %v2598 = vperm.slane %v2594, 2
        %v2599 = vperm.slane %v2594, 3
        %v2604 = vmul.f32 %v2591, %v2596
        %v2605 = vmul.f32 %v2590, %v2597
        %v2606 = vmul.f32 %v2589, %v2598
        %v2607 = vmul.f32 %v2592, %v2599
        %2608 = vst [vmem:[#allocation1] ss:$2 sm:$0xff] %v1826
        %s2609 = scalar_lea.vmem [#allocation1], 16
        %2610 = vst [vmem:[%s2609] ss:$2 sm:$0xff] %v1827
        %v2611 = vld.sshfl [vmem:[#allocation1] sm:$0xff pattern:$0x75316420]
        %v2612 = vld.sshfl [vmem:[#allocation1 + $0x8] sm:$0xff pattern:$0x75316420]
        %v2613 = vld.sshfl [vmem:[#allocation1 + $0x10] sm:$0xff pattern:$0x75316420]
        %v2614 = vld.sshfl [vmem:[#allocation1 + $0x18] sm:$0xff pattern:$0x75316420]
        %2619 = vrot.lane.b32.xlu0 %v2611, 65
        %v2620 = vpop.permute.xlu0 %2619
        %2621 = vrot.lane.b32.xlu0 %v2612, 65
        %v2622 = vpop.permute.xlu0 %2621
        %2623 = vrot.lane.b32.xlu0 %v2613, 65
        %v2624 = vpop.permute.xlu0 %2623
        %2625 = vrot.lane.b32.xlu0 %v2614, 65
        %v2626 = vpop.permute.xlu0 %2625
        %v2627 = vsel %vm1967, %v2624, %v2626
        %v2628 = vsel %vm1967, %v2622, %v2624
        %v2629 = vsel %vm1967, %v2620, %v2622
        %v2630 = vsel %vm1967, %v2626, %v2620
        %s2631 = scalar_lea.vmem [#allocation7], 69
        %v2632 = vld [vmem:[%s2631] ss:$8 sm:$0xf]
        %v2634 = vperm.slane %v2632, 0
        %v2635 = vperm.slane %v2632, 1
        %v2636 = vperm.slane %v2632, 2
        %v2637 = vperm.slane %v2632, 3
        %v2642 = vmul.f32 %v2629, %v2634
        %v2643 = vmul.f32 %v2628, %v2635
        %v2644 = vmul.f32 %v2627, %v2636
        %v2645 = vmul.f32 %v2630, %v2637
        %2646 = vst [vmem:[#allocation1] ss:$2 sm:$0xff] %v1826
        %s2647 = scalar_lea.vmem [#allocation1], 16
        %2648 = vst [vmem:[%s2647] ss:$2 sm:$0xff] %v1827
        %v2649 = vld.sshfl [vmem:[#allocation1] sm:$0xff pattern:$0x75316420]
        %v2650 = vld.sshfl [vmem:[#allocation1 + $0x8] sm:$0xff pattern:$0x75316420]
        %v2651 = vld.sshfl [vmem:[#allocation1 + $0x10] sm:$0xff pattern:$0x75316420]
        %v2652 = vld.sshfl [vmem:[#allocation1 + $0x18] sm:$0xff pattern:$0x75316420]
        %2657 = vrot.lane.b32.xlu0 %v2649, 64
        %v2658 = vpop.permute.xlu0 %2657
        %2659 = vrot.lane.b32.xlu0 %v2650, 64
        %v2660 = vpop.permute.xlu0 %2659
        %2661 = vrot.lane.b32.xlu0 %v2651, 64
        %v2662 = vpop.permute.xlu0 %2661
        %2663 = vrot.lane.b32.xlu0 %v2652, 64
        %v2664 = vpop.permute.xlu0 %2663
        %v2665 = vsel %vm2006, %v2662, %v2664
        %v2666 = vsel %vm2006, %v2660, %v2662
        %v2667 = vsel %vm2006, %v2658, %v2660
        %v2668 = vsel %vm2006, %v2664, %v2658
        %s2669 = scalar_lea.vmem [#allocation7], 70
        %v2670 = vld [vmem:[%s2669] ss:$8 sm:$0xf]
        %v2672 = vperm.slane %v2670, 0
        %v2673 = vperm.slane %v2670, 1
        %v2674 = vperm.slane %v2670, 2
        %v2675 = vperm.slane %v2670, 3
        %v2680 = vmul.f32 %v2667, %v2672
        %v2681 = vmul.f32 %v2666, %v2673
        %v2682 = vmul.f32 %v2665, %v2674
        %v2683 = vmul.f32 %v2668, %v2675
        %2684 = vst [vmem:[#allocation1] ss:$2 sm:$0xff] %v1826
        %s2685 = scalar_lea.vmem [#allocation1], 16
        %2686 = vst [vmem:[%s2685] ss:$2 sm:$0xff] %v1827
        %v2687 = vld.sshfl [vmem:[#allocation1] sm:$0xff pattern:$0x75316420]
        %v2688 = vld.sshfl [vmem:[#allocation1 + $0x8] sm:$0xff pattern:$0x75316420]
        %v2689 = vld.sshfl [vmem:[#allocation1 + $0x10] sm:$0xff pattern:$0x75316420]
        %v2690 = vld.sshfl [vmem:[#allocation1 + $0x18] sm:$0xff pattern:$0x75316420]
        %2695 = vrot.lane.b32.xlu0 %v2687, 63
        %v2696 = vpop.permute.xlu0 %2695
        %2697 = vrot.lane.b32.xlu0 %v2688, 63
        %v2698 = vpop.permute.xlu0 %2697
        %2699 = vrot.lane.b32.xlu0 %v2689, 63
        %v2700 = vpop.permute.xlu0 %2699
        %2701 = vrot.lane.b32.xlu0 %v2690, 63
        %v2702 = vpop.permute.xlu0 %2701
        %v2703 = vsel %vm2045, %v2700, %v2702
        %v2704 = vsel %vm2045, %v2698, %v2700
        %v2705 = vsel %vm2045, %v2696, %v2698
        %v2706 = vsel %vm2045, %v2702, %v2696
        %s2707 = scalar_lea.vmem [#allocation7], 71
        %v2708 = vld [vmem:[%s2707] ss:$8 sm:$0xf]
        %v2710 = vperm.slane %v2708, 0
        %v2711 = vperm.slane %v2708, 1
        %v2712 = vperm.slane %v2708, 2
        %v2713 = vperm.slane %v2708, 3
        %v2718 = vmul.f32 %v2705, %v2710
        %v2719 = vmul.f32 %v2704, %v2711
        %v2720 = vmul.f32 %v2703, %v2712
        %v2721 = vmul.f32 %v2706, %v2713
        %2722 = vst [vmem:[#allocation1] ss:$2 sm:$0xff] %v1826
        %s2723 = scalar_lea.vmem [#allocation1], 16
        %2724 = vst [vmem:[%s2723] ss:$2 sm:$0xff] %v1827
        %v2725 = vld.sshfl [vmem:[#allocation1] sm:$0xff pattern:$0x75316420]
        %v2726 = vld.sshfl [vmem:[#allocation1 + $0x8] sm:$0xff pattern:$0x75316420]
        %v2727 = vld.sshfl [vmem:[#allocation1 + $0x10] sm:$0xff pattern:$0x75316420]
        %v2728 = vld.sshfl [vmem:[#allocation1 + $0x18] sm:$0xff pattern:$0x75316420]
        %2733 = vrot.lane.b32.xlu0 %v2725, 57
        %v2734 = vpop.permute.xlu0 %2733
        %2735 = vrot.lane.b32.xlu0 %v2726, 57
        %v2736 = vpop.permute.xlu0 %2735
        %2737 = vrot.lane.b32.xlu0 %v2727, 57
        %v2738 = vpop.permute.xlu0 %2737
        %2739 = vrot.lane.b32.xlu0 %v2728, 57
        %v2740 = vpop.permute.xlu0 %2739
        %v2741 = vsel %vm2084, %v2738, %v2740
        %v2742 = vsel %vm2084, %v2736, %v2738
        %v2743 = vsel %vm2084, %v2734, %v2736
        %v2744 = vsel %vm2084, %v2740, %v2734
        %s2745 = scalar_lea.vmem [#allocation7], 96
        %v2746 = vld [vmem:[%s2745] ss:$8 sm:$0xf]
        %v2748 = vperm.slane %v2746, 0
        %v2749 = vperm.slane %v2746, 1
        %v2750 = vperm.slane %v2746, 2
        %v2751 = vperm.slane %v2746, 3
        %v2756 = vmul.f32 %v2743, %v2748
        %v2757 = vmul.f32 %v2742, %v2749
        %v2758 = vmul.f32 %v2741, %v2750
        %v2759 = vmul.f32 %v2744, %v2751
        %2760 = vst [vmem:[#allocation1] ss:$2 sm:$0xff] %v1826
        %s2761 = scalar_lea.vmem [#allocation1], 16
        %2762 = vst [vmem:[%s2761] ss:$2 sm:$0xff] %v1827
        %v2763 = vld.sshfl [vmem:[#allocation1] sm:$0xff pattern:$0x75316420]
        %v2764 = vld.sshfl [vmem:[#allocation1 + $0x8] sm:$0xff pattern:$0x75316420]
        %v2765 = vld.sshfl [vmem:[#allocation1 + $0x10] sm:$0xff pattern:$0x75316420]
        %v2766 = vld.sshfl [vmem:[#allocation1 + $0x18] sm:$0xff pattern:$0x75316420]
        %2771 = vrot.lane.b32.xlu0 %v2763, 56
        %v2772 = vpop.permute.xlu0 %2771
        %2773 = vrot.lane.b32.xlu0 %v2764, 56
        %v2774 = vpop.permute.xlu0 %2773
        %2775 = vrot.lane.b32.xlu0 %v2765, 56
        %v2776 = vpop.permute.xlu0 %2775
        %2777 = vrot.lane.b32.xlu0 %v2766, 56
        %v2778 = vpop.permute.xlu0 %2777
        %v2779 = vsel %vm2123, %v2776, %v2778
        %v2780 = vsel %vm2123, %v2774, %v2776
        %v2781 = vsel %vm2123, %v2772, %v2774
        %v2782 = vsel %vm2123, %v2778, %v2772
        %s2783 = scalar_lea.vmem [#allocation7], 97
        %v2784 = vld [vmem:[%s2783] ss:$8 sm:$0xf]
        %v2786 = vperm.slane %v2784, 0
        %v2787 = vperm.slane %v2784, 1
        %v2788 = vperm.slane %v2784, 2
        %v2789 = vperm.slane %v2784, 3
        %v2794 = vmul.f32 %v2781, %v2786
        %v2795 = vmul.f32 %v2780, %v2787
        %v2796 = vmul.f32 %v2779, %v2788
        %v2797 = vmul.f32 %v2782, %v2789
        %2798 = vst [vmem:[#allocation1] ss:$2 sm:$0xff] %v1826
        %s2799 = scalar_lea.vmem [#allocation1], 16
        %2800 = vst [vmem:[%s2799] ss:$2 sm:$0xff] %v1827
        %v2801 = vld.sshfl [vmem:[#allocation1] sm:$0xff pattern:$0x75316420]
        %v2802 = vld.sshfl [vmem:[#allocation1 + $0x8] sm:$0xff pattern:$0x75316420]
        %v2803 = vld.sshfl [vmem:[#allocation1 + $0x10] sm:$0xff pattern:$0x75316420]
        %v2804 = vld.sshfl [vmem:[#allocation1 + $0x18] sm:$0xff pattern:$0x75316420]
        %2809 = vrot.lane.b32.xlu0 %v2801, 55
        %v2810 = vpop.permute.xlu0 %2809
        %2811 = vrot.lane.b32.xlu0 %v2802, 55
        %v2812 = vpop.permute.xlu0 %2811
        %2813 = vrot.lane.b32.xlu0 %v2803, 55
        %v2814 = vpop.permute.xlu0 %2813
        %2815 = vrot.lane.b32.xlu0 %v2804, 55
        %v2816 = vpop.permute.xlu0 %2815
        %v2817 = vsel %vm2162, %v2814, %v2816
        %v2818 = vsel %vm2162, %v2812, %v2814
        %v2819 = vsel %vm2162, %v2810, %v2812
        %v2820 = vsel %vm2162, %v2816, %v2810
        %s2821 = scalar_lea.vmem [#allocation7], 98
        %v2822 = vld [vmem:[%s2821] ss:$8 sm:$0xf]
        %v2824 = vperm.slane %v2822, 0
        %v2825 = vperm.slane %v2822, 1
        %v2826 = vperm.slane %v2822, 2
        %v2827 = vperm.slane %v2822, 3
        %v2832 = vmul.f32 %v2819, %v2824
        %v2833 = vmul.f32 %v2818, %v2825
        %v2834 = vmul.f32 %v2817, %v2826
        %v2835 = vmul.f32 %v2820, %v2827
        %v2840 = vrot.slane %v1905, 6
        %v2841 = vrot.slane %v1906, 6
        %v2842 = vrot.slane %v1907, 6
        %v2843 = vrot.slane %v1908, 6
        %v2852 = vrot.slane %v1944, 4
        %v2853 = vrot.slane %v1945, 4
        %v2854 = vrot.slane %v1946, 4
        %v2855 = vrot.slane %v1947, 4
        %v2864 = vrot.slane %v1983, 2
        %v2865 = vrot.slane %v1984, 2
        %v2866 = vrot.slane %v1985, 2
        %v2867 = vrot.slane %v1986, 2
        %v2876 = vrot.slane %v2061, 6
        %v2877 = vrot.slane %v2062, 6
        %v2878 = vrot.slane %v2063, 6
        %v2879 = vrot.slane %v2064, 6
        %v2888 = vrot.slane %v2100, 4
        %v2889 = vrot.slane %v2101, 4
        %v2890 = vrot.slane %v2102, 4
        %v2891 = vrot.slane %v2103, 4
        %v2900 = vrot.slane %v2139, 2
        %v2901 = vrot.slane %v2140, 2
        %v2902 = vrot.slane %v2141, 2
        %v2903 = vrot.slane %v2142, 2
        %v2912 = vrot.slane %v2217, 6
        %v2913 = vrot.slane %v2218, 6
        %v2914 = vrot.slane %v2219, 6
        %v2915 = vrot.slane %v2220, 6
        %v2924 = vrot.slane %v2256, 4
        %v2925 = vrot.slane %v2257, 4
        %v2926 = vrot.slane %v2258, 4
        %v2927 = vrot.slane %v2259, 4
        %v2936 = vrot.slane %v2295, 2
        %v2937 = vrot.slane %v2296, 2
        %v2938 = vrot.slane %v2297, 2
        %v2939 = vrot.slane %v2298, 2
        %2944 = vst [vmem:[#allocation1] ss:$2 sm:$0xff] %v1826
        %s2945 = scalar_lea.vmem [#allocation1], 16
        %2946 = vst [vmem:[%s2945] ss:$2 sm:$0xff] %v1827
        %v2947 = vld.sshfl [vmem:[#allocation1] sm:$0xff pattern:$0x75316420]
        %v2948 = vld.sshfl [vmem:[#allocation1 + $0x8] sm:$0xff pattern:$0x75316420]
        %v2949 = vld.sshfl [vmem:[#allocation1 + $0x10] sm:$0xff pattern:$0x75316420]
        %v2950 = vld.sshfl [vmem:[#allocation1 + $0x18] sm:$0xff pattern:$0x75316420]
        %v2951 = vrot.slane %v2947, 6
        %v2952 = vrot.slane %v2948, 6
        %v2953 = vrot.slane %v2949, 6
        %v2954 = vrot.slane %v2950, 6
        %v2963 = vrot.slane %v2373, 4
        %v2964 = vrot.slane %v2374, 4
        %v2965 = vrot.slane %v2375, 4
        %v2966 = vrot.slane %v2376, 4
        %v2975 = vrot.slane %v2412, 2
        %v2976 = vrot.slane %v2413, 2
        %v2977 = vrot.slane %v2414, 2
        %v2978 = vrot.slane %v2415, 2
        %vm2983 = vcmask 1041408
        %v2984 = vsel %vm2983, %v1866, %v2840
        %v2985 = vsel %vm2983, %v1867, %v2841
        %v2986 = vsel %vm2983, %v1868, %v2842
        %v2987 = vsel %vm2983, %v1869, %v2843
        %v2988 = vsel %vm1821, %v2984, %v2852
        %v2989 = vsel %vm1821, %v2985, %v2853
        %v2990 = vsel %vm1821, %v2986, %v2854
        %v2991 = vsel %vm1821, %v2987, %v2855
        %vm2992 = vcmask 1045504
        %v2993 = vsel %vm2992, %v2988, %v2864
        %v2994 = vsel %vm2992, %v2989, %v2865
        %v2995 = vsel %vm2992, %v2990, %v2866
        %v2996 = vsel %vm2992, %v2991, %v2867
        %v2997 = vsel %vm2983, %v2022, %v2876
        %v2998 = vsel %vm2983, %v2023, %v2877
        %v2999 = vsel %vm2983, %v2024, %v2878
        %v3000 = vsel %vm2983, %v2025, %v2879
        %v3001 = vsel %vm1821, %v2997, %v2888
        %v3002 = vsel %vm1821, %v2998, %v2889
        %v3003 = vsel %vm1821, %v2999, %v2890
        %v3004 = vsel %vm1821, %v3000, %v2891
        %v3005 = vsel %vm2992, %v3001, %v2900
        %v3006 = vsel %vm2992, %v3002, %v2901
        %v3007 = vsel %vm2992, %v3003, %v2902
        %v3008 = vsel %vm2992, %v3004, %v2903
        %v3009 = vsel %vm2983, %v2178, %v2912
        %v3010 = vsel %vm2983, %v2179, %v2913
        %v3011 = vsel %vm2983, %v2180, %v2914
        %v3012 = vsel %vm2983, %v2181, %v2915
        %v3013 = vsel %vm1821, %v3009, %v2924
        %v3014 = vsel %vm1821, %v3010, %v2925
        %v3015 = vsel %vm1821, %v3011, %v2926
        %v3016 = vsel %vm1821, %v3012, %v2927
        %v3017 = vsel %vm2992, %v3013, %v2936
        %v3018 = vsel %vm2992, %v3014, %v2937
        %v3019 = vsel %vm2992, %v3015, %v2938
        %v3020 = vsel %vm2992, %v3016, %v2939
        %v3021 = vsel %vm2983, %v2334, %v2951
        %v3022 = vsel %vm2983, %v2335, %v2952
        %v3023 = vsel %vm2983, %v2336, %v2953
        %v3024 = vsel %vm2983, %v2337, %v2954
        %v3025 = vsel %vm1821, %v3021, %v2963
        %v3026 = vsel %vm1821, %v3022, %v2964
        %v3027 = vsel %vm1821, %v3023, %v2965
        %v3028 = vsel %vm1821, %v3024, %v2966
        %v3029 = vsel %vm2992, %v3025, %v2975
        %v3030 = vsel %vm2992, %v3026, %v2976
        %v3031 = vsel %vm2992, %v3027, %v2977
        %v3032 = vsel %vm2992, %v3028, %v2978
        %v3037 = vrot.slane %v2490, 6
        %v3038 = vrot.slane %v2491, 6
        %v3039 = vrot.slane %v2492, 6
        %v3040 = vrot.slane %v2493, 6
        %v3049 = vrot.slane %v2528, 4
        %v3050 = vrot.slane %v2529, 4
        %v3051 = vrot.slane %v2530, 4
        %v3052 = vrot.slane %v2531, 4
        %v3061 = vrot.slane %v2566, 2
        %v3062 = vrot.slane %v2567, 2
        %v3063 = vrot.slane %v2568, 2
        %v3064 = vrot.slane %v2569, 2
        %v3073 = vrot.slane %v2642, 6
        %v3074 = vrot.slane %v2643, 6
        %v3075 = vrot.slane %v2644, 6
        %v3076 = vrot.slane %v2645, 6
        %v3085 = vrot.slane %v2680, 4
        %v3086 = vrot.slane %v2681, 4
        %v3087 = vrot.slane %v2682, 4
        %v3088 = vrot.slane %v2683, 4
        %v3097 = vrot.slane %v2718, 2
        %v3098 = vrot.slane %v2719, 2
        %v3099 = vrot.slane %v2720, 2
        %v3100 = vrot.slane %v2721, 2
        %v3109 = vrot.slane %v2794, 6
        %v3110 = vrot.slane %v2795, 6
        %v3111 = vrot.slane %v2796, 6
        %v3112 = vrot.slane %v2797, 6
        %v3121 = vrot.slane %v2832, 4
        %v3122 = vrot.slane %v2833, 4
        %v3123 = vrot.slane %v2834, 4
        %v3124 = vrot.slane %v2835, 4
        %v3129 = vsel %vm2983, %v2451, %v3037
        %v3130 = vsel %vm2983, %v2452, %v3038
        %v3131 = vsel %vm2983, %v2453, %v3039
        %v3132 = vsel %vm2983, %v2454, %v3040
        %v3133 = vsel %vm1821, %v3129, %v3049
        %v3134 = vsel %vm1821, %v3130, %v3050
        %v3135 = vsel %vm1821, %v3131, %v3051
        %v3136 = vsel %vm1821, %v3132, %v3052
        %v3137 = vsel %vm2992, %v3133, %v3061
        %v3138 = vsel %vm2992, %v3134, %v3062
        %v3139 = vsel %vm2992, %v3135, %v3063
        %v3140 = vsel %vm2992, %v3136, %v3064
        %v3141 = vsel %vm2983, %v2604, %v3073
        %v3142 = vsel %vm2983, %v2605, %v3074
        %v3143 = vsel %vm2983, %v2606, %v3075
        %v3144 = vsel %vm2983, %v2607, %v3076
        %v3145 = vsel %vm1821, %v3141, %v3085
        %v3146 = vsel %vm1821, %v3142, %v3086
        %v3147 = vsel %vm1821, %v3143, %v3087
        %v3148 = vsel %vm1821, %v3144, %v3088
        %v3149 = vsel %vm2992, %v3145, %v3097
        %v3150 = vsel %vm2992, %v3146, %v3098
        %v3151 = vsel %vm2992, %v3147, %v3099
        %v3152 = vsel %vm2992, %v3148, %v3100
        %v3153 = vsel %vm2983, %v2756, %v3109
        %v3154 = vsel %vm2983, %v2757, %v3110
        %v3155 = vsel %vm2983, %v2758, %v3111
        %v3156 = vsel %vm2983, %v2759, %v3112
        %v3157 = vsel %vm1821, %v3153, %v3121
        %v3158 = vsel %vm1821, %v3154, %v3122
        %v3159 = vsel %vm1821, %v3155, %v3123
        %v3160 = vsel %vm1821, %v3156, %v3124
        %v3161 = vsel %vm2992, %v3157, 0.0
        %v3162 = vsel %vm2992, %v3158, 0.0
        %v3163 = vsel %vm2992, %v3159, 0.0
        %v3164 = vsel %vm2992, %v3160, 0.0
        %v3165 = vld [vmem:[#allocation8] sm:$0xff]
        %3166 = vmatpush.msra.mxu0 0.0
        %3167 = vmatpush.msra.mxu0 0.0
        %3168 = vmatpush.msra.mxu0 0.0
        %3169 = vmatpush.msra.mxu0 0.0
        %3170 = vmatpush.msra.mxu0 0.0
        %3171 = vmatpush.msra.mxu0 0.0
        %3172 = vmatpush.msra.mxu0 0.0
        %3173 = vmatpush.msra.mxu0 0.0
        %3174 = vmatpush.msra.mxu0 0.0
        %v3175 = vand.u32 %v3161, 4294901760
        %3176 = vmatpush.msra.mxu0 %v3175
        %v3177 = vand.u32 %v3149, 4294901760
        %3178 = vmatpush.msra.mxu0 %v3177
        %v3179 = vand.u32 %v3137, 4294901760
        %3180 = vmatpush.msra.mxu0 %v3179
        %v3181 = vand.u32 %v3029, 4294901760
        %3182 = vmatpush.msra.mxu0 %v3181
        %v3183 = vand.u32 %v3017, 4294901760
        %3184 = vmatpush.msra.mxu0 %v3183
        %v3185 = vand.u32 %v3005, 4294901760
        %3186 = vmatpush.msra.mxu0 %v3185
        %v3187 = vand.u32 %v2993, 4294901760
        %3188 = vmatpush.msra.mxu0 %v3187
        %v3189 = vand.u32 %v3165, 4294901760
        %v3190 = vsub.f32 %v3165, %v3189
        %v3191 = vand.u32 %v3190, 4294901760
        %v3192 = vsub.f32 %v3190, %v3191
        %v3193 = vand.u32 %v3192, 4294901760
        %3194 = vmatmul.f32.gmra.mxu0 %v3193
        %v3195 = vpop.f32.mrf.mxu0
        %v3196 = vadd.f32 0.0, %v3195
        %3197 = vdwg.mxu0
        %3198 = vmatpush.msra.mxu0 0.0
        %3199 = vmatpush.msra.mxu0 0.0
        %3200 = vmatpush.msra.mxu0 0.0
        %3201 = vmatpush.msra.mxu0 0.0
        %3202 = vmatpush.msra.mxu0 0.0
        %3203 = vmatpush.msra.mxu0 0.0
        %3204 = vmatpush.msra.mxu0 0.0
        %3205 = vmatpush.msra.mxu0 0.0
        %3206 = vmatpush.msra.mxu0 0.0
        %v3207 = vand.u32 %v3161, 4294901760
        %v3208 = vsub.f32 %v3161, %v3207
        %v3209 = vand.u32 %v3208, 4294901760
        %v3210 = vsub.f32 %v3208, %v3209
        %v3211 = vand.u32 %v3210, 4294901760
        %3212 = vmatpush.msra.mxu0 %v3211
        %v3213 = vand.u32 %v3149, 4294901760
        %v3214 = vsub.f32 %v3149, %v3213
        %v3215 = vand.u32 %v3214, 4294901760
        %v3216 = vsub.f32 %v3214, %v3215
        %v3217 = vand.u32 %v3216, 4294901760
        %3218 = vmatpush.msra.mxu0 %v3217
        %v3219 = vand.u32 %v3137, 4294901760
        %v3220 = vsub.f32 %v3137, %v3219
        %v3221 = vand.u32 %v3220, 4294901760
        %v3222 = vsub.f32 %v3220, %v3221
        %v3223 = vand.u32 %v3222, 4294901760
        %3224 = vmatpush.msra.mxu0 %v3223
        %v3225 = vand.u32 %v3029, 4294901760
        %v3226 = vsub.f32 %v3029, %v3225
        %v3227 = vand.u32 %v3226, 4294901760
        %v3228 = vsub.f32 %v3226, %v3227
        %v3229 = vand.u32 %v3228, 4294901760
        %3230 = vmatpush.msra.mxu0 %v3229
        %v3231 = vand.u32 %v3017, 4294901760
        %v3232 = vsub.f32 %v3017, %v3231
        %v3233 = vand.u32 %v3232, 4294901760
        %v3234 = vsub.f32 %v3232, %v3233
        %v3235 = vand.u32 %v3234, 4294901760
        %3236 = vmatpush.msra.mxu0 %v3235
        %v3237 = vand.u32 %v3005, 4294901760
        %v3238 = vsub.f32 %v3005, %v3237
        %v3239 = vand.u32 %v3238, 4294901760
        %v3240 = vsub.f32 %v3238, %v3239
        %v3241 = vand.u32 %v3240, 4294901760
        %3242 = vmatpush.msra.mxu0 %v3241
        %v3243 = vand.u32 %v2993, 4294901760
        %v3244 = vsub.f32 %v2993, %v3243
        %v3245 = vand.u32 %v3244, 4294901760
        %v3246 = vsub.f32 %v3244, %v3245
        %v3247 = vand.u32 %v3246, 4294901760
        %3248 = vmatpush.msra.mxu0 %v3247
        %v3249 = vand.u32 %v3165, 4294901760
        %3250 = vmatmul.f32.gmra.mxu0 %v3249
        %v3251 = vpop.f32.mrf.mxu0
        %v3252 = vadd.f32 %v3196, %v3251
        %3253 = vdwg.mxu0
        %3254 = vmatpush.msra.mxu0 0.0
        %3255 = vmatpush.msra.mxu0 0.0
        %3256 = vmatpush.msra.mxu0 0.0
        %3257 = vmatpush.msra.mxu0 0.0
        %3258 = vmatpush.msra.mxu0 0.0
        %3259 = vmatpush.msra.mxu0 0.0
        %3260 = vmatpush.msra.mxu0 0.0
        %3261 = vmatpush.msra.mxu0 0.0
        %3262 = vmatpush.msra.mxu0 0.0
        %v3263 = vand.u32 %v3161, 4294901760
        %v3264 = vsub.f32 %v3161, %v3263
        %3265 = vmatpush.msra.mxu0 %v3264
        %v3266 = vand.u32 %v3149, 4294901760
        %v3267 = vsub.f32 %v3149, %v3266
        %3268 = vmatpush.msra.mxu0 %v3267
        %v3269 = vand.u32 %v3137, 4294901760
        %v3270 = vsub.f32 %v3137, %v3269
        %3271 = vmatpush.msra.mxu0 %v3270
        %v3272 = vand.u32 %v3029, 4294901760
        %v3273 = vsub.f32 %v3029, %v3272
        %3274 = vmatpush.msra.mxu0 %v3273
        %v3275 = vand.u32 %v3017, 4294901760
        %v3276 = vsub.f32 %v3017, %v3275
        %3277 = vmatpush.msra.mxu0 %v3276
        %v3278 = vand.u32 %v3005, 4294901760
        %v3279 = vsub.f32 %v3005, %v3278
        %3280 = vmatpush.msra.mxu0 %v3279
        %v3281 = vand.u32 %v2993, 4294901760
        %v3282 = vsub.f32 %v2993, %v3281
        %3283 = vmatpush.msra.mxu0 %v3282
        %v3284 = vand.u32 %v3165, 4294901760
        %v3285 = vsub.f32 %v3165, %v3284
        %3286 = vmatmul.f32.gmra.mxu0 %v3285
        %v3287 = vpop.f32.mrf.mxu0
        %v3288 = vadd.f32 %v3252, %v3287
        %3289 = vdwg.mxu0
        %3290 = vmatpush.msra.mxu0 0.0
        %3291 = vmatpush.msra.mxu0 0.0
        %3292 = vmatpush.msra.mxu0 0.0
        %3293 = vmatpush.msra.mxu0 0.0
        %3294 = vmatpush.msra.mxu0 0.0
        %3295 = vmatpush.msra.mxu0 0.0
        %3296 = vmatpush.msra.mxu0 0.0
        %3297 = vmatpush.msra.mxu0 0.0
        %3298 = vmatpush.msra.mxu0 0.0
        %v3299 = vand.u32 %v3161, 4294901760
        %3300 = vmatpush.msra.mxu0 %v3299
        %v3301 = vand.u32 %v3149, 4294901760
        %3302 = vmatpush.msra.mxu0 %v3301
        %v3303 = vand.u32 %v3137, 4294901760
        %3304 = vmatpush.msra.mxu0 %v3303
        %v3305 = vand.u32 %v3029, 4294901760
        %3306 = vmatpush.msra.mxu0 %v3305
        %v3307 = vand.u32 %v3017, 4294901760
        %3308 = vmatpush.msra.mxu0 %v3307
        %v3309 = vand.u32 %v3005, 4294901760
        %3310 = vmatpush.msra.mxu0 %v3309
        %v3311 = vand.u32 %v2993, 4294901760
        %3312 = vmatpush.msra.mxu0 %v3311
        %v3313 = vand.u32 %v3165, 4294901760
        %v3314 = vsub.f32 %v3165, %v3313
        %v3315 = vand.u32 %v3314, 4294901760
        %3316 = vmatmul.f32.gmra.mxu0 %v3315
        %v3317 = vpop.f32.mrf.mxu0
        %v3318 = vadd.f32 %v3288, %v3317
        %3319 = vdwg.mxu0
        %3320 = vmatpush.msra.mxu0 0.0
        %3321 = vmatpush.msra.mxu0 0.0
        %3322 = vmatpush.msra.mxu0 0.0
        %3323 = vmatpush.msra.mxu0 0.0
        %3324 = vmatpush.msra.mxu0 0.0
        %3325 = vmatpush.msra.mxu0 0.0
        %3326 = vmatpush.msra.mxu0 0.0
        %3327 = vmatpush.msra.mxu0 0.0
        %3328 = vmatpush.msra.mxu0 0.0
        %v3329 = vand.u32 %v3161, 4294901760
        %v3330 = vsub.f32 %v3161, %v3329
        %v3331 = vand.u32 %v3330, 4294901760
        %3332 = vmatpush.msra.mxu0 %v3331
        %v3333 = vand.u32 %v3149, 4294901760
        %v3334 = vsub.f32 %v3149, %v3333
        %v3335 = vand.u32 %v3334, 4294901760
        %3336 = vmatpush.msra.mxu0 %v3335
        %v3337 = vand.u32 %v3137, 4294901760
        %v3338 = vsub.f32 %v3137, %v3337
        %v3339 = vand.u32 %v3338, 4294901760
        %3340 = vmatpush.msra.mxu0 %v3339
        %v3341 = vand.u32 %v3029, 4294901760
        %v3342 = vsub.f32 %v3029, %v3341
        %v3343 = vand.u32 %v3342, 4294901760
        %3344 = vmatpush.msra.mxu0 %v3343
        %v3345 = vand.u32 %v3017, 4294901760
        %v3346 = vsub.f32 %v3017, %v3345
        %v3347 = vand.u32 %v3346, 4294901760
        %3348 = vmatpush.msra.mxu0 %v3347
        %v3349 = vand.u32 %v3005, 4294901760
        %v3350 = vsub.f32 %v3005, %v3349
        %v3351 = vand.u32 %v3350, 4294901760
        %3352 = vmatpush.msra.mxu0 %v3351
        %v3353 = vand.u32 %v2993, 4294901760
        %v3354 = vsub.f32 %v2993, %v3353
        %v3355 = vand.u32 %v3354, 4294901760
        %3356 = vmatpush.msra.mxu0 %v3355
        %v3357 = vand.u32 %v3165, 4294901760
        %3358 = vmatmul.f32.gmra.mxu0 %v3357
        %v3359 = vpop.f32.mrf.mxu0
        %v3360 = vadd.f32 %v3318, %v3359
        %3361 = vdwg.mxu0
        %3362 = vmatpush.msra.mxu0 0.0
        %3363 = vmatpush.msra.mxu0 0.0
        %3364 = vmatpush.msra.mxu0 0.0
        %3365 = vmatpush.msra.mxu0 0.0
        %3366 = vmatpush.msra.mxu0 0.0
        %3367 = vmatpush.msra.mxu0 0.0
        %3368 = vmatpush.msra.mxu0 0.0
        %3369 = vmatpush.msra.mxu0 0.0
        %3370 = vmatpush.msra.mxu0 0.0
        %v3371 = vand.u32 %v3161, 4294901760
        %3372 = vmatpush.msra.mxu0 %v3371
        %v3373 = vand.u32 %v3149, 4294901760
        %3374 = vmatpush.msra.mxu0 %v3373
        %v3375 = vand.u32 %v3137, 4294901760
        %3376 = vmatpush.msra.mxu0 %v3375
        %v3377 = vand.u32 %v3029, 4294901760
        %3378 = vmatpush.msra.mxu0 %v3377
        %v3379 = vand.u32 %v3017, 4294901760
        %3380 = vmatpush.msra.mxu0 %v3379
        %v3381 = vand.u32 %v3005, 4294901760
        %3382 = vmatpush.msra.mxu0 %v3381
        %v3383 = vand.u32 %v2993, 4294901760
        %3384 = vmatpush.msra.mxu0 %v3383
        %v3385 = vand.u32 %v3165, 4294901760
        %3386 = vmatmul.f32.gmra.mxu0 %v3385
        %v3387 = vpop.f32.mrf.mxu0
        %v3388 = vadd.f32 %v3360, %v3387
        %3389 = vdwg.mxu0
        %3390 = vmatpush.msra.mxu0 0.0
        %3391 = vmatpush.msra.mxu0 0.0
        %3392 = vmatpush.msra.mxu0 0.0
        %3393 = vmatpush.msra.mxu0 0.0
        %3394 = vmatpush.msra.mxu0 0.0
        %3395 = vmatpush.msra.mxu0 0.0
        %3396 = vmatpush.msra.mxu0 0.0
        %3397 = vmatpush.msra.mxu0 0.0
        %3398 = vmatpush.msra.mxu0 0.0
        %v3399 = vand.u32 %v3162, 4294901760
        %3400 = vmatpush.msra.mxu0 %v3399
        %v3401 = vand.u32 %v3150, 4294901760
        %3402 = vmatpush.msra.mxu0 %v3401
        %v3403 = vand.u32 %v3138, 4294901760
        %3404 = vmatpush.msra.mxu0 %v3403
        %v3405 = vand.u32 %v3030, 4294901760
        %3406 = vmatpush.msra.mxu0 %v3405
        %v3407 = vand.u32 %v3018, 4294901760
        %3408 = vmatpush.msra.mxu0 %v3407
        %v3409 = vand.u32 %v3006, 4294901760
        %3410 = vmatpush.msra.mxu0 %v3409
        %v3411 = vand.u32 %v2994, 4294901760
        %3412 = vmatpush.msra.mxu0 %v3411
        %v3413 = vand.u32 %v3165, 4294901760
        %v3414 = vsub.f32 %v3165, %v3413
        %v3415 = vand.u32 %v3414, 4294901760
        %v3416 = vsub.f32 %v3414, %v3415
        %v3417 = vand.u32 %v3416, 4294901760
        %3418 = vmatmul.f32.gmra.mxu0 %v3417
        %v3419 = vpop.f32.mrf.mxu0
        %v3420 = vadd.f32 0.0, %v3419
        %3421 = vdwg.mxu0
        %3422 = vmatpush.msra.mxu0 0.0
        %3423 = vmatpush.msra.mxu0 0.0
        %3424 = vmatpush.msra.mxu0 0.0
        %3425 = vmatpush.msra.mxu0 0.0
        %3426 = vmatpush.msra.mxu0 0.0
        %3427 = vmatpush.msra.mxu0 0.0
        %3428 = vmatpush.msra.mxu0 0.0
        %3429 = vmatpush.msra.mxu0 0.0
        %3430 = vmatpush.msra.mxu0 0.0
        %v3431 = vand.u32 %v3162, 4294901760
        %v3432 = vsub.f32 %v3162, %v3431
        %v3433 = vand.u32 %v3432, 4294901760
        %v3434 = vsub.f32 %v3432, %v3433
        %v3435 = vand.u32 %v3434, 4294901760
        %3436 = vmatpush.msra.mxu0 %v3435
        %v3437 = vand.u32 %v3150, 4294901760
        %v3438 = vsub.f32 %v3150, %v3437
        %v3439 = vand.u32 %v3438, 4294901760
        %v3440 = vsub.f32 %v3438, %v3439
        %v3441 = vand.u32 %v3440, 4294901760
        %3442 = vmatpush.msra.mxu0 %v3441
        %v3443 = vand.u32 %v3138, 4294901760
        %v3444 = vsub.f32 %v3138, %v3443
        %v3445 = vand.u32 %v3444, 4294901760
        %v3446 = vsub.f32 %v3444, %v3445
        %v3447 = vand.u32 %v3446, 4294901760
        %3448 = vmatpush.msra.mxu0 %v3447
        %v3449 = vand.u32 %v3030, 4294901760
        %v3450 = vsub.f32 %v3030, %v3449
        %v3451 = vand.u32 %v3450, 4294901760
        %v3452 = vsub.f32 %v3450, %v3451
        %v3453 = vand.u32 %v3452, 4294901760
        %3454 = vmatpush.msra.mxu0 %v3453
        %v3455 = vand.u32 %v3018, 4294901760
        %v3456 = vsub.f32 %v3018, %v3455
        %v3457 = vand.u32 %v3456, 4294901760
        %v3458 = vsub.f32 %v3456, %v3457
        %v3459 = vand.u32 %v3458, 4294901760
        %3460 = vmatpush.msra.mxu0 %v3459
        %v3461 = vand.u32 %v3006, 4294901760
        %v3462 = vsub.f32 %v3006, %v3461
        %v3463 = vand.u32 %v3462, 4294901760
        %v3464 = vsub.f32 %v3462, %v3463
        %v3465 = vand.u32 %v3464, 4294901760
        %3466 = vmatpush.msra.mxu0 %v3465
        %v3467 = vand.u32 %v2994, 4294901760
        %v3468 = vsub.f32 %v2994, %v3467
        %v3469 = vand.u32 %v3468, 4294901760
        %v3470 = vsub.f32 %v3468, %v3469
        %v3471 = vand.u32 %v3470, 4294901760
        %3472 = vmatpush.msra.mxu0 %v3471
        %v3473 = vand.u32 %v3165, 4294901760
        %3474 = vmatmul.f32.gmra.mxu0 %v3473
        %v3475 = vpop.f32.mrf.mxu0
        %v3476 = vadd.f32 %v3420, %v3475
        %3477 = vdwg.mxu0
        %3478 = vmatpush.msra.mxu0 0.0
        %3479 = vmatpush.msra.mxu0 0.0
        %3480 = vmatpush.msra.mxu0 0.0
        %3481 = vmatpush.msra.mxu0 0.0
        %3482 = vmatpush.msra.mxu0 0.0
        %3483 = vmatpush.msra.mxu0 0.0
        %3484 = vmatpush.msra.mxu0 0.0
        %3485 = vmatpush.msra.mxu0 0.0
        %3486 = vmatpush.msra.mxu0 0.0
        %v3487 = vand.u32 %v3162, 4294901760
        %v3488 = vsub.f32 %v3162, %v3487
        %3489 = vmatpush.msra.mxu0 %v3488
        %v3490 = vand.u32 %v3150, 4294901760
        %v3491 = vsub.f32 %v3150, %v3490
        %3492 = vmatpush.msra.mxu0 %v3491
        %v3493 = vand.u32 %v3138, 4294901760
        %v3494 = vsub.f32 %v3138, %v3493
        %3495 = vmatpush.msra.mxu0 %v3494
        %v3496 = vand.u32 %v3030, 4294901760
        %v3497 = vsub.f32 %v3030, %v3496
        %3498 = vmatpush.msra.mxu0 %v3497
        %v3499 = vand.u32 %v3018, 4294901760
        %v3500 = vsub.f32 %v3018, %v3499
        %3501 = vmatpush.msra.mxu0 %v3500
        %v3502 = vand.u32 %v3006, 4294901760
        %v3503 = vsub.f32 %v3006, %v3502
        %3504 = vmatpush.msra.mxu0 %v3503
        %v3505 = vand.u32 %v2994, 4294901760
        %v3506 = vsub.f32 %v2994, %v3505
        %3507 = vmatpush.msra.mxu0 %v3506
        %v3508 = vand.u32 %v3165, 4294901760
        %v3509 = vsub.f32 %v3165, %v3508
        %3510 = vmatmul.f32.gmra.mxu0 %v3509
        %v3511 = vpop.f32.mrf.mxu0
        %v3512 = vadd.f32 %v3476, %v3511
        %3513 = vdwg.mxu0
        %3514 = vmatpush.msra.mxu0 0.0
        %3515 = vmatpush.msra.mxu0 0.0
        %3516 = vmatpush.msra.mxu0 0.0
        %3517 = vmatpush.msra.mxu0 0.0
        %3518 = vmatpush.msra.mxu0 0.0
        %3519 = vmatpush.msra.mxu0 0.0
        %3520 = vmatpush.msra.mxu0 0.0
        %3521 = vmatpush.msra.mxu0 0.0
        %3522 = vmatpush.msra.mxu0 0.0
        %v3523 = vand.u32 %v3162, 4294901760
        %3524 = vmatpush.msra.mxu0 %v3523
        %v3525 = vand.u32 %v3150, 4294901760
        %3526 = vmatpush.msra.mxu0 %v3525
        %v3527 = vand.u32 %v3138, 4294901760
        %3528 = vmatpush.msra.mxu0 %v3527
        %v3529 = vand.u32 %v3030, 4294901760
        %3530 = vmatpush.msra.mxu0 %v3529
        %v3531 = vand.u32 %v3018, 4294901760
        %3532 = vmatpush.msra.mxu0 %v3531
        %v3533 = vand.u32 %v3006, 4294901760
        %3534 = vmatpush.msra.mxu0 %v3533
        %v3535 = vand.u32 %v2994, 4294901760
        %3536 = vmatpush.msra.mxu0 %v3535
        %v3537 = vand.u32 %v3165, 4294901760
        %v3538 = vsub.f32 %v3165, %v3537
        %v3539 = vand.u32 %v3538, 4294901760
        %3540 = vmatmul.f32.gmra.mxu0 %v3539
        %v3541 = vpop.f32.mrf.mxu0
        %v3542 = vadd.f32 %v3512, %v3541
        %3543 = vdwg.mxu0
        %3544 = vmatpush.msra.mxu0 0.0
        %3545 = vmatpush.msra.mxu0 0.0
        %3546 = vmatpush.msra.mxu0 0.0
        %3547 = vmatpush.msra.mxu0 0.0
        %3548 = vmatpush.msra.mxu0 0.0
        %3549 = vmatpush.msra.mxu0 0.0
        %3550 = vmatpush.msra.mxu0 0.0
        %3551 = vmatpush.msra.mxu0 0.0
        %3552 = vmatpush.msra.mxu0 0.0
        %v3553 = vand.u32 %v3162, 4294901760
        %v3554 = vsub.f32 %v3162, %v3553
        %v3555 = vand.u32 %v3554, 4294901760
        %3556 = vmatpush.msra.mxu0 %v3555
        %v3557 = vand.u32 %v3150, 4294901760
        %v3558 = vsub.f32 %v3150, %v3557
        %v3559 = vand.u32 %v3558, 4294901760
        %3560 = vmatpush.msra.mxu0 %v3559
        %v3561 = vand.u32 %v3138, 4294901760
        %v3562 = vsub.f32 %v3138, %v3561
        %v3563 = vand.u32 %v3562, 4294901760
        %3564 = vmatpush.msra.mxu0 %v3563
        %v3565 = vand.u32 %v3030, 4294901760
        %v3566 = vsub.f32 %v3030, %v3565
        %v3567 = vand.u32 %v3566, 4294901760
        %3568 = vmatpush.msra.mxu0 %v3567
        %v3569 = vand.u32 %v3018, 4294901760
        %v3570 = vsub.f32 %v3018, %v3569
        %v3571 = vand.u32 %v3570, 4294901760
        %3572 = vmatpush.msra.mxu0 %v3571
        %v3573 = vand.u32 %v3006, 4294901760
        %v3574 = vsub.f32 %v3006, %v3573
        %v3575 = vand.u32 %v3574, 4294901760
        %3576 = vmatpush.msra.mxu0 %v3575
        %v3577 = vand.u32 %v2994, 4294901760
        %v3578 = vsub.f32 %v2994, %v3577
        %v3579 = vand.u32 %v3578, 4294901760
        %3580 = vmatpush.msra.mxu0 %v3579
        %v3581 = vand.u32 %v3165, 4294901760
        %3582 = vmatmul.f32.gmra.mxu0 %v3581
        %v3583 = vpop.f32.mrf.mxu0
        %v3584 = vadd.f32 %v3542, %v3583
        %3585 = vdwg.mxu0
        %3586 = vmatpush.msra.mxu0 0.0
        %3587 = vmatpush.msra.mxu0 0.0
        %3588 = vmatpush.msra.mxu0 0.0
        %3589 = vmatpush.msra.mxu0 0.0
        %3590 = vmatpush.msra.mxu0 0.0
        %3591 = vmatpush.msra.mxu0 0.0
        %3592 = vmatpush.msra.mxu0 0.0
        %3593 = vmatpush.msra.mxu0 0.0
        %3594 = vmatpush.msra.mxu0 0.0
        %v3595 = vand.u32 %v3162, 4294901760
        %3596 = vmatpush.msra.mxu0 %v3595
        %v3597 = vand.u32 %v3150, 4294901760
        %3598 = vmatpush.msra.mxu0 %v3597
        %v3599 = vand.u32 %v3138, 4294901760
        %3600 = vmatpush.msra.mxu0 %v3599
        %v3601 = vand.u32 %v3030, 4294901760
        %3602 = vmatpush.msra.mxu0 %v3601
        %v3603 = vand.u32 %v3018, 4294901760
        %3604 = vmatpush.msra.mxu0 %v3603
        %v3605 = vand.u32 %v3006, 4294901760
        %3606 = vmatpush.msra.mxu0 %v3605
        %v3607 = vand.u32 %v2994, 4294901760
        %3608 = vmatpush.msra.mxu0 %v3607
        %v3609 = vand.u32 %v3165, 4294901760
        %3610 = vmatmul.f32.gmra.mxu0 %v3609
        %v3611 = vpop.f32.mrf.mxu0
        %v3612 = vadd.f32 %v3584, %v3611
        %3613 = vdwg.mxu0
        %3614 = vmatpush.msra.mxu0 0.0
        %3615 = vmatpush.msra.mxu0 0.0
        %3616 = vmatpush.msra.mxu0 0.0
        %3617 = vmatpush.msra.mxu0 0.0
        %3618 = vmatpush.msra.mxu0 0.0
        %3619 = vmatpush.msra.mxu0 0.0
        %3620 = vmatpush.msra.mxu0 0.0
        %3621 = vmatpush.msra.mxu0 0.0
        %3622 = vmatpush.msra.mxu0 0.0
        %v3623 = vand.u32 %v3163, 4294901760
        %3624 = vmatpush.msra.mxu0 %v3623
        %v3625 = vand.u32 %v3151, 4294901760
        %3626 = vmatpush.msra.mxu0 %v3625
        %v3627 = vand.u32 %v3139, 4294901760
        %3628 = vmatpush.msra.mxu0 %v3627
        %v3629 = vand.u32 %v3031, 4294901760
        %3630 = vmatpush.msra.mxu0 %v3629
        %v3631 = vand.u32 %v3019, 4294901760
        %3632 = vmatpush.msra.mxu0 %v3631
        %v3633 = vand.u32 %v3007, 4294901760
        %3634 = vmatpush.msra.mxu0 %v3633
        %v3635 = vand.u32 %v2995, 4294901760
        %3636 = vmatpush.msra.mxu0 %v3635
        %v3637 = vand.u32 %v3165, 4294901760
        %v3638 = vsub.f32 %v3165, %v3637
        %v3639 = vand.u32 %v3638, 4294901760
        %v3640 = vsub.f32 %v3638, %v3639
        %v3641 = vand.u32 %v3640, 4294901760
        %3642 = vmatmul.f32.gmra.mxu0 %v3641
        %v3643 = vpop.f32.mrf.mxu0
        %v3644 = vadd.f32 0.0, %v3643
        %3645 = vdwg.mxu0
        %3646 = vmatpush.msra.mxu0 0.0
        %3647 = vmatpush.msra.mxu0 0.0
        %3648 = vmatpush.msra.mxu0 0.0
        %3649 = vmatpush.msra.mxu0 0.0
        %3650 = vmatpush.msra.mxu0 0.0
        %3651 = vmatpush.msra.mxu0 0.0
        %3652 = vmatpush.msra.mxu0 0.0
        %3653 = vmatpush.msra.mxu0 0.0
        %3654 = vmatpush.msra.mxu0 0.0
        %v3655 = vand.u32 %v3163, 4294901760
        %v3656 = vsub.f32 %v3163, %v3655
        %v3657 = vand.u32 %v3656, 4294901760
        %v3658 = vsub.f32 %v3656, %v3657
        %v3659 = vand.u32 %v3658, 4294901760
        %3660 = vmatpush.msra.mxu0 %v3659
        %v3661 = vand.u32 %v3151, 4294901760
        %v3662 = vsub.f32 %v3151, %v3661
        %v3663 = vand.u32 %v3662, 4294901760
        %v3664 = vsub.f32 %v3662, %v3663
        %v3665 = vand.u32 %v3664, 4294901760
        %3666 = vmatpush.msra.mxu0 %v3665
        %v3667 = vand.u32 %v3139, 4294901760
        %v3668 = vsub.f32 %v3139, %v3667
        %v3669 = vand.u32 %v3668, 4294901760
        %v3670 = vsub.f32 %v3668, %v3669
        %v3671 = vand.u32 %v3670, 4294901760
        %3672 = vmatpush.msra.mxu0 %v3671
        %v3673 = vand.u32 %v3031, 4294901760
        %v3674 = vsub.f32 %v3031, %v3673
        %v3675 = vand.u32 %v3674, 4294901760
        %v3676 = vsub.f32 %v3674, %v3675
        %v3677 = vand.u32 %v3676, 4294901760
        %3678 = vmatpush.msra.mxu0 %v3677
        %v3679 = vand.u32 %v3019, 4294901760
        %v3680 = vsub.f32 %v3019, %v3679
        %v3681 = vand.u32 %v3680, 4294901760
        %v3682 = vsub.f32 %v3680, %v3681
        %v3683 = vand.u32 %v3682, 4294901760
        %3684 = vmatpush.msra.mxu0 %v3683
        %v3685 = vand.u32 %v3007, 4294901760
        %v3686 = vsub.f32 %v3007, %v3685
        %v3687 = vand.u32 %v3686, 4294901760
        %v3688 = vsub.f32 %v3686, %v3687
        %v3689 = vand.u32 %v3688, 4294901760
        %3690 = vmatpush.msra.mxu0 %v3689
        %v3691 = vand.u32 %v2995, 4294901760
        %v3692 = vsub.f32 %v2995, %v3691
        %v3693 = vand.u32 %v3692, 4294901760
        %v3694 = vsub.f32 %v3692, %v3693
        %v3695 = vand.u32 %v3694, 4294901760
        %3696 = vmatpush.msra.mxu0 %v3695
        %v3697 = vand.u32 %v3165, 4294901760
        %3698 = vmatmul.f32.gmra.mxu0 %v3697
        %v3699 = vpop.f32.mrf.mxu0
        %v3700 = vadd.f32 %v3644, %v3699
        %3701 = vdwg.mxu0
        %3702 = vmatpush.msra.mxu0 0.0
        %3703 = vmatpush.msra.mxu0 0.0
        %3704 = vmatpush.msra.mxu0 0.0
        %3705 = vmatpush.msra.mxu0 0.0
        %3706 = vmatpush.msra.mxu0 0.0
        %3707 = vmatpush.msra.mxu0 0.0
        %3708 = vmatpush.msra.mxu0 0.0
        %3709 = vmatpush.msra.mxu0 0.0
        %3710 = vmatpush.msra.mxu0 0.0
        %v3711 = vand.u32 %v3163, 4294901760
        %v3712 = vsub.f32 %v3163, %v3711
        %3713 = vmatpush.msra.mxu0 %v3712
        %v3714 = vand.u32 %v3151, 4294901760
        %v3715 = vsub.f32 %v3151, %v3714
        %3716 = vmatpush.msra.mxu0 %v3715
        %v3717 = vand.u32 %v3139, 4294901760
        %v3718 = vsub.f32 %v3139, %v3717
        %3719 = vmatpush.msra.mxu0 %v3718
        %v3720 = vand.u32 %v3031, 4294901760
        %v3721 = vsub.f32 %v3031, %v3720
        %3722 = vmatpush.msra.mxu0 %v3721
        %v3723 = vand.u32 %v3019, 4294901760
        %v3724 = vsub.f32 %v3019, %v3723
        %3725 = vmatpush.msra.mxu0 %v3724
        %v3726 = vand.u32 %v3007, 4294901760
        %v3727 = vsub.f32 %v3007, %v3726
        %3728 = vmatpush.msra.mxu0 %v3727
        %v3729 = vand.u32 %v2995, 4294901760
        %v3730 = vsub.f32 %v2995, %v3729
        %3731 = vmatpush.msra.mxu0 %v3730
        %v3732 = vand.u32 %v3165, 4294901760
        %v3733 = vsub.f32 %v3165, %v3732
        %3734 = vmatmul.f32.gmra.mxu0 %v3733
        %v3735 = vpop.f32.mrf.mxu0
        %v3736 = vadd.f32 %v3700, %v3735
        %3737 = vdwg.mxu0
        %3738 = vmatpush.msra.mxu0 0.0
        %3739 = vmatpush.msra.mxu0 0.0
        %3740 = vmatpush.msra.mxu0 0.0
        %3741 = vmatpush.msra.mxu0 0.0
        %3742 = vmatpush.msra.mxu0 0.0
        %3743 = vmatpush.msra.mxu0 0.0
        %3744 = vmatpush.msra.mxu0 0.0
        %3745 = vmatpush.msra.mxu0 0.0
        %3746 = vmatpush.msra.mxu0 0.0
        %v3747 = vand.u32 %v3163, 4294901760
        %3748 = vmatpush.msra.mxu0 %v3747
        %v3749 = vand.u32 %v3151, 4294901760
        %3750 = vmatpush.msra.mxu0 %v3749
        %v3751 = vand.u32 %v3139, 4294901760
        %3752 = vmatpush.msra.mxu0 %v3751
        %v3753 = vand.u32 %v3031, 4294901760
        %3754 = vmatpush.msra.mxu0 %v3753
        %v3755 = vand.u32 %v3019, 4294901760
        %3756 = vmatpush.msra.mxu0 %v3755
        %v3757 = vand.u32 %v3007, 4294901760
        %3758 = vmatpush.msra.mxu0 %v3757
        %v3759 = vand.u32 %v2995, 4294901760
        %3760 = vmatpush.msra.mxu0 %v3759
        %v3761 = vand.u32 %v3165, 4294901760
        %v3762 = vsub.f32 %v3165, %v3761
        %v3763 = vand.u32 %v3762, 4294901760
        %3764 = vmatmul.f32.gmra.mxu0 %v3763
        %v3765 = vpop.f32.mrf.mxu0
        %v3766 = vadd.f32 %v3736, %v3765
        %3767 = vdwg.mxu0
        %3768 = vmatpush.msra.mxu0 0.0
        %3769 = vmatpush.msra.mxu0 0.0
        %3770 = vmatpush.msra.mxu0 0.0
        %3771 = vmatpush.msra.mxu0 0.0
        %3772 = vmatpush.msra.mxu0 0.0
        %3773 = vmatpush.msra.mxu0 0.0
        %3774 = vmatpush.msra.mxu0 0.0
        %3775 = vmatpush.msra.mxu0 0.0
        %3776 = vmatpush.msra.mxu0 0.0
        %v3777 = vand.u32 %v3163, 4294901760
        %v3778 = vsub.f32 %v3163, %v3777
        %v3779 = vand.u32 %v3778, 4294901760
        %3780 = vmatpush.msra.mxu0 %v3779
        %v3781 = vand.u32 %v3151, 4294901760
        %v3782 = vsub.f32 %v3151, %v3781
        %v3783 = vand.u32 %v3782, 4294901760
        %3784 = vmatpush.msra.mxu0 %v3783
        %v3785 = vand.u32 %v3139, 4294901760
        %v3786 = vsub.f32 %v3139, %v3785
        %v3787 = vand.u32 %v3786, 4294901760
        %3788 = vmatpush.msra.mxu0 %v3787
        %v3789 = vand.u32 %v3031, 4294901760
        %v3790 = vsub.f32 %v3031, %v3789
        %v3791 = vand.u32 %v3790, 4294901760
        %3792 = vmatpush.msra.mxu0 %v3791
        %v3793 = vand.u32 %v3019, 4294901760
        %v3794 = vsub.f32 %v3019, %v3793
        %v3795 = vand.u32 %v3794, 4294901760
        %3796 = vmatpush.msra.mxu0 %v3795
        %v3797 = vand.u32 %v3007, 4294901760
        %v3798 = vsub.f32 %v3007, %v3797
        %v3799 = vand.u32 %v3798, 4294901760
        %3800 = vmatpush.msra.mxu0 %v3799
        %v3801 = vand.u32 %v2995, 4294901760
        %v3802 = vsub.f32 %v2995, %v3801
        %v3803 = vand.u32 %v3802, 4294901760
        %3804 = vmatpush.msra.mxu0 %v3803
        %v3805 = vand.u32 %v3165, 4294901760
        %3806 = vmatmul.f32.gmra.mxu0 %v3805
        %v3807 = vpop.f32.mrf.mxu0
        %v3808 = vadd.f32 %v3766, %v3807
        %3809 = vdwg.mxu0
        %3810 = vmatpush.msra.mxu0 0.0
        %3811 = vmatpush.msra.mxu0 0.0
        %3812 = vmatpush.msra.mxu0 0.0
        %3813 = vmatpush.msra.mxu0 0.0
        %3814 = vmatpush.msra.mxu0 0.0
        %3815 = vmatpush.msra.mxu0 0.0
        %3816 = vmatpush.msra.mxu0 0.0
        %3817 = vmatpush.msra.mxu0 0.0
        %3818 = vmatpush.msra.mxu0 0.0
        %v3819 = vand.u32 %v3163, 4294901760
        %3820 = vmatpush.msra.mxu0 %v3819
        %v3821 = vand.u32 %v3151, 4294901760
        %3822 = vmatpush.msra.mxu0 %v3821
        %v3823 = vand.u32 %v3139, 4294901760
        %3824 = vmatpush.msra.mxu0 %v3823
        %v3825 = vand.u32 %v3031, 4294901760
        %3826 = vmatpush.msra.mxu0 %v3825
        %v3827 = vand.u32 %v3019, 4294901760
        %3828 = vmatpush.msra.mxu0 %v3827
        %v3829 = vand.u32 %v3007, 4294901760
        %3830 = vmatpush.msra.mxu0 %v3829
        %v3831 = vand.u32 %v2995, 4294901760
        %3832 = vmatpush.msra.mxu0 %v3831
        %v3833 = vand.u32 %v3165, 4294901760
        %3834 = vmatmul.f32.gmra.mxu0 %v3833
        %v3835 = vpop.f32.mrf.mxu0
        %v3836 = vadd.f32 %v3808, %v3835
        %3837 = vdwg.mxu0
        %3838 = vmatpush.msra.mxu0 0.0
        %3839 = vmatpush.msra.mxu0 0.0
        %3840 = vmatpush.msra.mxu0 0.0
        %3841 = vmatpush.msra.mxu0 0.0
        %3842 = vmatpush.msra.mxu0 0.0
        %3843 = vmatpush.msra.mxu0 0.0
        %3844 = vmatpush.msra.mxu0 0.0
        %3845 = vmatpush.msra.mxu0 0.0
        %3846 = vmatpush.msra.mxu0 0.0
        %v3847 = vand.u32 %v3164, 4294901760
        %3848 = vmatpush.msra.mxu0 %v3847
        %v3849 = vand.u32 %v3152, 4294901760
        %3850 = vmatpush.msra.mxu0 %v3849
        %v3851 = vand.u32 %v3140, 4294901760
        %3852 = vmatpush.msra.mxu0 %v3851
        %v3853 = vand.u32 %v3032, 4294901760
        %3854 = vmatpush.msra.mxu0 %v3853
        %v3855 = vand.u32 %v3020, 4294901760
        %3856 = vmatpush.msra.mxu0 %v3855
        %v3857 = vand.u32 %v3008, 4294901760
        %3858 = vmatpush.msra.mxu0 %v3857
        %v3859 = vand.u32 %v2996, 4294901760
        %3860 = vmatpush.msra.mxu0 %v3859
        %v3861 = vand.u32 %v3165, 4294901760
        %v3862 = vsub.f32 %v3165, %v3861
        %v3863 = vand.u32 %v3862, 4294901760
        %v3864 = vsub.f32 %v3862, %v3863
        %v3865 = vand.u32 %v3864, 4294901760
        %3866 = vmatmul.f32.gmra.mxu0 %v3865
        %v3867 = vpop.f32.mrf.mxu0
        %v3868 = vadd.f32 0.0, %v3867
        %3869 = vdwg.mxu0
        %3870 = vmatpush.msra.mxu0 0.0
        %3871 = vmatpush.msra.mxu0 0.0
        %3872 = vmatpush.msra.mxu0 0.0
        %3873 = vmatpush.msra.mxu0 0.0
        %3874 = vmatpush.msra.mxu0 0.0
        %3875 = vmatpush.msra.mxu0 0.0
        %3876 = vmatpush.msra.mxu0 0.0
        %3877 = vmatpush.msra.mxu0 0.0
        %3878 = vmatpush.msra.mxu0 0.0
        %v3879 = vand.u32 %v3164, 4294901760
        %v3880 = vsub.f32 %v3164, %v3879
        %v3881 = vand.u32 %v3880, 4294901760
        %v3882 = vsub.f32 %v3880, %v3881
        %v3883 = vand.u32 %v3882, 4294901760
        %3884 = vmatpush.msra.mxu0 %v3883
        %v3885 = vand.u32 %v3152, 4294901760
        %v3886 = vsub.f32 %v3152, %v3885
        %v3887 = vand.u32 %v3886, 4294901760
        %v3888 = vsub.f32 %v3886, %v3887
        %v3889 = vand.u32 %v3888, 4294901760
        %3890 = vmatpush.msra.mxu0 %v3889
        %v3891 = vand.u32 %v3140, 4294901760
        %v3892 = vsub.f32 %v3140, %v3891
        %v3893 = vand.u32 %v3892, 4294901760
        %v3894 = vsub.f32 %v3892, %v3893
        %v3895 = vand.u32 %v3894, 4294901760
        %3896 = vmatpush.msra.mxu0 %v3895
        %v3897 = vand.u32 %v3032, 4294901760
        %v3898 = vsub.f32 %v3032, %v3897
        %v3899 = vand.u32 %v3898, 4294901760
        %v3900 = vsub.f32 %v3898, %v3899
        %v3901 = vand.u32 %v3900, 4294901760
        %3902 = vmatpush.msra.mxu0 %v3901
        %v3903 = vand.u32 %v3020, 4294901760
        %v3904 = vsub.f32 %v3020, %v3903
        %v3905 = vand.u32 %v3904, 4294901760
        %v3906 = vsub.f32 %v3904, %v3905
        %v3907 = vand.u32 %v3906, 4294901760
        %3908 = vmatpush.msra.mxu0 %v3907
        %v3909 = vand.u32 %v3008, 4294901760
        %v3910 = vsub.f32 %v3008, %v3909
        %v3911 = vand.u32 %v3910, 4294901760
        %v3912 = vsub.f32 %v3910, %v3911
        %v3913 = vand.u32 %v3912, 4294901760
        %3914 = vmatpush.msra.mxu0 %v3913
        %v3915 = vand.u32 %v2996, 4294901760
        %v3916 = vsub.f32 %v2996, %v3915
        %v3917 = vand.u32 %v3916, 4294901760
        %v3918 = vsub.f32 %v3916, %v3917
        %v3919 = vand.u32 %v3918, 4294901760
        %3920 = vmatpush.msra.mxu0 %v3919
        %v3921 = vand.u32 %v3165, 4294901760
        %3922 = vmatmul.f32.gmra.mxu0 %v3921
        %v3923 = vpop.f32.mrf.mxu0
        %v3924 = vadd.f32 %v3868, %v3923
        %3925 = vdwg.mxu0
        %3926 = vmatpush.msra.mxu0 0.0
        %3927 = vmatpush.msra.mxu0 0.0
        %3928 = vmatpush.msra.mxu0 0.0
        %3929 = vmatpush.msra.mxu0 0.0
        %3930 = vmatpush.msra.mxu0 0.0
        %3931 = vmatpush.msra.mxu0 0.0
        %3932 = vmatpush.msra.mxu0 0.0
        %3933 = vmatpush.msra.mxu0 0.0
        %3934 = vmatpush.msra.mxu0 0.0
        %v3935 = vand.u32 %v3164, 4294901760
        %v3936 = vsub.f32 %v3164, %v3935
        %3937 = vmatpush.msra.mxu0 %v3936
        %v3938 = vand.u32 %v3152, 4294901760
        %v3939 = vsub.f32 %v3152, %v3938
        %3940 = vmatpush.msra.mxu0 %v3939
        %v3941 = vand.u32 %v3140, 4294901760
        %v3942 = vsub.f32 %v3140, %v3941
        %3943 = vmatpush.msra.mxu0 %v3942
        %v3944 = vand.u32 %v3032, 4294901760
        %v3945 = vsub.f32 %v3032, %v3944
        %3946 = vmatpush.msra.mxu0 %v3945
        %v3947 = vand.u32 %v3020, 4294901760
        %v3948 = vsub.f32 %v3020, %v3947
        %3949 = vmatpush.msra.mxu0 %v3948
        %v3950 = vand.u32 %v3008, 4294901760
        %v3951 = vsub.f32 %v3008, %v3950
        %3952 = vmatpush.msra.mxu0 %v3951
        %v3953 = vand.u32 %v2996, 4294901760
        %v3954 = vsub.f32 %v2996, %v3953
        %3955 = vmatpush.msra.mxu0 %v3954
        %v3956 = vand.u32 %v3165, 4294901760
        %v3957 = vsub.f32 %v3165, %v3956
        %3958 = vmatmul.f32.gmra.mxu0 %v3957
        %v3959 = vpop.f32.mrf.mxu0
        %v3960 = vadd.f32 %v3924, %v3959
        %3961 = vdwg.mxu0
        %3962 = vmatpush.msra.mxu0 0.0
        %3963 = vmatpush.msra.mxu0 0.0
        %3964 = vmatpush.msra.mxu0 0.0
        %3965 = vmatpush.msra.mxu0 0.0
        %3966 = vmatpush.msra.mxu0 0.0
        %3967 = vmatpush.msra.mxu0 0.0
        %3968 = vmatpush.msra.mxu0 0.0
        %3969 = vmatpush.msra.mxu0 0.0
        %3970 = vmatpush.msra.mxu0 0.0
        %v3971 = vand.u32 %v3164, 4294901760
        %3972 = vmatpush.msra.mxu0 %v3971
        %v3973 = vand.u32 %v3152, 4294901760
        %3974 = vmatpush.msra.mxu0 %v3973
        %v3975 = vand.u32 %v3140, 4294901760
        %3976 = vmatpush.msra.mxu0 %v3975
        %v3977 = vand.u32 %v3032, 4294901760
        %3978 = vmatpush.msra.mxu0 %v3977
        %v3979 = vand.u32 %v3020, 4294901760
        %3980 = vmatpush.msra.mxu0 %v3979
        %v3981 = vand.u32 %v3008, 4294901760
        %3982 = vmatpush.msra.mxu0 %v3981
        %v3983 = vand.u32 %v2996, 4294901760
        %3984 = vmatpush.msra.mxu0 %v3983
        %v3985 = vand.u32 %v3165, 4294901760
        %v3986 = vsub.f32 %v3165, %v3985
        %v3987 = vand.u32 %v3986, 4294901760
        %3988 = vmatmul.f32.gmra.mxu0 %v3987
        %v3989 = vpop.f32.mrf.mxu0
        %v3990 = vadd.f32 %v3960, %v3989
        %3991 = vdwg.mxu0
        %3992 = vmatpush.msra.mxu0 0.0
        %3993 = vmatpush.msra.mxu0 0.0
        %3994 = vmatpush.msra.mxu0 0.0
        %3995 = vmatpush.msra.mxu0 0.0
        %3996 = vmatpush.msra.mxu0 0.0
        %3997 = vmatpush.msra.mxu0 0.0
        %3998 = vmatpush.msra.mxu0 0.0
        %3999 = vmatpush.msra.mxu0 0.0
        %4000 = vmatpush.msra.mxu0 0.0
        %v4001 = vand.u32 %v3164, 4294901760
        %v4002 = vsub.f32 %v3164, %v4001
        %v4003 = vand.u32 %v4002, 4294901760
        %4004 = vmatpush.msra.mxu0 %v4003
        %v4005 = vand.u32 %v3152, 4294901760
        %v4006 = vsub.f32 %v3152, %v4005
        %v4007 = vand.u32 %v4006, 4294901760
        %4008 = vmatpush.msra.mxu0 %v4007
        %v4009 = vand.u32 %v3140, 4294901760
        %v4010 = vsub.f32 %v3140, %v4009
        %v4011 = vand.u32 %v4010, 4294901760
        %4012 = vmatpush.msra.mxu0 %v4011
        %v4013 = vand.u32 %v3032, 4294901760
        %v4014 = vsub.f32 %v3032, %v4013
        %v4015 = vand.u32 %v4014, 4294901760
        %4016 = vmatpush.msra.mxu0 %v4015
        %v4017 = vand.u32 %v3020, 4294901760
        %v4018 = vsub.f32 %v3020, %v4017
        %v4019 = vand.u32 %v4018, 4294901760
        %4020 = vmatpush.msra.mxu0 %v4019
        %v4021 = vand.u32 %v3008, 4294901760
        %v4022 = vsub.f32 %v3008, %v4021
        %v4023 = vand.u32 %v4022, 4294901760
        %4024 = vmatpush.msra.mxu0 %v4023
        %v4025 = vand.u32 %v2996, 4294901760
        %v4026 = vsub.f32 %v2996, %v4025
        %v4027 = vand.u32 %v4026, 4294901760
        %4028 = vmatpush.msra.mxu0 %v4027
        %v4029 = vand.u32 %v3165, 4294901760
        %4030 = vmatmul.f32.gmra.mxu0 %v4029
        %v4031 = vpop.f32.mrf.mxu0
        %v4032 = vadd.f32 %v3990, %v4031
        %4033 = vdwg.mxu0
        %4034 = vmatpush.msra.mxu0 0.0
        %4035 = vmatpush.msra.mxu0 0.0
        %4036 = vmatpush.msra.mxu0 0.0
        %4037 = vmatpush.msra.mxu0 0.0
        %4038 = vmatpush.msra.mxu0 0.0
        %4039 = vmatpush.msra.mxu0 0.0
        %4040 = vmatpush.msra.mxu0 0.0
        %4041 = vmatpush.msra.mxu0 0.0
        %4042 = vmatpush.msra.mxu0 0.0
        %v4043 = vand.u32 %v3164, 4294901760
        %4044 = vmatpush.msra.mxu0 %v4043
        %v4045 = vand.u32 %v3152, 4294901760
        %4046 = vmatpush.msra.mxu0 %v4045
        %v4047 = vand.u32 %v3140, 4294901760
        %4048 = vmatpush.msra.mxu0 %v4047
        %v4049 = vand.u32 %v3032, 4294901760
        %4050 = vmatpush.msra.mxu0 %v4049
        %v4051 = vand.u32 %v3020, 4294901760
        %4052 = vmatpush.msra.mxu0 %v4051
        %v4053 = vand.u32 %v3008, 4294901760
        %4054 = vmatpush.msra.mxu0 %v4053
        %v4055 = vand.u32 %v2996, 4294901760
        %4056 = vmatpush.msra.mxu0 %v4055
        %v4057 = vand.u32 %v3165, 4294901760
        %4058 = vmatmul.f32.gmra.mxu0 %v4057
        %v4059 = vpop.f32.mrf.mxu0
        %v4060 = vadd.f32 %v4032, %v4059
        %4061 = vdwg.mxu0
        %v4062 = vld [vmem:[%s6] sm:$0x3]
        %4064 = vset.pattern.permute.xlu0 0
        %4065 = vperm.xlu0 %4064, %v4062
        %v4066 = vpop.permute.xlu0 %4065
        %v4068 = vunpack.c.l.s4 839922192
        %v4069 = vunpack.c.0.s8 %v4068
        %v4070 = vperm.slane %v4066, %v4069
        %v4071 = vrot.slane %v4070, 6
        %v4073 = vadd.f32 %v372, %v4071
        %v4074 = vadd.f32 %v373, %v4071
        %v4079 = vrot.slane %v3612, 4
        %v4080 = vrot.slane %v4060, 4
        %v4081 = vsel %vm1821, %v3388, %v4079
        %v4082 = vsel %vm1821, %v3836, %v4080
        %v4083 = vrot.slane %v4081, 6
        %v4084 = vrot.slane %v4082, 6
        %v4087 = vadd.f32 %v4073, %v4083
        %v4088 = vadd.f32 %v4074, %v4084
        %4089 = vst [vmem:[#allocation1] ss:$2 sm:$0xff] %v1826
        %s4090 = scalar_lea.vmem [#allocation1], 16
        %4091 = vst [vmem:[%s4090] ss:$2 sm:$0xff] %v1827
        %v4092 = vld.sshfl [vmem:[#allocation1] sm:$0xff pattern:$0x75316420]
        %v4093 = vld.sshfl [vmem:[#allocation1 + $0x8] sm:$0xff pattern:$0x75316420]
        %v4094 = vld.sshfl [vmem:[#allocation1 + $0x10] sm:$0xff pattern:$0x75316420]
        %v4095 = vld.sshfl [vmem:[#allocation1 + $0x18] sm:$0xff pattern:$0x75316420]
        %4102 = vst [vmem:[#allocation1] ss:$2 sm:$0xff] %v4087
        %s4103 = scalar_lea.vmem [#allocation1], 16
        %4104 = vst [vmem:[%s4103] ss:$2 sm:$0xff] %v4088
        %v4105 = vld.sshfl [vmem:[#allocation1] sm:$0xff pattern:$0x75316420]
        %v4106 = vld.sshfl [vmem:[#allocation1 + $0x8] sm:$0xff pattern:$0x75316420]
        %v4107 = vld.sshfl [vmem:[#allocation1 + $0x10] sm:$0xff pattern:$0x75316420]
        %v4108 = vld.sshfl [vmem:[#allocation1 + $0x18] sm:$0xff pattern:$0x75316420]
        %v4113 = vsel %vm2983, %v4092, %v4105
        %v4114 = vsel %vm2983, %v4093, %v4106
        %v4115 = vsel %vm2983, %v4094, %v4107
        %v4116 = vsel %vm2983, %v4095, %v4108
        %v4121 = vrot.slane %v4114, 4
        %v4122 = vrot.slane %v4116, 4
        %v4123 = vsel %vm1821, %v4113, %v4121
        %v4124 = vsel %vm1821, %v4115, %v4122
        %4127 = vst [vmem:[%s369] sm:$0xff] %v4123
        %4128 = vst [vmem:[%s369 + $0x8] sm:$0xff] %v4124
        %s4129 = sand.u32 %s193, 1
        %s4130 = scalar_lea.sflag [#allocation4], %s4129
        %s4131 = sand.u32 %s193, 1
        %s4132 = smul.addr %s4131, 16
        %s4133 = scalar_lea.vmem [#allocation10], %s4132
        // Predicated region
        $region65: #{tpu_custom_call.1} parent=47 // pred_check
          %p4134 = pneg %p203
        $region66: #{tpu_custom_call.1} parent=47 // pred_check_branch
          %4136 = sbr.rel (%p4134) target = $region68
        $region67: #{tpu_custom_call.1} parent=47 // pred_region
          %4138 = vsyncadd %s4130, 0
          %s4139 = smul.addr %s28, 4
          %s4140 = smul.addr %s4139, 4
          %s4141 = scalar_lea.hbm %s7, %s4140
          %s4143 = sshll.u32 %s4133, 4
          %s4144 = int_to_ptr.vmem [resolvable:$true] %s4143
          %s4145 = sshll.u32 %s4141, 4
          %s4146 = int_to_ptr.hbm [resolvable:$true] %s4145
          %4148 = dma.vmem_to_hbm [thread:$0]  %s4144, 256, %s4146, %s4130
        $region68: #{tpu_custom_call.1} parent=47 // pred_fallthru
          _
      $region48: #{tpu_custom_call.1} parent=5 // pred_fallthru
        _
      %p4149 = scmp.le.s32.totalorder 2, %s23
      // Predicated region
      $region69: #{tpu_custom_call.1} parent=5 // pred_check
        %p4150 = pneg %p4149
      $region70: #{tpu_custom_call.1} parent=5 // pred_check_branch
        %4152 = sbr.rel (%p4150) target = $region72
      $region71: #{tpu_custom_call.1} parent=5 // pred_region
        %s4153 = ssub.s32 %s23, 2
        // Predicated region
        $region73: #{tpu_custom_call.1} parent=71 // pred_check
          %p4154 = pneg %p209
        $region74: #{tpu_custom_call.1} parent=71 // pred_check_branch
          %4156 = sbr.rel (%p4154) target = $region76
        $region75: #{tpu_custom_call.1} parent=71 // pred_region
          %s4157 = sand.u32 %s194, 1
          %s4158 = scalar_lea.sflag [#allocation4], %s4157
          %s4159 = sand.u32 %s194, 1
          %s4160 = smul.addr %s4159, 16
          %s4161 = scalar_lea.vmem [#allocation10], %s4160
          %4163 = dma.done %s4158, 256
        $region76: #{tpu_custom_call.1} parent=71 // pred_fallthru
          _
      $region72: #{tpu_custom_call.1} parent=5 // pred_fallthru
        _
    $region6: #{tpu_custom_call.1} parent=1 // loop_footer
      %s27 = sadd.s32 1, %s23
    $region7: #{tpu_custom_call.1} parent=1 // loop_footer_branch
      %22 = sbr.rel target = $region3
    $region8: #{tpu_custom_call.1} parent=1 // loop_exit
      _
    %4164 = vsyncpa [#allocation3], 1
    %s4165 = scalar_lea.sflag [#allocation3], 1
    %4166 = vsyncpa %s4165, 1
    %4167 = vsyncpa [#allocation6], 1
    %s4168 = scalar_lea.sflag [#allocation6], 1
    %4169 = vsyncpa %s4168, 1
    %4170 = vsyncpa [#allocation9], 1
    %4171 = vsyncpa [#allocation4], 1
    %s4172 = scalar_lea.sflag [#allocation4], 1
    %4173 = vsyncpa %s4172, 1

</llo_original>
